<compile_context>
chip_gen: v5e
topology: v5e:2x2
jax: 0.10.0
libtpu: 0.0.40
codegen_flags: <defaults>
</compile_context>

<pallas_src>
import numpy as np
import jax
import jax.numpy as jnp
from jax import lax
from jax.experimental import pallas as pl
from jax.experimental.pallas import tpu as pltpu

SEQ_LEN = 7   # hard-coded in the PyTorch module (repeat(7,...) / reshape(7,...))
LANE = 128    # TPU vreg lane width


def _sigmoid_eup(x):
    # sigmoid(x) == 0.5*(tanh(0.5*x)+1): tanh runs on the EUP slot, no VALU divide in the loop.
    return 0.5 * (jnp.tanh(0.5 * x) + 1.0)


def actor_critic_kernel(
    x_ref, act_ref, h0_ref,
    w1f_ref, b1f_ref, w2f_ref, b2f_ref,
    wihf_ref, bihf_ref,
    awhh_ref, abhh_ref, vwhh_ref, vbhh_ref,
    awo_ref, abo_ref, vwo_ref, vbo_ref,
    out_ref,
):
    N = x_ref.shape[0]
    B = h0_ref.shape[0]
    HP = h0_ref.shape[1]          # lane-padded hidden width (128)
    A = awo_ref.shape[1]
    T = N // B                    # == SEQ_LEN (static)

    def dot(a, b):
        return jnp.dot(a, b, preferred_element_type=jnp.float32)

    x = x_ref[...]                                                # (N, SP)

    # ---- fused actor+critic heads: Linear-Tanh-Linear-Tanh, both heads in one matmul each ----
    h1 = jnp.tanh(dot(x, w1f_ref[...]) + b1f_ref[...])            # (N, 2HP) = [ah1 | vh1]
    h2 = jnp.tanh(dot(h1, w2f_ref[...]) + b2f_ref[...])           # (N, 2HP) = [ah2 | vh2]

    # ---- hoisted GRU input projections for BOTH GRUs (off the serial critical path) ----
    gi_all = dot(h2, wihf_ref[...]) + bihf_ref[...]               # (N, 6HP)
    gi_a = gi_all[:, 0:3 * HP]                                    # actor  (N, 3HP)
    gi_v = gi_all[:, 3 * HP:6 * HP]                               # critic (N, 3HP)

    def gru(gi_seq, h0, whh, bhh):
        """Serial GRU recurrence: only h @ whh + lane-aligned gate math per step."""
        h = h0
        hs = []
        for t in range(T):                                        # static unroll, T == 7
            gi = gi_seq[t * B:(t + 1) * B, :]                     # (B, 3HP) aligned row slice
            gh = dot(h, whh) + bhh                                # (B, 3HP)
            r = _sigmoid_eup(gi[:, 0:HP] + gh[:, 0:HP])
            z = _sigmoid_eup(gi[:, HP:2 * HP] + gh[:, HP:2 * HP])
            n = jnp.tanh(gi[:, 2 * HP:3 * HP] + r * gh[:, 2 * HP:3 * HP])
            h = n + z * (h - n)                                   # == (1-z)*n + z*h
            hs.append(h)                                          # stays in vregs
        return jnp.concatenate(hs, axis=0), h                     # (N, HP), (B, HP)

    a_seq, h_fin = gru(gi_a, h0_ref[...], awhh_ref[...], abhh_ref[...])

    # ---- action layer (Linear-Tanh-Softmax) + Categorical log_prob / entropy ----
    logits = jnp.tanh(dot(a_seq, awo_ref[...]) + abo_ref[...])    # (N, A)
    m = jnp.max(logits, axis=-1, keepdims=True)
    e = jnp.exp(logits - m)
    s = jnp.sum(e, axis=-1, keepdims=True)
    logp_all = (logits - m) - jnp.log(s)
    probs = e / s                     # exact division; softmax is off the critical path
    onehot = (lax.broadcasted_iota(jnp.int32, (N, A), 1) == act_ref[...]).astype(jnp.float32)
    logp = jnp.sum(onehot * logp_all, axis=-1, keepdims=True)     # (N, 1)
    ent = -jnp.sum(probs * logp_all, axis=-1, keepdims=True)      # (N, 1)

    # ---- critic GRU (seeded with the actor GRU's final hidden, as in evaluate()) ----
    v_seq, _ = gru(gi_v, h_fin, vwhh_ref[...], vbhh_ref[...])

    # ---- value layer: elementwise mul + lane reduce instead of a (HP,1) MXU matmul ----
    val = jnp.sum(v_seq * vwo_ref[...], axis=-1, keepdims=True) + vbo_ref[...]   # (N, 1)

    # ---- single lane-dense output slab: col0=logp, col1=entropy, col2=value ----
    col = lax.broadcasted_iota(jnp.int32, (N, LANE), 1)
    c0 = (col == 0).astype(jnp.float32)
    c1 = (col == 1).astype(jnp.float32)
    c2 = (col == 2).astype(jnp.float32)
    out_ref[...] = logp * c0 + ent * c1 + val * c2


# ----------------------------- wrapper-side weight preparation -----------------------------

def _pad2(a, rows, cols):
    r, c = a.shape
    return jnp.pad(a, ((0, rows - r), (0, cols - c)))


def _pad_gru(w, H, rows, HP):
    """Pad a PyTorch-layout (in, 3H) GRU weight/bias per gate so gates stay lane-aligned."""
    blocks = [_pad2(w[:, g * H:(g + 1) * H], rows, HP) for g in range(3)]
    return jnp.concatenate(blocks, axis=1)


def _block_diag(a, b):
    top = jnp.concatenate([a, jnp.zeros((a.shape[0], b.shape[1]), a.dtype)], axis=1)
    bot = jnp.concatenate([jnp.zeros((b.shape[0], a.shape[1]), b.dtype), b], axis=1)
    return jnp.concatenate([top, bot], axis=0)


PARAM_ORDER = ["aw1", "ab1", "aw2", "ab2",
               "awih", "awhh", "abih", "abhh",
               "awo", "abo",
               "vw1", "vb1", "vw2", "vb2",
               "vwih", "vwhh", "vbih", "vbhh",
               "vwo", "vbo"]


def make_params(key, state_dim, action_dim, n_latent_var):
    """Deterministic PyTorch-style uniform(-1/sqrt(fan_in), 1/sqrt(fan_in)) init."""
    H = n_latent_var
    keys = iter(jax.random.split(key, 32))

    def uni(shape, fan_in):
        k = 1.0 / np.sqrt(fan_in)
        return jax.random.uniform(next(keys), shape, jnp.float32, -k, k)

    p = {}
    p["aw1"], p["ab1"] = uni((state_dim, H), state_dim), uni((1, H), state_dim)
    p["aw2"], p["ab2"] = uni((H, H), H), uni((1, H), H)
    p["awih"], p["awhh"] = uni((H, 3 * H), H), uni((H, 3 * H), H)
    p["abih"], p["abhh"] = uni((1, 3 * H), H), uni((1, 3 * H), H)
    p["awo"], p["abo"] = uni((H, action_dim), H), uni((1, action_dim), H)
    p["vw1"], p["vb1"] = uni((state_dim, H), state_dim), uni((1, H), state_dim)
    p["vw2"], p["vb2"] = uni((H, H), H), uni((1, H), H)
    p["vwih"], p["vwhh"] = uni((H, 3 * H), H), uni((H, 3 * H), H)
    p["vbih"], p["vbhh"] = uni((1, 3 * H), H), uni((1, 3 * H), H)
    p["vwo"], p["vbo"] = uni((H, 1), H), uni((1, 1), H)
    return p


@jax.jit
def actor_critic_evaluate(state, action, hidden, params):
    """Pallas equivalent of ActorCritic.evaluate() with use_recurrent=True.

    Returns (action_logprobs, state_value, dist_entropy), each shape (7*B,), flattened in
    the same (t, b) row-major order as the PyTorch code.
    """
    N, S = state.shape
    assert N % SEQ_LEN == 0
    B = N // SEQ_LEN
    H = params["aw1"].shape[1]
    A = params["awo"].shape[1]
    assert hidden.shape == (1, B, H), "nn.GRU here has num_layers == 1"

    SP = -(-S // LANE) * LANE     # state dim padded to a lane multiple
    HP = -(-H // LANE) * LANE     # hidden dim padded to a lane multiple (exactness preserved)

    x_p = _pad2(state, N, SP)
    h0_p = _pad2(hidden.reshape(B, H), B, HP)
    act2d = action.reshape(N, 1).astype(jnp.int32)

    # Fused / lane-padded weights (zero padding keeps padded hidden columns exactly zero).
    w1f = jnp.concatenate([_pad2(params["aw1"], SP, HP), _pad2(params["vw1"], SP, HP)], axis=1)
    b1f = jnp.concatenate([_pad2(params["ab1"], 1, HP), _pad2(params["vb1"], 1, HP)], axis=1)
    w2f = _block_diag(_pad2(params["aw2"], HP, HP), _pad2(params["vw2"], HP, HP))
    b2f = jnp.concatenate([_pad2(params["ab2"], 1, HP), _pad2(params["vb2"], 1, HP)], axis=1)
    wihf = _block_diag(_pad_gru(params["awih"], H, HP, HP), _pad_gru(params["vwih"], H, HP, HP))
    bihf = jnp.concatenate([_pad_gru(params["abih"], H, 1, HP),
                            _pad_gru(params["vbih"], H, 1, HP)], axis=1)
    awhhp, abhhp = _pad_gru(params["awhh"], H, HP, HP), _pad_gru(params["abhh"], H, 1, HP)
    vwhhp, vbhhp = _pad_gru(params["vwhh"], H, HP, HP), _pad_gru(params["vbhh"], H, 1, HP)
    awop, abop = _pad2(params["awo"], HP, A), params["abo"]
    vwo_row = _pad2(params["vwo"].T, 1, HP)     # (1, HP) row vector for the VPU/XLU reduce
    vbo = params["vbo"]                         # (1, 1)

    kernel_args = (x_p, act2d, h0_p, w1f, b1f, w2f, b2f, wihf, bihf,
                   awhhp, abhhp, vwhhp, vbhhp, awop, abop, vwo_row, vbo)

    vmem = pltpu.MemorySpace.VMEM
    out = pl.pallas_call(
        actor_critic_kernel,
        out_shape=jax.ShapeDtypeStruct((N, LANE), jnp.float32),
        in_specs=[pl.BlockSpec(memory_space=vmem) for _ in kernel_args],
        out_specs=pl.BlockSpec(memory_space=vmem),
    )(*kernel_args)

    # col0=logp, col1=entropy, col2=value
    return out[:, 0], out[:, 2], out[:, 1]


# ----------------------------------- pure-JAX reference ------------------------------------

def reference_evaluate(state, action, hidden, params):
    """Pure-JAX reference mirroring the PyTorch evaluate() semantics."""
    N, _ = state.shape
    B = N // SEQ_LEN
    H = params["aw1"].shape[1]

    def gru(xs, h, wih, whh, bih, bhh):
        outs = []
        for t in range(SEQ_LEN):
            gi = xs[t] @ wih + bih
            gh = h @ whh + bhh
            r = jax.nn.sigmoid(gi[:, :H] + gh[:, :H])
            z = jax.nn.sigmoid(gi[:, H:2 * H] + gh[:, H:2 * H])
            n = jnp.tanh(gi[:, 2 * H:] + r * gh[:, 2 * H:])
            h = (1.0 - z) * n + z * h
            outs.append(h)
        return jnp.stack(outs), h

    ah = jnp.tanh(state @ params["aw1"] + params["ab1"])
    ah = jnp.tanh(ah @ params["aw2"] + params["ab2"])
    a_seq, h_fin = gru(ah.reshape(SEQ_LEN, B, H), hidden.reshape(B, H),
                       params["awih"], params["awhh"], params["abih"], params["abhh"])
    logits = jnp.tanh(a_seq @ params["awo"] + params["abo"])
    logp_all = jax.nn.log_softmax(logits, axis=-1)
    probs = jax.nn.softmax(logits, axis=-1)
    act = action.reshape(SEQ_LEN, B).astype(jnp.int32)
    logp = jnp.take_along_axis(logp_all, act[..., None], axis=-1)[..., 0]
    ent = -jnp.sum(probs * logp_all, axis=-1)

    vh = jnp.tanh(state @ params["vw1"] + params["vb1"])
    vh = jnp.tanh(vh @ params["vw2"] + params["vb2"])
    v_seq, _ = gru(vh.reshape(SEQ_LEN, B, H), h_fin,
                   params["vwih"], params["vwhh"], params["vbih"], params["vbhh"])
    val = (v_seq @ params["vwo"] + params["vbo"])[..., 0]
    return logp.reshape(-1), val.reshape(-1), ent.reshape(-1)


if __name__ == "__main__":
    B, STATE_DIM, N_LATENT, ACTION_DIM = 8, 32, 32, 16
    N = SEQ_LEN * B  # 56 rows = 7 time steps x batch 8

    key = jax.random.PRNGKey(0)
    kp, ks, ka, kh = jax.random.split(key, 4)
    params = make_params(kp, STATE_DIM, ACTION_DIM, N_LATENT)
    state = jax.random.normal(ks, (N, STATE_DIM), jnp.float32)
    action = jax.random.randint(ka, (N,), 0, ACTION_DIM, jnp.int32)
    hidden = 0.1 * jax.random.normal(kh, (1, B, N_LATENT), jnp.float32)  # (num_layers=1, B, H)

    logp, val, ent = jax.block_until_ready(
        actor_critic_evaluate(state, action, hidden, params))

    r_logp, r_val, r_ent = reference_evaluate(state, action, hidden, params)
    # Tolerance kept at 1e-2 to cover MXU default-precision variance between the Pallas kernel
    # and the XLA reference; no approximate reciprocals are used in the kernel itself.
    np.testing.assert_allclose(np.asarray(logp), np.asarray(r_logp), rtol=1e-2, atol=1e-2)
    np.testing.assert_allclose(np.asarray(val), np.asarray(r_val), rtol=1e-2, atol=1e-2)
    np.testing.assert_allclose(np.asarray(ent), np.asarray(r_ent), rtol=1e-2, atol=1e-2)

    print("KERNEL_OK")
</pallas_src>

<mosaic_0001>
module attributes {stable_mosaic.version = 11 : i64} {
  func.func @actor_critic_kernel(%arg0: memref<56x128xf32, #tpu.memory_space<vmem>>, %arg1: memref<56x1xi32, #tpu.memory_space<vmem>>, %arg2: memref<8x128xf32, #tpu.memory_space<vmem>>, %arg3: memref<128x256xf32, #tpu.memory_space<vmem>>, %arg4: memref<1x256xf32, #tpu.memory_space<vmem>>, %arg5: memref<256x256xf32, #tpu.memory_space<vmem>>, %arg6: memref<1x256xf32, #tpu.memory_space<vmem>>, %arg7: memref<256x768xf32, #tpu.memory_space<vmem>>, %arg8: memref<1x768xf32, #tpu.memory_space<vmem>>, %arg9: memref<128x384xf32, #tpu.memory_space<vmem>>, %arg10: memref<1x384xf32, #tpu.memory_space<vmem>>, %arg11: memref<128x384xf32, #tpu.memory_space<vmem>>, %arg12: memref<1x384xf32, #tpu.memory_space<vmem>>, %arg13: memref<128x16xf32, #tpu.memory_space<vmem>>, %arg14: memref<1x16xf32, #tpu.memory_space<vmem>>, %arg15: memref<1x128xf32, #tpu.memory_space<vmem>>, %arg16: memref<1x1xf32, #tpu.memory_space<vmem>>, %arg17: memref<56x128xf32, #tpu.memory_space<vmem>>) attributes {dimension_semantics = [], scalar_prefetch = 0 : i64, scratch_operands = 0 : i64, tpu.core_type = #tpu.core_type<tc>} {
    %c0 = arith.constant 0 : index
    %c0_0 = arith.constant 0 : index
    %0 = vector.load %arg0[%c0, %c0_0] : memref<56x128xf32, #tpu.memory_space<vmem>>, vector<56x128xf32>
    %c0_1 = arith.constant 0 : index
    %c0_2 = arith.constant 0 : index
    %1 = vector.load %arg3[%c0_1, %c0_2] : memref<128x256xf32, #tpu.memory_space<vmem>>, vector<128x256xf32>
    %cst = arith.constant dense<0.000000e+00> : vector<56x256xf32>
    %2 = tpu.matmul %0, %1, %cst {dimension_numbers = #tpu.dot_dimension_numbers<[1], [0], [0], [1], [0, 0, 1, 1], [], []>} : vector<56x128xf32>, vector<128x256xf32>, vector<56x256xf32> -> vector<56x256xf32>
    %c0_3 = arith.constant 0 : index
    %c0_4 = arith.constant 0 : index
    %3 = vector.load %arg4[%c0_3, %c0_4] : memref<1x256xf32, #tpu.memory_space<vmem>>, vector<1x256xf32>
    %4 = vector.broadcast %3 : vector<1x256xf32> to vector<56x256xf32>
    %5 = arith.addf %2, %4 : vector<56x256xf32>
    %6 = math.tanh %5 : vector<56x256xf32>
    %c0_5 = arith.constant 0 : index
    %c0_6 = arith.constant 0 : index
    %7 = vector.load %arg5[%c0_5, %c0_6] : memref<256x256xf32, #tpu.memory_space<vmem>>, vector<256x256xf32>
    %cst_7 = arith.constant dense<0.000000e+00> : vector<56x256xf32>
    %8 = tpu.matmul %6, %7, %cst_7 {dimension_numbers = #tpu.dot_dimension_numbers<[1], [0], [0], [1], [0, 0, 1, 1], [], []>} : vector<56x256xf32>, vector<256x256xf32>, vector<56x256xf32> -> vector<56x256xf32>
    %c0_8 = arith.constant 0 : index
    %c0_9 = arith.constant 0 : index
    %9 = vector.load %arg6[%c0_8, %c0_9] : memref<1x256xf32, #tpu.memory_space<vmem>>, vector<1x256xf32>
    %10 = vector.broadcast %9 : vector<1x256xf32> to vector<56x256xf32>
    %11 = arith.addf %8, %10 : vector<56x256xf32>
    %12 = math.tanh %11 : vector<56x256xf32>
    %c0_10 = arith.constant 0 : index
    %c0_11 = arith.constant 0 : index
    %13 = vector.load %arg7[%c0_10, %c0_11] : memref<256x768xf32, #tpu.memory_space<vmem>>, vector<256x768xf32>
    %cst_12 = arith.constant dense<0.000000e+00> : vector<56x768xf32>
    %14 = tpu.matmul %12, %13, %cst_12 {dimension_numbers = #tpu.dot_dimension_numbers<[1], [0], [0], [1], [0, 0, 1, 1], [], []>} : vector<56x256xf32>, vector<256x768xf32>, vector<56x768xf32> -> vector<56x768xf32>
    %c0_13 = arith.constant 0 : index
    %c0_14 = arith.constant 0 : index
    %15 = vector.load %arg8[%c0_13, %c0_14] : memref<1x768xf32, #tpu.memory_space<vmem>>, vector<1x768xf32>
    %16 = vector.broadcast %15 : vector<1x768xf32> to vector<56x768xf32>
    %17 = arith.addf %14, %16 : vector<56x768xf32>
    %18 = vector.extract_strided_slice %17 {offsets = [0, 0], sizes = [56, 384], strides = [1, 1]} : vector<56x768xf32> to vector<56x384xf32>
    %19 = vector.extract_strided_slice %17 {offsets = [0, 384], sizes = [56, 384], strides = [1, 1]} : vector<56x768xf32> to vector<56x384xf32>
    %c0_15 = arith.constant 0 : index
    %c0_16 = arith.constant 0 : index
    %20 = vector.load %arg2[%c0_15, %c0_16] : memref<8x128xf32, #tpu.memory_space<vmem>>, vector<8x128xf32>
    %c0_17 = arith.constant 0 : index
    %c0_18 = arith.constant 0 : index
    %21 = vector.load %arg9[%c0_17, %c0_18] : memref<128x384xf32, #tpu.memory_space<vmem>>, vector<128x384xf32>
    %c0_19 = arith.constant 0 : index
    %c0_20 = arith.constant 0 : index
    %22 = vector.load %arg10[%c0_19, %c0_20] : memref<1x384xf32, #tpu.memory_space<vmem>>, vector<1x384xf32>
    %23 = vector.extract_strided_slice %18 {offsets = [0, 0], sizes = [8, 384], strides = [1, 1]} : vector<56x384xf32> to vector<8x384xf32>
    %cst_21 = arith.constant dense<0.000000e+00> : vector<8x384xf32>
    %24 = tpu.matmul %20, %21, %cst_21 {dimension_numbers = #tpu.dot_dimension_numbers<[1], [0], [0], [1], [0, 0, 1, 1], [], []>} : vector<8x128xf32>, vector<128x384xf32>, vector<8x384xf32> -> vector<8x384xf32>
    %25 = vector.broadcast %22 : vector<1x384xf32> to vector<8x384xf32>
    %26 = arith.addf %24, %25 : vector<8x384xf32>
    %27 = vector.extract_strided_slice %23 {offsets = [0, 0], sizes = [8, 128], strides = [1, 1]} : vector<8x384xf32> to vector<8x128xf32>
    %28 = vector.extract_strided_slice %26 {offsets = [0, 0], sizes = [8, 128], strides = [1, 1]} : vector<8x384xf32> to vector<8x128xf32>
    %29 = arith.addf %27, %28 : vector<8x128xf32>
    %cst_22 = arith.constant 5.000000e-01 : f32
    %30 = vector.broadcast %cst_22 : f32 to vector<8x128xf32>
    %31 = arith.mulf %30, %29 : vector<8x128xf32>
    %32 = math.tanh %31 : vector<8x128xf32>
    %cst_23 = arith.constant 1.000000e+00 : f32
    %33 = vector.broadcast %cst_23 : f32 to vector<8x128xf32>
    %34 = arith.addf %32, %33 : vector<8x128xf32>
    %cst_24 = arith.constant 5.000000e-01 : f32
    %35 = vector.broadcast %cst_24 : f32 to vector<8x128xf32>
    %36 = arith.mulf %35, %34 : vector<8x128xf32>
    %37 = vector.extract_strided_slice %23 {offsets = [0, 128], sizes = [8, 128], strides = [1, 1]} : vector<8x384xf32> to vector<8x128xf32>
    %38 = vector.extract_strided_slice %26 {offsets = [0, 128], sizes = [8, 128], strides = [1, 1]} : vector<8x384xf32> to vector<8x128xf32>
    %39 = arith.addf %37, %38 : vector<8x128xf32>
    %cst_25 = arith.constant 5.000000e-01 : f32
    %40 = vector.broadcast %cst_25 : f32 to vector<8x128xf32>
    %41 = arith.mulf %40, %39 : vector<8x128xf32>
    %42 = math.tanh %41 : vector<8x128xf32>
    %cst_26 = arith.constant 1.000000e+00 : f32
    %43 = vector.broadcast %cst_26 : f32 to vector<8x128xf32>
    %44 = arith.addf %42, %43 : vector<8x128xf32>
    %cst_27 = arith.constant 5.000000e-01 : f32
    %45 = vector.broadcast %cst_27 : f32 to vector<8x128xf32>
    %46 = arith.mulf %45, %44 : vector<8x128xf32>
    %47 = vector.extract_strided_slice %23 {offsets = [0, 256], sizes = [8, 128], strides = [1, 1]} : vector<8x384xf32> to vector<8x128xf32>
    %48 = vector.extract_strided_slice %26 {offsets = [0, 256], sizes = [8, 128], strides = [1, 1]} : vector<8x384xf32> to vector<8x128xf32>
    %49 = arith.mulf %36, %48 : vector<8x128xf32>
    %50 = arith.addf %47, %49 : vector<8x128xf32>
    %51 = math.tanh %50 : vector<8x128xf32>
    %52 = arith.subf %20, %51 : vector<8x128xf32>
    %53 = arith.mulf %46, %52 : vector<8x128xf32>
    %54 = arith.addf %51, %53 : vector<8x128xf32>
    %55 = vector.extract_strided_slice %18 {offsets = [8, 0], sizes = [8, 384], strides = [1, 1]} : vector<56x384xf32> to vector<8x384xf32>
    %cst_28 = arith.constant dense<0.000000e+00> : vector<8x384xf32>
    %56 = tpu.matmul %54, %21, %cst_28 {dimension_numbers = #tpu.dot_dimension_numbers<[1], [0], [0], [1], [0, 0, 1, 1], [], []>} : vector<8x128xf32>, vector<128x384xf32>, vector<8x384xf32> -> vector<8x384xf32>
    %57 = vector.broadcast %22 : vector<1x384xf32> to vector<8x384xf32>
    %58 = arith.addf %56, %57 : vector<8x384xf32>
    %59 = vector.extract_strided_slice %55 {offsets = [0, 0], sizes = [8, 128], strides = [1, 1]} : vector<8x384xf32> to vector<8x128xf32>
    %60 = vector.extract_strided_slice %58 {offsets = [0, 0], sizes = [8, 128], strides = [1, 1]} : vector<8x384xf32> to vector<8x128xf32>
    %61 = arith.addf %59, %60 : vector<8x128xf32>
    %cst_29 = arith.constant 5.000000e-01 : f32
    %62 = vector.broadcast %cst_29 : f32 to vector<8x128xf32>
    %63 = arith.mulf %62, %61 : vector<8x128xf32>
    %64 = math.tanh %63 : vector<8x128xf32>
    %cst_30 = arith.constant 1.000000e+00 : f32
    %65 = vector.broadcast %cst_30 : f32 to vector<8x128xf32>
    %66 = arith.addf %64, %65 : vector<8x128xf32>
    %cst_31 = arith.constant 5.000000e-01 : f32
    %67 = vector.broadcast %cst_31 : f32 to vector<8x128xf32>
    %68 = arith.mulf %67, %66 : vector<8x128xf32>
    %69 = vector.extract_strided_slice %55 {offsets = [0, 128], sizes = [8, 128], strides = [1, 1]} : vector<8x384xf32> to vector<8x128xf32>
    %70 = vector.extract_strided_slice %58 {offsets = [0, 128], sizes = [8, 128], strides = [1, 1]} : vector<8x384xf32> to vector<8x128xf32>
    %71 = arith.addf %69, %70 : vector<8x128xf32>
    %cst_32 = arith.constant 5.000000e-01 : f32
    %72 = vector.broadcast %cst_32 : f32 to vector<8x128xf32>
    %73 = arith.mulf %72, %71 : vector<8x128xf32>
    %74 = math.tanh %73 : vector<8x128xf32>
    %cst_33 = arith.constant 1.000000e+00 : f32
    %75 = vector.broadcast %cst_33 : f32 to vector<8x128xf32>
    %76 = arith.addf %74, %75 : vector<8x128xf32>
    %cst_34 = arith.constant 5.000000e-01 : f32
    %77 = vector.broadcast %cst_34 : f32 to vector<8x128xf32>
    %78 = arith.mulf %77, %76 : vector<8x128xf32>
    %79 = vector.extract_strided_slice %55 {offsets = [0, 256], sizes = [8, 128], strides = [1, 1]} : vector<8x384xf32> to vector<8x128xf32>
    %80 = vector.extract_strided_slice %58 {offsets = [0, 256], sizes = [8, 128], strides = [1, 1]} : vector<8x384xf32> to vector<8x128xf32>
    %81 = arith.mulf %68, %80 : vector<8x128xf32>
    %82 = arith.addf %79, %81 : vector<8x128xf32>
    %83 = math.tanh %82 : vector<8x128xf32>
    %84 = arith.subf %54, %83 : vector<8x128xf32>
    %85 = arith.mulf %78, %84 : vector<8x128xf32>
    %86 = arith.addf %83, %85 : vector<8x128xf32>
    %87 = vector.extract_strided_slice %18 {offsets = [16, 0], sizes = [8, 384], strides = [1, 1]} : vector<56x384xf32> to vector<8x384xf32>
    %cst_35 = arith.constant dense<0.000000e+00> : vector<8x384xf32>
    %88 = tpu.matmul %86, %21, %cst_35 {dimension_numbers = #tpu.dot_dimension_numbers<[1], [0], [0], [1], [0, 0, 1, 1], [], []>} : vector<8x128xf32>, vector<128x384xf32>, vector<8x384xf32> -> vector<8x384xf32>
    %89 = vector.broadcast %22 : vector<1x384xf32> to vector<8x384xf32>
    %90 = arith.addf %88, %89 : vector<8x384xf32>
    %91 = vector.extract_strided_slice %87 {offsets = [0, 0], sizes = [8, 128], strides = [1, 1]} : vector<8x384xf32> to vector<8x128xf32>
    %92 = vector.extract_strided_slice %90 {offsets = [0, 0], sizes = [8, 128], strides = [1, 1]} : vector<8x384xf32> to vector<8x128xf32>
    %93 = arith.addf %91, %92 : vector<8x128xf32>
    %cst_36 = arith.constant 5.000000e-01 : f32
    %94 = vector.broadcast %cst_36 : f32 to vector<8x128xf32>
    %95 = arith.mulf %94, %93 : vector<8x128xf32>
    %96 = math.tanh %95 : vector<8x128xf32>
    %cst_37 = arith.constant 1.000000e+00 : f32
    %97 = vector.broadcast %cst_37 : f32 to vector<8x128xf32>
    %98 = arith.addf %96, %97 : vector<8x128xf32>
    %cst_38 = arith.constant 5.000000e-01 : f32
    %99 = vector.broadcast %cst_38 : f32 to vector<8x128xf32>
    %100 = arith.mulf %99, %98 : vector<8x128xf32>
    %101 = vector.extract_strided_slice %87 {offsets = [0, 128], sizes = [8, 128], strides = [1, 1]} : vector<8x384xf32> to vector<8x128xf32>
    %102 = vector.extract_strided_slice %90 {offsets = [0, 128], sizes = [8, 128], strides = [1, 1]} : vector<8x384xf32> to vector<8x128xf32>
    %103 = arith.addf %101, %102 : vector<8x128xf32>
    %cst_39 = arith.constant 5.000000e-01 : f32
    %104 = vector.broadcast %cst_39 : f32 to vector<8x128xf32>
    %105 = arith.mulf %104, %103 : vector<8x128xf32>
    %106 = math.tanh %105 : vector<8x128xf32>
    %cst_40 = arith.constant 1.000000e+00 : f32
    %107 = vector.broadcast %cst_40 : f32 to vector<8x128xf32>
    %108 = arith.addf %106, %107 : vector<8x128xf32>
    %cst_41 = arith.constant 5.000000e-01 : f32
    %109 = vector.broadcast %cst_41 : f32 to vector<8x128xf32>
    %110 = arith.mulf %109, %108 : vector<8x128xf32>
    %111 = vector.extract_strided_slice %87 {offsets = [0, 256], sizes = [8, 128], strides = [1, 1]} : vector<8x384xf32> to vector<8x128xf32>
    %112 = vector.extract_strided_slice %90 {offsets = [0, 256], sizes = [8, 128], strides = [1, 1]} : vector<8x384xf32> to vector<8x128xf32>
    %113 = arith.mulf %100, %112 : vector<8x128xf32>
    %114 = arith.addf %111, %113 : vector<8x128xf32>
    %115 = math.tanh %114 : vector<8x128xf32>
    %116 = arith.subf %86, %115 : vector<8x128xf32>
    %117 = arith.mulf %110, %116 : vector<8x128xf32>
    %118 = arith.addf %115, %117 : vector<8x128xf32>
    %119 = vector.extract_strided_slice %18 {offsets = [24, 0], sizes = [8, 384], strides = [1, 1]} : vector<56x384xf32> to vector<8x384xf32>
    %cst_42 = arith.constant dense<0.000000e+00> : vector<8x384xf32>
    %120 = tpu.matmul %118, %21, %cst_42 {dimension_numbers = #tpu.dot_dimension_numbers<[1], [0], [0], [1], [0, 0, 1, 1], [], []>} : vector<8x128xf32>, vector<128x384xf32>, vector<8x384xf32> -> vector<8x384xf32>
    %121 = vector.broadcast %22 : vector<1x384xf32> to vector<8x384xf32>
    %122 = arith.addf %120, %121 : vector<8x384xf32>
    %123 = vector.extract_strided_slice %119 {offsets = [0, 0], sizes = [8, 128], strides = [1, 1]} : vector<8x384xf32> to vector<8x128xf32>
    %124 = vector.extract_strided_slice %122 {offsets = [0, 0], sizes = [8, 128], strides = [1, 1]} : vector<8x384xf32> to vector<8x128xf32>
    %125 = arith.addf %123, %124 : vector<8x128xf32>
    %cst_43 = arith.constant 5.000000e-01 : f32
    %126 = vector.broadcast %cst_43 : f32 to vector<8x128xf32>
    %127 = arith.mulf %126, %125 : vector<8x128xf32>
    %128 = math.tanh %127 : vector<8x128xf32>
    %cst_44 = arith.constant 1.000000e+00 : f32
    %129 = vector.broadcast %cst_44 : f32 to vector<8x128xf32>
    %130 = arith.addf %128, %129 : vector<8x128xf32>
    %cst_45 = arith.constant 5.000000e-01 : f32
    %131 = vector.broadcast %cst_45 : f32 to vector<8x128xf32>
    %132 = arith.mulf %131, %130 : vector<8x128xf32>
    %133 = vector.extract_strided_slice %119 {offsets = [0, 128], sizes = [8, 128], strides = [1, 1]} : vector<8x384xf32> to vector<8x128xf32>
    %134 = vector.extract_strided_slice %122 {offsets = [0, 128], sizes = [8, 128], strides = [1, 1]} : vector<8x384xf32> to vector<8x128xf32>
    %135 = arith.addf %133, %134 : vector<8x128xf32>
    %cst_46 = arith.constant 5.000000e-01 : f32
    %136 = vector.broadcast %cst_46 : f32 to vector<8x128xf32>
    %137 = arith.mulf %136, %135 : vector<8x128xf32>
    %138 = math.tanh %137 : vector<8x128xf32>
    %cst_47 = arith.constant 1.000000e+00 : f32
    %139 = vector.broadcast %cst_47 : f32 to vector<8x128xf32>
    %140 = arith.addf %138, %139 : vector<8x128xf32>
    %cst_48 = arith.constant 5.000000e-01 : f32
    %141 = vector.broadcast %cst_48 : f32 to vector<8x128xf32>
    %142 = arith.mulf %141, %140 : vector<8x128xf32>
    %143 = vector.extract_strided_slice %119 {offsets = [0, 256], sizes = [8, 128], strides = [1, 1]} : vector<8x384xf32> to vector<8x128xf32>
    %144 = vector.extract_strided_slice %122 {offsets = [0, 256], sizes = [8, 128], strides = [1, 1]} : vector<8x384xf32> to vector<8x128xf32>
    %145 = arith.mulf %132, %144 : vector<8x128xf32>
    %146 = arith.addf %143, %145 : vector<8x128xf32>
    %147 = math.tanh %146 : vector<8x128xf32>
    %148 = arith.subf %118, %147 : vector<8x128xf32>
    %149 = arith.mulf %142, %148 : vector<8x128xf32>
    %150 = arith.addf %147, %149 : vector<8x128xf32>
    %151 = vector.extract_strided_slice %18 {offsets = [32, 0], sizes = [8, 384], strides = [1, 1]} : vector<56x384xf32> to vector<8x384xf32>
    %cst_49 = arith.constant dense<0.000000e+00> : vector<8x384xf32>
    %152 = tpu.matmul %150, %21, %cst_49 {dimension_numbers = #tpu.dot_dimension_numbers<[1], [0], [0], [1], [0, 0, 1, 1], [], []>} : vector<8x128xf32>, vector<128x384xf32>, vector<8x384xf32> -> vector<8x384xf32>
    %153 = vector.broadcast %22 : vector<1x384xf32> to vector<8x384xf32>
    %154 = arith.addf %152, %153 : vector<8x384xf32>
    %155 = vector.extract_strided_slice %151 {offsets = [0, 0], sizes = [8, 128], strides = [1, 1]} : vector<8x384xf32> to vector<8x128xf32>
    %156 = vector.extract_strided_slice %154 {offsets = [0, 0], sizes = [8, 128], strides = [1, 1]} : vector<8x384xf32> to vector<8x128xf32>
    %157 = arith.addf %155, %156 : vector<8x128xf32>
    %cst_50 = arith.constant 5.000000e-01 : f32
    %158 = vector.broadcast %cst_50 : f32 to vector<8x128xf32>
    %159 = arith.mulf %158, %157 : vector<8x128xf32>
    %160 = math.tanh %159 : vector<8x128xf32>
    %cst_51 = arith.constant 1.000000e+00 : f32
    %161 = vector.broadcast %cst_51 : f32 to vector<8x128xf32>
    %162 = arith.addf %160, %161 : vector<8x128xf32>
    %cst_52 = arith.constant 5.000000e-01 : f32
    %163 = vector.broadcast %cst_52 : f32 to vector<8x128xf32>
    %164 = arith.mulf %163, %162 : vector<8x128xf32>
    %165 = vector.extract_strided_slice %151 {offsets = [0, 128], sizes = [8, 128], strides = [1, 1]} : vector<8x384xf32> to vector<8x128xf32>
    %166 = vector.extract_strided_slice %154 {offsets = [0, 128], sizes = [8, 128], strides = [1, 1]} : vector<8x384xf32> to vector<8x128xf32>
    %167 = arith.addf %165, %166 : vector<8x128xf32>
    %cst_53 = arith.constant 5.000000e-01 : f32
    %168 = vector.broadcast %cst_53 : f32 to vector<8x128xf32>
    %169 = arith.mulf %168, %167 : vector<8x128xf32>
    %170 = math.tanh %169 : vector<8x128xf32>
    %cst_54 = arith.constant 1.000000e+00 : f32
    %171 = vector.broadcast %cst_54 : f32 to vector<8x128xf32>
    %172 = arith.addf %170, %171 : vector<8x128xf32>
    %cst_55 = arith.constant 5.000000e-01 : f32
    %173 = vector.broadcast %cst_55 : f32 to vector<8x128xf32>
    %174 = arith.mulf %173, %172 : vector<8x128xf32>
    %175 = vector.extract_strided_slice %151 {offsets = [0, 256], sizes = [8, 128], strides = [1, 1]} : vector<8x384xf32> to vector<8x128xf32>
    %176 = vector.extract_strided_slice %154 {offsets = [0, 256], sizes = [8, 128], strides = [1, 1]} : vector<8x384xf32> to vector<8x128xf32>
    %177 = arith.mulf %164, %176 : vector<8x128xf32>
    %178 = arith.addf %175, %177 : vector<8x128xf32>
    %179 = math.tanh %178 : vector<8x128xf32>
    %180 = arith.subf %150, %179 : vector<8x128xf32>
    %181 = arith.mulf %174, %180 : vector<8x128xf32>
    %182 = arith.addf %179, %181 : vector<8x128xf32>
    %183 = vector.extract_strided_slice %18 {offsets = [40, 0], sizes = [8, 384], strides = [1, 1]} : vector<56x384xf32> to vector<8x384xf32>
    %cst_56 = arith.constant dense<0.000000e+00> : vector<8x384xf32>
    %184 = tpu.matmul %182, %21, %cst_56 {dimension_numbers = #tpu.dot_dimension_numbers<[1], [0], [0], [1], [0, 0, 1, 1], [], []>} : vector<8x128xf32>, vector<128x384xf32>, vector<8x384xf32> -> vector<8x384xf32>
    %185 = vector.broadcast %22 : vector<1x384xf32> to vector<8x384xf32>
    %186 = arith.addf %184, %185 : vector<8x384xf32>
    %187 = vector.extract_strided_slice %183 {offsets = [0, 0], sizes = [8, 128], strides = [1, 1]} : vector<8x384xf32> to vector<8x128xf32>
    %188 = vector.extract_strided_slice %186 {offsets = [0, 0], sizes = [8, 128], strides = [1, 1]} : vector<8x384xf32> to vector<8x128xf32>
    %189 = arith.addf %187, %188 : vector<8x128xf32>
    %cst_57 = arith.constant 5.000000e-01 : f32
    %190 = vector.broadcast %cst_57 : f32 to vector<8x128xf32>
    %191 = arith.mulf %190, %189 : vector<8x128xf32>
    %192 = math.tanh %191 : vector<8x128xf32>
    %cst_58 = arith.constant 1.000000e+00 : f32
    %193 = vector.broadcast %cst_58 : f32 to vector<8x128xf32>
    %194 = arith.addf %192, %193 : vector<8x128xf32>
    %cst_59 = arith.constant 5.000000e-01 : f32
    %195 = vector.broadcast %cst_59 : f32 to vector<8x128xf32>
    %196 = arith.mulf %195, %194 : vector<8x128xf32>
    %197 = vector.extract_strided_slice %183 {offsets = [0, 128], sizes = [8, 128], strides = [1, 1]} : vector<8x384xf32> to vector<8x128xf32>
    %198 = vector.extract_strided_slice %186 {offsets = [0, 128], sizes = [8, 128], strides = [1, 1]} : vector<8x384xf32> to vector<8x128xf32>
    %199 = arith.addf %197, %198 : vector<8x128xf32>
    %cst_60 = arith.constant 5.000000e-01 : f32
    %200 = vector.broadcast %cst_60 : f32 to vector<8x128xf32>
    %201 = arith.mulf %200, %199 : vector<8x128xf32>
    %202 = math.tanh %201 : vector<8x128xf32>
    %cst_61 = arith.constant 1.000000e+00 : f32
    %203 = vector.broadcast %cst_61 : f32 to vector<8x128xf32>
    %204 = arith.addf %202, %203 : vector<8x128xf32>
    %cst_62 = arith.constant 5.000000e-01 : f32
    %205 = vector.broadcast %cst_62 : f32 to vector<8x128xf32>
    %206 = arith.mulf %205, %204 : vector<8x128xf32>
    %207 = vector.extract_strided_slice %183 {offsets = [0, 256], sizes = [8, 128], strides = [1, 1]} : vector<8x384xf32> to vector<8x128xf32>
    %208 = vector.extract_strided_slice %186 {offsets = [0, 256], sizes = [8, 128], strides = [1, 1]} : vector<8x384xf32> to vector<8x128xf32>
    %209 = arith.mulf %196, %208 : vector<8x128xf32>
    %210 = arith.addf %207, %209 : vector<8x128xf32>
    %211 = math.tanh %210 : vector<8x128xf32>
    %212 = arith.subf %182, %211 : vector<8x128xf32>
    %213 = arith.mulf %206, %212 : vector<8x128xf32>
    %214 = arith.addf %211, %213 : vector<8x128xf32>
    %215 = vector.extract_strided_slice %18 {offsets = [48, 0], sizes = [8, 384], strides = [1, 1]} : vector<56x384xf32> to vector<8x384xf32>
    %cst_63 = arith.constant dense<0.000000e+00> : vector<8x384xf32>
    %216 = tpu.matmul %214, %21, %cst_63 {dimension_numbers = #tpu.dot_dimension_numbers<[1], [0], [0], [1], [0, 0, 1, 1], [], []>} : vector<8x128xf32>, vector<128x384xf32>, vector<8x384xf32> -> vector<8x384xf32>
    %217 = vector.broadcast %22 : vector<1x384xf32> to vector<8x384xf32>
    %218 = arith.addf %216, %217 : vector<8x384xf32>
    %219 = vector.extract_strided_slice %215 {offsets = [0, 0], sizes = [8, 128], strides = [1, 1]} : vector<8x384xf32> to vector<8x128xf32>
    %220 = vector.extract_strided_slice %218 {offsets = [0, 0], sizes = [8, 128], strides = [1, 1]} : vector<8x384xf32> to vector<8x128xf32>
    %221 = arith.addf %219, %220 : vector<8x128xf32>
    %cst_64 = arith.constant 5.000000e-01 : f32
    %222 = vector.broadcast %cst_64 : f32 to vector<8x128xf32>
    %223 = arith.mulf %222, %221 : vector<8x128xf32>
    %224 = math.tanh %223 : vector<8x128xf32>
    %cst_65 = arith.constant 1.000000e+00 : f32
    %225 = vector.broadcast %cst_65 : f32 to vector<8x128xf32>
    %226 = arith.addf %224, %225 : vector<8x128xf32>
    %cst_66 = arith.constant 5.000000e-01 : f32
    %227 = vector.broadcast %cst_66 : f32 to vector<8x128xf32>
    %228 = arith.mulf %227, %226 : vector<8x128xf32>
    %229 = vector.extract_strided_slice %215 {offsets = [0, 128], sizes = [8, 128], strides = [1, 1]} : vector<8x384xf32> to vector<8x128xf32>
    %230 = vector.extract_strided_slice %218 {offsets = [0, 128], sizes = [8, 128], strides = [1, 1]} : vector<8x384xf32> to vector<8x128xf32>
    %231 = arith.addf %229, %230 : vector<8x128xf32>
    %cst_67 = arith.constant 5.000000e-01 : f32
    %232 = vector.broadcast %cst_67 : f32 to vector<8x128xf32>
    %233 = arith.mulf %232, %231 : vector<8x128xf32>
    %234 = math.tanh %233 : vector<8x128xf32>
    %cst_68 = arith.constant 1.000000e+00 : f32
    %235 = vector.broadcast %cst_68 : f32 to vector<8x128xf32>
    %236 = arith.addf %234, %235 : vector<8x128xf32>
    %cst_69 = arith.constant 5.000000e-01 : f32
    %237 = vector.broadcast %cst_69 : f32 to vector<8x128xf32>
    %238 = arith.mulf %237, %236 : vector<8x128xf32>
    %239 = vector.extract_strided_slice %215 {offsets = [0, 256], sizes = [8, 128], strides = [1, 1]} : vector<8x384xf32> to vector<8x128xf32>
    %240 = vector.extract_strided_slice %218 {offsets = [0, 256], sizes = [8, 128], strides = [1, 1]} : vector<8x384xf32> to vector<8x128xf32>
    %241 = arith.mulf %228, %240 : vector<8x128xf32>
    %242 = arith.addf %239, %241 : vector<8x128xf32>
    %243 = math.tanh %242 : vector<8x128xf32>
    %244 = arith.subf %214, %243 : vector<8x128xf32>
    %245 = arith.mulf %238, %244 : vector<8x128xf32>
    %246 = arith.addf %243, %245 : vector<8x128xf32>
    %247 = tpu.concatenate %54, %86, %118, %150, %182, %214, %246 in 0 : vector<8x128xf32>, vector<8x128xf32>, vector<8x128xf32>, vector<8x128xf32>, vector<8x128xf32>, vector<8x128xf32>, vector<8x128xf32> -> vector<56x128xf32>
    %c0_70 = arith.constant 0 : index
    %c0_71 = arith.constant 0 : index
    %248 = vector.load %arg13[%c0_70, %c0_71] : memref<128x16xf32, #tpu.memory_space<vmem>>, vector<128x16xf32>
    %cst_72 = arith.constant dense<0.000000e+00> : vector<56x16xf32>
    %249 = tpu.matmul %247, %248, %cst_72 {dimension_numbers = #tpu.dot_dimension_numbers<[1], [0], [0], [1], [0, 0, 1, 1], [], []>} : vector<56x128xf32>, vector<128x16xf32>, vector<56x16xf32> -> vector<56x16xf32>
    %c0_73 = arith.constant 0 : index
    %c0_74 = arith.constant 0 : index
    %250 = vector.load %arg14[%c0_73, %c0_74] : memref<1x16xf32, #tpu.memory_space<vmem>>, vector<1x16xf32>
    %251 = vector.broadcast %250 : vector<1x16xf32> to vector<56x16xf32>
    %252 = arith.addf %249, %251 : vector<56x16xf32>
    %253 = math.tanh %252 : vector<56x16xf32>
    %cst_75 = arith.constant dense<0xFF800000> : vector<56xf32>
    %254 = vector.multi_reduction <maximumf>, %253, %cst_75 [1] : vector<56x16xf32> to vector<56xf32>
    %255 = vector.shape_cast %254 : vector<56xf32> to vector<56x1xf32>
    %256 = vector.broadcast %255 : vector<56x1xf32> to vector<56x16xf32>
    %257 = arith.subf %253, %256 : vector<56x16xf32>
    %258 = math.exp %257 : vector<56x16xf32>
    %cst_76 = arith.constant dense<0.000000e+00> : vector<56xf32>
    %259 = vector.multi_reduction <add>, %258, %cst_76 [1] : vector<56x16xf32> to vector<56xf32>
    %260 = vector.shape_cast %259 : vector<56xf32> to vector<56x1xf32>
    %261 = vector.broadcast %255 : vector<56x1xf32> to vector<56x16xf32>
    %262 = arith.subf %253, %261 : vector<56x16xf32>
    %263 = math.log %260 : vector<56x1xf32>
    %264 = vector.broadcast %263 : vector<56x1xf32> to vector<56x16xf32>
    %265 = arith.subf %262, %264 : vector<56x16xf32>
    %266 = vector.broadcast %260 : vector<56x1xf32> to vector<56x16xf32>
    %267 = arith.divf %258, %266 : vector<56x16xf32>
    %268 = tpu.iota {dimensions = array<i32: 1>} : vector<56x16xi32>
    %c0_77 = arith.constant 0 : index
    %c0_78 = arith.constant 0 : index
    %269 = vector.load %arg1[%c0_77, %c0_78] : memref<56x1xi32, #tpu.memory_space<vmem>>, vector<56x1xi32>
    %270 = vector.broadcast %269 : vector<56x1xi32> to vector<56x16xi32>
    %271 = arith.cmpi eq, %268, %270 : vector<56x16xi32>
    %272 = arith.extui %271 : vector<56x16xi1> to vector<56x16xi32>
    %273 = arith.sitofp %272 : vector<56x16xi32> to vector<56x16xf32>
    %274 = arith.mulf %273, %265 : vector<56x16xf32>
    %cst_79 = arith.constant dense<0.000000e+00> : vector<56xf32>
    %275 = vector.multi_reduction <add>, %274, %cst_79 [1] : vector<56x16xf32> to vector<56xf32>
    %276 = vector.shape_cast %275 : vector<56xf32> to vector<56x1xf32>
    %277 = arith.mulf %267, %265 : vector<56x16xf32>
    %cst_80 = arith.constant dense<0.000000e+00> : vector<56xf32>
    %278 = vector.multi_reduction <add>, %277, %cst_80 [1] : vector<56x16xf32> to vector<56xf32>
    %279 = vector.shape_cast %278 : vector<56xf32> to vector<56x1xf32>
    %cst_81 = arith.constant 0.000000e+00 : f32
    %280 = vector.broadcast %cst_81 : f32 to vector<56x1xf32>
    %281 = arith.subf %280, %279 : vector<56x1xf32>
    %c0_82 = arith.constant 0 : index
    %c0_83 = arith.constant 0 : index
    %282 = vector.load %arg11[%c0_82, %c0_83] : memref<128x384xf32, #tpu.memory_space<vmem>>, vector<128x384xf32>
    %c0_84 = arith.constant 0 : index
    %c0_85 = arith.constant 0 : index
    %283 = vector.load %arg12[%c0_84, %c0_85] : memref<1x384xf32, #tpu.memory_space<vmem>>, vector<1x384xf32>
    %284 = vector.extract_strided_slice %19 {offsets = [0, 0], sizes = [8, 384], strides = [1, 1]} : vector<56x384xf32> to vector<8x384xf32>
    %cst_86 = arith.constant dense<0.000000e+00> : vector<8x384xf32>
    %285 = tpu.matmul %246, %282, %cst_86 {dimension_numbers = #tpu.dot_dimension_numbers<[1], [0], [0], [1], [0, 0, 1, 1], [], []>} : vector<8x128xf32>, vector<128x384xf32>, vector<8x384xf32> -> vector<8x384xf32>
    %286 = vector.broadcast %283 : vector<1x384xf32> to vector<8x384xf32>
    %287 = arith.addf %285, %286 : vector<8x384xf32>
    %288 = vector.extract_strided_slice %284 {offsets = [0, 0], sizes = [8, 128], strides = [1, 1]} : vector<8x384xf32> to vector<8x128xf32>
    %289 = vector.extract_strided_slice %287 {offsets = [0, 0], sizes = [8, 128], strides = [1, 1]} : vector<8x384xf32> to vector<8x128xf32>
    %290 = arith.addf %288, %289 : vector<8x128xf32>
    %cst_87 = arith.constant 5.000000e-01 : f32
    %291 = vector.broadcast %cst_87 : f32 to vector<8x128xf32>
    %292 = arith.mulf %291, %290 : vector<8x128xf32>
    %293 = math.tanh %292 : vector<8x128xf32>
    %cst_88 = arith.constant 1.000000e+00 : f32
    %294 = vector.broadcast %cst_88 : f32 to vector<8x128xf32>
    %295 = arith.addf %293, %294 : vector<8x128xf32>
    %cst_89 = arith.constant 5.000000e-01 : f32
    %296 = vector.broadcast %cst_89 : f32 to vector<8x128xf32>
    %297 = arith.mulf %296, %295 : vector<8x128xf32>
    %298 = vector.extract_strided_slice %284 {offsets = [0, 128], sizes = [8, 128], strides = [1, 1]} : vector<8x384xf32> to vector<8x128xf32>
    %299 = vector.extract_strided_slice %287 {offsets = [0, 128], sizes = [8, 128], strides = [1, 1]} : vector<8x384xf32> to vector<8x128xf32>
    %300 = arith.addf %298, %299 : vector<8x128xf32>
    %cst_90 = arith.constant 5.000000e-01 : f32
    %301 = vector.broadcast %cst_90 : f32 to vector<8x128xf32>
    %302 = arith.mulf %301, %300 : vector<8x128xf32>
    %303 = math.tanh %302 : vector<8x128xf32>
    %cst_91 = arith.constant 1.000000e+00 : f32
    %304 = vector.broadcast %cst_91 : f32 to vector<8x128xf32>
    %305 = arith.addf %303, %304 : vector<8x128xf32>
    %cst_92 = arith.constant 5.000000e-01 : f32
    %306 = vector.broadcast %cst_92 : f32 to vector<8x128xf32>
    %307 = arith.mulf %306, %305 : vector<8x128xf32>
    %308 = vector.extract_strided_slice %284 {offsets = [0, 256], sizes = [8, 128], strides = [1, 1]} : vector<8x384xf32> to vector<8x128xf32>
    %309 = vector.extract_strided_slice %287 {offsets = [0, 256], sizes = [8, 128], strides = [1, 1]} : vector<8x384xf32> to vector<8x128xf32>
    %310 = arith.mulf %297, %309 : vector<8x128xf32>
    %311 = arith.addf %308, %310 : vector<8x128xf32>
    %312 = math.tanh %311 : vector<8x128xf32>
    %313 = arith.subf %246, %312 : vector<8x128xf32>
    %314 = arith.mulf %307, %313 : vector<8x128xf32>
    %315 = arith.addf %312, %314 : vector<8x128xf32>
    %316 = vector.extract_strided_slice %19 {offsets = [8, 0], sizes = [8, 384], strides = [1, 1]} : vector<56x384xf32> to vector<8x384xf32>
    %cst_93 = arith.constant dense<0.000000e+00> : vector<8x384xf32>
    %317 = tpu.matmul %315, %282, %cst_93 {dimension_numbers = #tpu.dot_dimension_numbers<[1], [0], [0], [1], [0, 0, 1, 1], [], []>} : vector<8x128xf32>, vector<128x384xf32>, vector<8x384xf32> -> vector<8x384xf32>
    %318 = vector.broadcast %283 : vector<1x384xf32> to vector<8x384xf32>
    %319 = arith.addf %317, %318 : vector<8x384xf32>
    %320 = vector.extract_strided_slice %316 {offsets = [0, 0], sizes = [8, 128], strides = [1, 1]} : vector<8x384xf32> to vector<8x128xf32>
    %321 = vector.extract_strided_slice %319 {offsets = [0, 0], sizes = [8, 128], strides = [1, 1]} : vector<8x384xf32> to vector<8x128xf32>
    %322 = arith.addf %320, %321 : vector<8x128xf32>
    %cst_94 = arith.constant 5.000000e-01 : f32
    %323 = vector.broadcast %cst_94 : f32 to vector<8x128xf32>
    %324 = arith.mulf %323, %322 : vector<8x128xf32>
    %325 = math.tanh %324 : vector<8x128xf32>
    %cst_95 = arith.constant 1.000000e+00 : f32
    %326 = vector.broadcast %cst_95 : f32 to vector<8x128xf32>
    %327 = arith.addf %325, %326 : vector<8x128xf32>
    %cst_96 = arith.constant 5.000000e-01 : f32
    %328 = vector.broadcast %cst_96 : f32 to vector<8x128xf32>
    %329 = arith.mulf %328, %327 : vector<8x128xf32>
    %330 = vector.extract_strided_slice %316 {offsets = [0, 128], sizes = [8, 128], strides = [1, 1]} : vector<8x384xf32> to vector<8x128xf32>
    %331 = vector.extract_strided_slice %319 {offsets = [0, 128], sizes = [8, 128], strides = [1, 1]} : vector<8x384xf32> to vector<8x128xf32>
    %332 = arith.addf %330, %331 : vector<8x128xf32>
    %cst_97 = arith.constant 5.000000e-01 : f32
    %333 = vector.broadcast %cst_97 : f32 to vector<8x128xf32>
    %334 = arith.mulf %333, %332 : vector<8x128xf32>
    %335 = math.tanh %334 : vector<8x128xf32>
    %cst_98 = arith.constant 1.000000e+00 : f32
    %336 = vector.broadcast %cst_98 : f32 to vector<8x128xf32>
    %337 = arith.addf %335, %336 : vector<8x128xf32>
    %cst_99 = arith.constant 5.000000e-01 : f32
    %338 = vector.broadcast %cst_99 : f32 to vector<8x128xf32>
    %339 = arith.mulf %338, %337 : vector<8x128xf32>
    %340 = vector.extract_strided_slice %316 {offsets = [0, 256], sizes = [8, 128], strides = [1, 1]} : vector<8x384xf32> to vector<8x128xf32>
    %341 = vector.extract_strided_slice %319 {offsets = [0, 256], sizes = [8, 128], strides = [1, 1]} : vector<8x384xf32> to vector<8x128xf32>
    %342 = arith.mulf %329, %341 : vector<8x128xf32>
    %343 = arith.addf %340, %342 : vector<8x128xf32>
    %344 = math.tanh %343 : vector<8x128xf32>
    %345 = arith.subf %315, %344 : vector<8x128xf32>
    %346 = arith.mulf %339, %345 : vector<8x128xf32>
    %347 = arith.addf %344, %346 : vector<8x128xf32>
    %348 = vector.extract_strided_slice %19 {offsets = [16, 0], sizes = [8, 384], strides = [1, 1]} : vector<56x384xf32> to vector<8x384xf32>
    %cst_100 = arith.constant dense<0.000000e+00> : vector<8x384xf32>
    %349 = tpu.matmul %347, %282, %cst_100 {dimension_numbers = #tpu.dot_dimension_numbers<[1], [0], [0], [1], [0, 0, 1, 1], [], []>} : vector<8x128xf32>, vector<128x384xf32>, vector<8x384xf32> -> vector<8x384xf32>
    %350 = vector.broadcast %283 : vector<1x384xf32> to vector<8x384xf32>
    %351 = arith.addf %349, %350 : vector<8x384xf32>
    %352 = vector.extract_strided_slice %348 {offsets = [0, 0], sizes = [8, 128], strides = [1, 1]} : vector<8x384xf32> to vector<8x128xf32>
    %353 = vector.extract_strided_slice %351 {offsets = [0, 0], sizes = [8, 128], strides = [1, 1]} : vector<8x384xf32> to vector<8x128xf32>
    %354 = arith.addf %352, %353 : vector<8x128xf32>
    %cst_101 = arith.constant 5.000000e-01 : f32
    %355 = vector.broadcast %cst_101 : f32 to vector<8x128xf32>
    %356 = arith.mulf %355, %354 : vector<8x128xf32>
    %357 = math.tanh %356 : vector<8x128xf32>
    %cst_102 = arith.constant 1.000000e+00 : f32
    %358 = vector.broadcast %cst_102 : f32 to vector<8x128xf32>
    %359 = arith.addf %357, %358 : vector<8x128xf32>
    %cst_103 = arith.constant 5.000000e-01 : f32
    %360 = vector.broadcast %cst_103 : f32 to vector<8x128xf32>
    %361 = arith.mulf %360, %359 : vector<8x128xf32>
    %362 = vector.extract_strided_slice %348 {offsets = [0, 128], sizes = [8, 128], strides = [1, 1]} : vector<8x384xf32> to vector<8x128xf32>
    %363 = vector.extract_strided_slice %351 {offsets = [0, 128], sizes = [8, 128], strides = [1, 1]} : vector<8x384xf32> to vector<8x128xf32>
    %364 = arith.addf %362, %363 : vector<8x128xf32>
    %cst_104 = arith.constant 5.000000e-01 : f32
    %365 = vector.broadcast %cst_104 : f32 to vector<8x128xf32>
    %366 = arith.mulf %365, %364 : vector<8x128xf32>
    %367 = math.tanh %366 : vector<8x128xf32>
    %cst_105 = arith.constant 1.000000e+00 : f32
    %368 = vector.broadcast %cst_105 : f32 to vector<8x128xf32>
    %369 = arith.addf %367, %368 : vector<8x128xf32>
    %cst_106 = arith.constant 5.000000e-01 : f32
    %370 = vector.broadcast %cst_106 : f32 to vector<8x128xf32>
    %371 = arith.mulf %370, %369 : vector<8x128xf32>
    %372 = vector.extract_strided_slice %348 {offsets = [0, 256], sizes = [8, 128], strides = [1, 1]} : vector<8x384xf32> to vector<8x128xf32>
    %373 = vector.extract_strided_slice %351 {offsets = [0, 256], sizes = [8, 128], strides = [1, 1]} : vector<8x384xf32> to vector<8x128xf32>
    %374 = arith.mulf %361, %373 : vector<8x128xf32>
    %375 = arith.addf %372, %374 : vector<8x128xf32>
    %376 = math.tanh %375 : vector<8x128xf32>
    %377 = arith.subf %347, %376 : vector<8x128xf32>
    %378 = arith.mulf %371, %377 : vector<8x128xf32>
    %379 = arith.addf %376, %378 : vector<8x128xf32>
    %380 = vector.extract_strided_slice %19 {offsets = [24, 0], sizes = [8, 384], strides = [1, 1]} : vector<56x384xf32> to vector<8x384xf32>
    %cst_107 = arith.constant dense<0.000000e+00> : vector<8x384xf32>
    %381 = tpu.matmul %379, %282, %cst_107 {dimension_numbers = #tpu.dot_dimension_numbers<[1], [0], [0], [1], [0, 0, 1, 1], [], []>} : vector<8x128xf32>, vector<128x384xf32>, vector<8x384xf32> -> vector<8x384xf32>
    %382 = vector.broadcast %283 : vector<1x384xf32> to vector<8x384xf32>
    %383 = arith.addf %381, %382 : vector<8x384xf32>
    %384 = vector.extract_strided_slice %380 {offsets = [0, 0], sizes = [8, 128], strides = [1, 1]} : vector<8x384xf32> to vector<8x128xf32>
    %385 = vector.extract_strided_slice %383 {offsets = [0, 0], sizes = [8, 128], strides = [1, 1]} : vector<8x384xf32> to vector<8x128xf32>
    %386 = arith.addf %384, %385 : vector<8x128xf32>
    %cst_108 = arith.constant 5.000000e-01 : f32
    %387 = vector.broadcast %cst_108 : f32 to vector<8x128xf32>
    %388 = arith.mulf %387, %386 : vector<8x128xf32>
    %389 = math.tanh %388 : vector<8x128xf32>
    %cst_109 = arith.constant 1.000000e+00 : f32
    %390 = vector.broadcast %cst_109 : f32 to vector<8x128xf32>
    %391 = arith.addf %389, %390 : vector<8x128xf32>
    %cst_110 = arith.constant 5.000000e-01 : f32
    %392 = vector.broadcast %cst_110 : f32 to vector<8x128xf32>
    %393 = arith.mulf %392, %391 : vector<8x128xf32>
    %394 = vector.extract_strided_slice %380 {offsets = [0, 128], sizes = [8, 128], strides = [1, 1]} : vector<8x384xf32> to vector<8x128xf32>
    %395 = vector.extract_strided_slice %383 {offsets = [0, 128], sizes = [8, 128], strides = [1, 1]} : vector<8x384xf32> to vector<8x128xf32>
    %396 = arith.addf %394, %395 : vector<8x128xf32>
    %cst_111 = arith.constant 5.000000e-01 : f32
    %397 = vector.broadcast %cst_111 : f32 to vector<8x128xf32>
    %398 = arith.mulf %397, %396 : vector<8x128xf32>
    %399 = math.tanh %398 : vector<8x128xf32>
    %cst_112 = arith.constant 1.000000e+00 : f32
    %400 = vector.broadcast %cst_112 : f32 to vector<8x128xf32>
    %401 = arith.addf %399, %400 : vector<8x128xf32>
    %cst_113 = arith.constant 5.000000e-01 : f32
    %402 = vector.broadcast %cst_113 : f32 to vector<8x128xf32>
    %403 = arith.mulf %402, %401 : vector<8x128xf32>
    %404 = vector.extract_strided_slice %380 {offsets = [0, 256], sizes = [8, 128], strides = [1, 1]} : vector<8x384xf32> to vector<8x128xf32>
    %405 = vector.extract_strided_slice %383 {offsets = [0, 256], sizes = [8, 128], strides = [1, 1]} : vector<8x384xf32> to vector<8x128xf32>
    %406 = arith.mulf %393, %405 : vector<8x128xf32>
    %407 = arith.addf %404, %406 : vector<8x128xf32>
    %408 = math.tanh %407 : vector<8x128xf32>
    %409 = arith.subf %379, %408 : vector<8x128xf32>
    %410 = arith.mulf %403, %409 : vector<8x128xf32>
    %411 = arith.addf %408, %410 : vector<8x128xf32>
    %412 = vector.extract_strided_slice %19 {offsets = [32, 0], sizes = [8, 384], strides = [1, 1]} : vector<56x384xf32> to vector<8x384xf32>
    %cst_114 = arith.constant dense<0.000000e+00> : vector<8x384xf32>
    %413 = tpu.matmul %411, %282, %cst_114 {dimension_numbers = #tpu.dot_dimension_numbers<[1], [0], [0], [1], [0, 0, 1, 1], [], []>} : vector<8x128xf32>, vector<128x384xf32>, vector<8x384xf32> -> vector<8x384xf32>
    %414 = vector.broadcast %283 : vector<1x384xf32> to vector<8x384xf32>
    %415 = arith.addf %413, %414 : vector<8x384xf32>
    %416 = vector.extract_strided_slice %412 {offsets = [0, 0], sizes = [8, 128], strides = [1, 1]} : vector<8x384xf32> to vector<8x128xf32>
    %417 = vector.extract_strided_slice %415 {offsets = [0, 0], sizes = [8, 128], strides = [1, 1]} : vector<8x384xf32> to vector<8x128xf32>
    %418 = arith.addf %416, %417 : vector<8x128xf32>
    %cst_115 = arith.constant 5.000000e-01 : f32
    %419 = vector.broadcast %cst_115 : f32 to vector<8x128xf32>
    %420 = arith.mulf %419, %418 : vector<8x128xf32>
    %421 = math.tanh %420 : vector<8x128xf32>
    %cst_116 = arith.constant 1.000000e+00 : f32
    %422 = vector.broadcast %cst_116 : f32 to vector<8x128xf32>
    %423 = arith.addf %421, %422 : vector<8x128xf32>
    %cst_117 = arith.constant 5.000000e-01 : f32
    %424 = vector.broadcast %cst_117 : f32 to vector<8x128xf32>
    %425 = arith.mulf %424, %423 : vector<8x128xf32>
    %426 = vector.extract_strided_slice %412 {offsets = [0, 128], sizes = [8, 128], strides = [1, 1]} : vector<8x384xf32> to vector<8x128xf32>
    %427 = vector.extract_strided_slice %415 {offsets = [0, 128], sizes = [8, 128], strides = [1, 1]} : vector<8x384xf32> to vector<8x128xf32>
    %428 = arith.addf %426, %427 : vector<8x128xf32>
    %cst_118 = arith.constant 5.000000e-01 : f32
    %429 = vector.broadcast %cst_118 : f32 to vector<8x128xf32>
    %430 = arith.mulf %429, %428 : vector<8x128xf32>
    %431 = math.tanh %430 : vector<8x128xf32>
    %cst_119 = arith.constant 1.000000e+00 : f32
    %432 = vector.broadcast %cst_119 : f32 to vector<8x128xf32>
    %433 = arith.addf %431, %432 : vector<8x128xf32>
    %cst_120 = arith.constant 5.000000e-01 : f32
    %434 = vector.broadcast %cst_120 : f32 to vector<8x128xf32>
    %435 = arith.mulf %434, %433 : vector<8x128xf32>
    %436 = vector.extract_strided_slice %412 {offsets = [0, 256], sizes = [8, 128], strides = [1, 1]} : vector<8x384xf32> to vector<8x128xf32>
    %437 = vector.extract_strided_slice %415 {offsets = [0, 256], sizes = [8, 128], strides = [1, 1]} : vector<8x384xf32> to vector<8x128xf32>
    %438 = arith.mulf %425, %437 : vector<8x128xf32>
    %439 = arith.addf %436, %438 : vector<8x128xf32>
    %440 = math.tanh %439 : vector<8x128xf32>
    %441 = arith.subf %411, %440 : vector<8x128xf32>
    %442 = arith.mulf %435, %441 : vector<8x128xf32>
    %443 = arith.addf %440, %442 : vector<8x128xf32>
    %444 = vector.extract_strided_slice %19 {offsets = [40, 0], sizes = [8, 384], strides = [1, 1]} : vector<56x384xf32> to vector<8x384xf32>
    %cst_121 = arith.constant dense<0.000000e+00> : vector<8x384xf32>
    %445 = tpu.matmul %443, %282, %cst_121 {dimension_numbers = #tpu.dot_dimension_numbers<[1], [0], [0], [1], [0, 0, 1, 1], [], []>} : vector<8x128xf32>, vector<128x384xf32>, vector<8x384xf32> -> vector<8x384xf32>
    %446 = vector.broadcast %283 : vector<1x384xf32> to vector<8x384xf32>
    %447 = arith.addf %445, %446 : vector<8x384xf32>
    %448 = vector.extract_strided_slice %444 {offsets = [0, 0], sizes = [8, 128], strides = [1, 1]} : vector<8x384xf32> to vector<8x128xf32>
    %449 = vector.extract_strided_slice %447 {offsets = [0, 0], sizes = [8, 128], strides = [1, 1]} : vector<8x384xf32> to vector<8x128xf32>
    %450 = arith.addf %448, %449 : vector<8x128xf32>
    %cst_122 = arith.constant 5.000000e-01 : f32
    %451 = vector.broadcast %cst_122 : f32 to vector<8x128xf32>
    %452 = arith.mulf %451, %450 : vector<8x128xf32>
    %453 = math.tanh %452 : vector<8x128xf32>
    %cst_123 = arith.constant 1.000000e+00 : f32
    %454 = vector.broadcast %cst_123 : f32 to vector<8x128xf32>
    %455 = arith.addf %453, %454 : vector<8x128xf32>
    %cst_124 = arith.constant 5.000000e-01 : f32
    %456 = vector.broadcast %cst_124 : f32 to vector<8x128xf32>
    %457 = arith.mulf %456, %455 : vector<8x128xf32>
    %458 = vector.extract_strided_slice %444 {offsets = [0, 128], sizes = [8, 128], strides = [1, 1]} : vector<8x384xf32> to vector<8x128xf32>
    %459 = vector.extract_strided_slice %447 {offsets = [0, 128], sizes = [8, 128], strides = [1, 1]} : vector<8x384xf32> to vector<8x128xf32>
    %460 = arith.addf %458, %459 : vector<8x128xf32>
    %cst_125 = arith.constant 5.000000e-01 : f32
    %461 = vector.broadcast %cst_125 : f32 to vector<8x128xf32>
    %462 = arith.mulf %461, %460 : vector<8x128xf32>
    %463 = math.tanh %462 : vector<8x128xf32>
    %cst_126 = arith.constant 1.000000e+00 : f32
    %464 = vector.broadcast %cst_126 : f32 to vector<8x128xf32>
    %465 = arith.addf %463, %464 : vector<8x128xf32>
    %cst_127 = arith.constant 5.000000e-01 : f32
    %466 = vector.broadcast %cst_127 : f32 to vector<8x128xf32>
    %467 = arith.mulf %466, %465 : vector<8x128xf32>
    %468 = vector.extract_strided_slice %444 {offsets = [0, 256], sizes = [8, 128], strides = [1, 1]} : vector<8x384xf32> to vector<8x128xf32>
    %469 = vector.extract_strided_slice %447 {offsets = [0, 256], sizes = [8, 128], strides = [1, 1]} : vector<8x384xf32> to vector<8x128xf32>
    %470 = arith.mulf %457, %469 : vector<8x128xf32>
    %471 = arith.addf %468, %470 : vector<8x128xf32>
    %472 = math.tanh %471 : vector<8x128xf32>
    %473 = arith.subf %443, %472 : vector<8x128xf32>
    %474 = arith.mulf %467, %473 : vector<8x128xf32>
    %475 = arith.addf %472, %474 : vector<8x128xf32>
    %476 = vector.extract_strided_slice %19 {offsets = [48, 0], sizes = [8, 384], strides = [1, 1]} : vector<56x384xf32> to vector<8x384xf32>
    %cst_128 = arith.constant dense<0.000000e+00> : vector<8x384xf32>
    %477 = tpu.matmul %475, %282, %cst_128 {dimension_numbers = #tpu.dot_dimension_numbers<[1], [0], [0], [1], [0, 0, 1, 1], [], []>} : vector<8x128xf32>, vector<128x384xf32>, vector<8x384xf32> -> vector<8x384xf32>
    %478 = vector.broadcast %283 : vector<1x384xf32> to vector<8x384xf32>
    %479 = arith.addf %477, %478 : vector<8x384xf32>
    %480 = vector.extract_strided_slice %476 {offsets = [0, 0], sizes = [8, 128], strides = [1, 1]} : vector<8x384xf32> to vector<8x128xf32>
    %481 = vector.extract_strided_slice %479 {offsets = [0, 0], sizes = [8, 128], strides = [1, 1]} : vector<8x384xf32> to vector<8x128xf32>
    %482 = arith.addf %480, %481 : vector<8x128xf32>
    %cst_129 = arith.constant 5.000000e-01 : f32
    %483 = vector.broadcast %cst_129 : f32 to vector<8x128xf32>
    %484 = arith.mulf %483, %482 : vector<8x128xf32>
    %485 = math.tanh %484 : vector<8x128xf32>
    %cst_130 = arith.constant 1.000000e+00 : f32
    %486 = vector.broadcast %cst_130 : f32 to vector<8x128xf32>
    %487 = arith.addf %485, %486 : vector<8x128xf32>
    %cst_131 = arith.constant 5.000000e-01 : f32
    %488 = vector.broadcast %cst_131 : f32 to vector<8x128xf32>
    %489 = arith.mulf %488, %487 : vector<8x128xf32>
    %490 = vector.extract_strided_slice %476 {offsets = [0, 128], sizes = [8, 128], strides = [1, 1]} : vector<8x384xf32> to vector<8x128xf32>
    %491 = vector.extract_strided_slice %479 {offsets = [0, 128], sizes = [8, 128], strides = [1, 1]} : vector<8x384xf32> to vector<8x128xf32>
    %492 = arith.addf %490, %491 : vector<8x128xf32>
    %cst_132 = arith.constant 5.000000e-01 : f32
    %493 = vector.broadcast %cst_132 : f32 to vector<8x128xf32>
    %494 = arith.mulf %493, %492 : vector<8x128xf32>
    %495 = math.tanh %494 : vector<8x128xf32>
    %cst_133 = arith.constant 1.000000e+00 : f32
    %496 = vector.broadcast %cst_133 : f32 to vector<8x128xf32>
    %497 = arith.addf %495, %496 : vector<8x128xf32>
    %cst_134 = arith.constant 5.000000e-01 : f32
    %498 = vector.broadcast %cst_134 : f32 to vector<8x128xf32>
    %499 = arith.mulf %498, %497 : vector<8x128xf32>
    %500 = vector.extract_strided_slice %476 {offsets = [0, 256], sizes = [8, 128], strides = [1, 1]} : vector<8x384xf32> to vector<8x128xf32>
    %501 = vector.extract_strided_slice %479 {offsets = [0, 256], sizes = [8, 128], strides = [1, 1]} : vector<8x384xf32> to vector<8x128xf32>
    %502 = arith.mulf %489, %501 : vector<8x128xf32>
    %503 = arith.addf %500, %502 : vector<8x128xf32>
    %504 = math.tanh %503 : vector<8x128xf32>
    %505 = arith.subf %475, %504 : vector<8x128xf32>
    %506 = arith.mulf %499, %505 : vector<8x128xf32>
    %507 = arith.addf %504, %506 : vector<8x128xf32>
    %508 = tpu.concatenate %315, %347, %379, %411, %443, %475, %507 in 0 : vector<8x128xf32>, vector<8x128xf32>, vector<8x128xf32>, vector<8x128xf32>, vector<8x128xf32>, vector<8x128xf32>, vector<8x128xf32> -> vector<56x128xf32>
    %c0_135 = arith.constant 0 : index
    %c0_136 = arith.constant 0 : index
    %509 = vector.load %arg15[%c0_135, %c0_136] : memref<1x128xf32, #tpu.memory_space<vmem>>, vector<1x128xf32>
    %510 = vector.broadcast %509 : vector<1x128xf32> to vector<56x128xf32>
    %511 = arith.mulf %508, %510 : vector<56x128xf32>
    %cst_137 = arith.constant dense<0.000000e+00> : vector<56xf32>
    %512 = vector.multi_reduction <add>, %511, %cst_137 [1] : vector<56x128xf32> to vector<56xf32>
    %513 = vector.shape_cast %512 : vector<56xf32> to vector<56x1xf32>
    %c0_138 = arith.constant 0 : index
    %c0_139 = arith.constant 0 : index
    %514 = vector.load %arg16[%c0_138, %c0_139] : memref<1x1xf32, #tpu.memory_space<vmem>>, vector<1x1xf32>
    %515 = vector.broadcast %514 : vector<1x1xf32> to vector<56x1xf32>
    %516 = arith.addf %513, %515 : vector<56x1xf32>
    %517 = tpu.iota {dimensions = array<i32: 1>} : vector<56x128xi32>
    %c0_i32 = arith.constant 0 : i32
    %518 = vector.broadcast %c0_i32 : i32 to vector<56x128xi32>
    %519 = arith.cmpi eq, %517, %518 : vector<56x128xi32>
    %520 = arith.extui %519 : vector<56x128xi1> to vector<56x128xi32>
    %521 = arith.sitofp %520 : vector<56x128xi32> to vector<56x128xf32>
    %c1_i32 = arith.constant 1 : i32
    %522 = vector.broadcast %c1_i32 : i32 to vector<56x128xi32>
    %523 = arith.cmpi eq, %517, %522 : vector<56x128xi32>
    %524 = arith.extui %523 : vector<56x128xi1> to vector<56x128xi32>
    %525 = arith.sitofp %524 : vector<56x128xi32> to vector<56x128xf32>
    %c2_i32 = arith.constant 2 : i32
    %526 = vector.broadcast %c2_i32 : i32 to vector<56x128xi32>
    %527 = arith.cmpi eq, %517, %526 : vector<56x128xi32>
    %528 = arith.extui %527 : vector<56x128xi1> to vector<56x128xi32>
    %529 = arith.sitofp %528 : vector<56x128xi32> to vector<56x128xf32>
    %530 = vector.broadcast %276 : vector<56x1xf32> to vector<56x128xf32>
    %531 = arith.mulf %530, %521 : vector<56x128xf32>
    %532 = vector.broadcast %281 : vector<56x1xf32> to vector<56x128xf32>
    %533 = arith.mulf %532, %525 : vector<56x128xf32>
    %534 = arith.addf %531, %533 : vector<56x128xf32>
    %535 = vector.broadcast %516 : vector<56x1xf32> to vector<56x128xf32>
    %536 = arith.mulf %535, %529 : vector<56x128xf32>
    %537 = arith.addf %534, %536 : vector<56x128xf32>
    %c0_140 = arith.constant 0 : index
    %c0_141 = arith.constant 0 : index
    %538 = vector.load %arg17[%c0_140, %c0_141] : memref<56x128xf32, #tpu.memory_space<vmem>>, vector<56x128xf32>
    tpu.vector_store %arg17[%c0_140, %c0_141], %537 {strides = array<i32>} : memref<56x128xf32, #tpu.memory_space<vmem>>, vector<56x128xf32>,
    return
  }
}

</mosaic_0001>

<llo_original>
// kernel: actor_critic_evaluate.1
$region0: #{actor_critic_evaluate.1}
  #allocation0 [shape = 'u32[]', space=smem, size = 0x4, offset = 0x4, fixed_abs, tag = 'smem constant byte address 0x4 - core index']
  #allocation1 [shape = 'u32[72,128]{1,0:T(1,128)}', space=vmem, size = 0x9000, scoped, tag = 'internal scratch']
  #allocation2 [shape = 'f32[1,1]{1,0:T(1,128)S(1)}', space=vmem, size = 0x200, scoped, tag = 'scoped memory for actor_critic_evaluate.1']
  %s0 = inlined_call_operand.vmem [shape: f32[56,128], index: 0, kind: input, shape index: {}]
  %s1 = inlined_call_operand.vmem [shape: s32[56,1], index: 1, kind: input, shape index: {}]
  %s2 = inlined_call_operand.vmem [shape: f32[8,128], index: 2, kind: input, shape index: {}]
  %s3 = inlined_call_operand.vmem [shape: f32[128,256], index: 3, kind: input, shape index: {}]
  %s4 = inlined_call_operand.vmem [shape: f32[1,256], index: 4, kind: input, shape index: {}]
  %s5 = inlined_call_operand.vmem [shape: f32[256,256], index: 5, kind: input, shape index: {}]
  %s6 = inlined_call_operand.vmem [shape: f32[1,256], index: 6, kind: input, shape index: {}]
  %s7 = inlined_call_operand.vmem [shape: f32[256,768], index: 7, kind: input, shape index: {}]
  %s8 = inlined_call_operand.vmem [shape: f32[1,768], index: 8, kind: input, shape index: {}]
  %s9 = inlined_call_operand.vmem [shape: f32[128,384], index: 9, kind: input, shape index: {}]
  %s10 = inlined_call_operand.vmem [shape: f32[1,384], index: 10, kind: input, shape index: {}]
  %s11 = inlined_call_operand.vmem [shape: f32[128,384], index: 11, kind: input, shape index: {}]
  %s12 = inlined_call_operand.vmem [shape: f32[1,384], index: 12, kind: input, shape index: {}]
  %s13 = inlined_call_operand.vmem [shape: f32[128,16], index: 13, kind: input, shape index: {}]
  %s14 = inlined_call_operand.vmem [shape: f32[1,16], index: 14, kind: input, shape index: {}]
  %s15 = inlined_call_operand.vmem [shape: f32[1,128], index: 15, kind: input, shape index: {}]
  %s16 = inlined_call_operand.<no memory space> [shape: f32[1,1], index: 16, kind: input, shape index: {}]
  %s17 = inlined_call_operand.vmem [shape: f32[56,128], index: 17, kind: output, shape index: {}]
  %s18 = sld [smem:[#allocation0]]
  $region78: #{actor_critic_evaluate.1} parent=0
    _
  %s20 = ssub.s32 1, %s18
  %s21 = scalar_select 0, %s20, %s18
  %v22 = vstv %s16
  %23 = vst [vmem:[#allocation2] sm:$0x1] %v22
  // Predicated region
  $region2: #{actor_critic_evaluate.1} parent=0 // pred_check
    _
  $region3: #{actor_critic_evaluate.1} parent=0 // pred_check_branch
    %25 = sbr.rel (0) target = $region5
  $region4: #{actor_critic_evaluate.1} parent=0 // pred_region
    _
  $region5: #{actor_critic_evaluate.1} parent=0 // pred_fallthru
    _
  // Predicated region
  $region6: #{actor_critic_evaluate.1} parent=0 // pred_check
    _
  $region7: #{actor_critic_evaluate.1} parent=0 // pred_check_branch
    %27 = sbr.rel (0) target = $region9
  $region8: #{actor_critic_evaluate.1} parent=0 // pred_region
    _
  $region9: #{actor_critic_evaluate.1} parent=0 // pred_fallthru
    _
  // Predicated region
  $region10: #{actor_critic_evaluate.1} parent=0 // pred_check
    _
  $region11: #{actor_critic_evaluate.1} parent=0 // pred_check_branch
    %29 = sbr.rel (0) target = $region13
  $region12: #{actor_critic_evaluate.1} parent=0 // pred_region
    _
  $region13: #{actor_critic_evaluate.1} parent=0 // pred_fallthru
    _
  // Predicated region
  $region14: #{actor_critic_evaluate.1} parent=0 // pred_check
    _
  $region15: #{actor_critic_evaluate.1} parent=0 // pred_check_branch
    %31 = sbr.rel (0) target = $region17
  $region16: #{actor_critic_evaluate.1} parent=0 // pred_region
    _
  $region17: #{actor_critic_evaluate.1} parent=0 // pred_fallthru
    _
  // Predicated region
  $region18: #{actor_critic_evaluate.1} parent=0 // pred_check
    _
  $region19: #{actor_critic_evaluate.1} parent=0 // pred_check_branch
    %33 = sbr.rel (0) target = $region21
  $region20: #{actor_critic_evaluate.1} parent=0 // pred_region
    _
  $region21: #{actor_critic_evaluate.1} parent=0 // pred_fallthru
    _
  // Predicated region
  $region22: #{actor_critic_evaluate.1} parent=0 // pred_check
    _
  $region23: #{actor_critic_evaluate.1} parent=0 // pred_check_branch
    %35 = sbr.rel (0) target = $region25
  $region24: #{actor_critic_evaluate.1} parent=0 // pred_region
    _
  $region25: #{actor_critic_evaluate.1} parent=0 // pred_fallthru
    _
  // Predicated region
  $region26: #{actor_critic_evaluate.1} parent=0 // pred_check
    _
  $region27: #{actor_critic_evaluate.1} parent=0 // pred_check_branch
    %37 = sbr.rel (0) target = $region29
  $region28: #{actor_critic_evaluate.1} parent=0 // pred_region
    _
  $region29: #{actor_critic_evaluate.1} parent=0 // pred_fallthru
    _
  // Predicated region
  $region30: #{actor_critic_evaluate.1} parent=0 // pred_check
    _
  $region31: #{actor_critic_evaluate.1} parent=0 // pred_check_branch
    %39 = sbr.rel (0) target = $region33
  $region32: #{actor_critic_evaluate.1} parent=0 // pred_region
    _
  $region33: #{actor_critic_evaluate.1} parent=0 // pred_fallthru
    _
  // Predicated region
  $region34: #{actor_critic_evaluate.1} parent=0 // pred_check
    _
  $region35: #{actor_critic_evaluate.1} parent=0 // pred_check_branch
    %41 = sbr.rel (0) target = $region37
  $region36: #{actor_critic_evaluate.1} parent=0 // pred_region
    _
  $region37: #{actor_critic_evaluate.1} parent=0 // pred_fallthru
    _
  // Predicated region
  $region38: #{actor_critic_evaluate.1} parent=0 // pred_check
    _
  $region39: #{actor_critic_evaluate.1} parent=0 // pred_check_branch
    %43 = sbr.rel (0) target = $region41
  $region40: #{actor_critic_evaluate.1} parent=0 // pred_region
    _
  $region41: #{actor_critic_evaluate.1} parent=0 // pred_fallthru
    _
  // Predicated region
  $region42: #{actor_critic_evaluate.1} parent=0 // pred_check
    _
  $region43: #{actor_critic_evaluate.1} parent=0 // pred_check_branch
    %45 = sbr.rel (0) target = $region45
  $region44: #{actor_critic_evaluate.1} parent=0 // pred_region
    _
  $region45: #{actor_critic_evaluate.1} parent=0 // pred_fallthru
    _
  // Predicated region
  $region46: #{actor_critic_evaluate.1} parent=0 // pred_check
    _
  $region47: #{actor_critic_evaluate.1} parent=0 // pred_check_branch
    %47 = sbr.rel (0) target = $region49
  $region48: #{actor_critic_evaluate.1} parent=0 // pred_region
    _
  $region49: #{actor_critic_evaluate.1} parent=0 // pred_fallthru
    _
  // Predicated region
  $region50: #{actor_critic_evaluate.1} parent=0 // pred_check
    _
  $region51: #{actor_critic_evaluate.1} parent=0 // pred_check_branch
    %49 = sbr.rel (0) target = $region53
  $region52: #{actor_critic_evaluate.1} parent=0 // pred_region
    _
  $region53: #{actor_critic_evaluate.1} parent=0 // pred_fallthru
    _
  // Predicated region
  $region54: #{actor_critic_evaluate.1} parent=0 // pred_check
    _
  $region55: #{actor_critic_evaluate.1} parent=0 // pred_check_branch
    %51 = sbr.rel (0) target = $region57
  $region56: #{actor_critic_evaluate.1} parent=0 // pred_region
    _
  $region57: #{actor_critic_evaluate.1} parent=0 // pred_fallthru
    _
  // Predicated region
  $region58: #{actor_critic_evaluate.1} parent=0 // pred_check
    _
  $region59: #{actor_critic_evaluate.1} parent=0 // pred_check_branch
    %53 = sbr.rel (0) target = $region61
  $region60: #{actor_critic_evaluate.1} parent=0 // pred_region
    _
  $region61: #{actor_critic_evaluate.1} parent=0 // pred_fallthru
    _
  // Predicated region
  $region62: #{actor_critic_evaluate.1} parent=0 // pred_check
    _
  $region63: #{actor_critic_evaluate.1} parent=0 // pred_check_branch
    %55 = sbr.rel (0) target = $region65
  $region64: #{actor_critic_evaluate.1} parent=0 // pred_region
    _
  $region65: #{actor_critic_evaluate.1} parent=0 // pred_fallthru
    _
  // Predicated region
  $region66: #{actor_critic_evaluate.1} parent=0 // pred_check
    _
  $region67: #{actor_critic_evaluate.1} parent=0 // pred_check_branch
    %57 = sbr.rel (0) target = $region69
  $region68: #{actor_critic_evaluate.1} parent=0 // pred_region
    _
  $region69: #{actor_critic_evaluate.1} parent=0 // pred_fallthru
    _
  %v58 = vld [vmem:[%s0] sm:$0xff]
  %v59 = vld [vmem:[%s0 + $0x8] sm:$0xff]
  %v60 = vld [vmem:[%s0 + $0x10] sm:$0xff]
  %v61 = vld [vmem:[%s0 + $0x18] sm:$0xff]
  %v62 = vld [vmem:[%s0 + $0x20] sm:$0xff]
  %v63 = vld [vmem:[%s0 + $0x28] sm:$0xff]
  %v64 = vld [vmem:[%s0 + $0x30] sm:$0xff]
  %v65 = vld [vmem:[%s3] sm:$0xff]
  %v66 = vld [vmem:[%s3 + $0x8] sm:$0xff]
  %v67 = vld [vmem:[%s3 + $0x10] sm:$0xff]
  %v68 = vld [vmem:[%s3 + $0x18] sm:$0xff]
  %v69 = vld [vmem:[%s3 + $0x20] sm:$0xff]
  %v70 = vld [vmem:[%s3 + $0x28] sm:$0xff]
  %v71 = vld [vmem:[%s3 + $0x30] sm:$0xff]
  %v72 = vld [vmem:[%s3 + $0x38] sm:$0xff]
  %v73 = vld [vmem:[%s3 + $0x40] sm:$0xff]
  %v74 = vld [vmem:[%s3 + $0x48] sm:$0xff]
  %v75 = vld [vmem:[%s3 + $0x50] sm:$0xff]
  %v76 = vld [vmem:[%s3 + $0x58] sm:$0xff]
  %v77 = vld [vmem:[%s3 + $0x60] sm:$0xff]
  %v78 = vld [vmem:[%s3 + $0x68] sm:$0xff]
  %v79 = vld [vmem:[%s3 + $0x70] sm:$0xff]
  %v80 = vld [vmem:[%s3 + $0x78] sm:$0xff]
  %v81 = vld [vmem:[%s3 + $0x80] sm:$0xff]
  %v82 = vld [vmem:[%s3 + $0x88] sm:$0xff]
  %v83 = vld [vmem:[%s3 + $0x90] sm:$0xff]
  %v84 = vld [vmem:[%s3 + $0x98] sm:$0xff]
  %v85 = vld [vmem:[%s3 + $0xa0] sm:$0xff]
  %v86 = vld [vmem:[%s3 + $0xa8] sm:$0xff]
  %v87 = vld [vmem:[%s3 + $0xb0] sm:$0xff]
  %v88 = vld [vmem:[%s3 + $0xb8] sm:$0xff]
  %v89 = vld [vmem:[%s3 + $0xc0] sm:$0xff]
  %v90 = vld [vmem:[%s3 + $0xc8] sm:$0xff]
  %v91 = vld [vmem:[%s3 + $0xd0] sm:$0xff]
  %v92 = vld [vmem:[%s3 + $0xd8] sm:$0xff]
  %v93 = vld [vmem:[%s3 + $0xe0] sm:$0xff]
  %v94 = vld [vmem:[%s3 + $0xe8] sm:$0xff]
  %v95 = vld [vmem:[%s3 + $0xf0] sm:$0xff]
  %v96 = vld [vmem:[%s3 + $0xf8] sm:$0xff]
  %v97 = vld [vmem:[%s4] sm:$0x3]
  %v99 = vperm.slane %v97, 0
  %v100 = vperm.slane %v97, 1
  %103 = vmatpush.msra.mxu0 %v95
  %104 = vmatpush.msra.mxu0 %v93
  %105 = vmatpush.msra.mxu0 %v91
  %106 = vmatpush.msra.mxu0 %v89
  %107 = vmatpush.msra.mxu0 %v87
  %108 = vmatpush.msra.mxu0 %v85
  %109 = vmatpush.msra.mxu0 %v83
  %110 = vmatpush.msra.mxu0 %v81
  %111 = vmatpush.msra.mxu0 %v79
  %112 = vmatpush.msra.mxu0 %v77
  %113 = vmatpush.msra.mxu0 %v75
  %114 = vmatpush.msra.mxu0 %v73
  %115 = vmatpush.msra.mxu0 %v71
  %116 = vmatpush.msra.mxu0 %v69
  %117 = vmatpush.msra.mxu0 %v67
  %118 = vmatpush.msra.mxu0 %v65
  %119 = vmatmul.f32.gmra.mxu0 %v58
  %v120 = vpop.f32.mrf.mxu0
  %v121 = vadd.f32 %v99, %v120
  %122 = vmatmul.f32.gmra.mxu0 %v59
  %v123 = vpop.f32.mrf.mxu0
  %v124 = vadd.f32 %v99, %v123
  %125 = vmatmul.f32.gmra.mxu0 %v60
  %v126 = vpop.f32.mrf.mxu0
  %v127 = vadd.f32 %v99, %v126
  %128 = vmatmul.f32.gmra.mxu0 %v61
  %v129 = vpop.f32.mrf.mxu0
  %v130 = vadd.f32 %v99, %v129
  %131 = vmatmul.f32.gmra.mxu0 %v62
  %v132 = vpop.f32.mrf.mxu0
  %v133 = vadd.f32 %v99, %v132
  %134 = vmatmul.f32.gmra.mxu0 %v63
  %v135 = vpop.f32.mrf.mxu0
  %v136 = vadd.f32 %v99, %v135
  %137 = vmatmul.f32.gmra.mxu0 %v64
  %v138 = vpop.f32.mrf.mxu0
  %v139 = vadd.f32 %v99, %v138
  %140 = vdwg.mxu0
  %141 = vmatpush.msra.mxu0 %v96
  %142 = vmatpush.msra.mxu0 %v94
  %143 = vmatpush.msra.mxu0 %v92
  %144 = vmatpush.msra.mxu0 %v90
  %145 = vmatpush.msra.mxu0 %v88
  %146 = vmatpush.msra.mxu0 %v86
  %147 = vmatpush.msra.mxu0 %v84
  %148 = vmatpush.msra.mxu0 %v82
  %149 = vmatpush.msra.mxu0 %v80
  %150 = vmatpush.msra.mxu0 %v78
  %151 = vmatpush.msra.mxu0 %v76
  %152 = vmatpush.msra.mxu0 %v74
  %153 = vmatpush.msra.mxu0 %v72
  %154 = vmatpush.msra.mxu0 %v70
  %155 = vmatpush.msra.mxu0 %v68
  %156 = vmatpush.msra.mxu0 %v66
  %157 = vmatmul.f32.gmra.mxu0 %v58
  %v158 = vpop.f32.mrf.mxu0
  %v159 = vadd.f32 %v100, %v158
  %160 = vmatmul.f32.gmra.mxu0 %v59
  %v161 = vpop.f32.mrf.mxu0
  %v162 = vadd.f32 %v100, %v161
  %163 = vmatmul.f32.gmra.mxu0 %v60
  %v164 = vpop.f32.mrf.mxu0
  %v165 = vadd.f32 %v100, %v164
  %166 = vmatmul.f32.gmra.mxu0 %v61
  %v167 = vpop.f32.mrf.mxu0
  %v168 = vadd.f32 %v100, %v167
  %169 = vmatmul.f32.gmra.mxu0 %v62
  %v170 = vpop.f32.mrf.mxu0
  %v171 = vadd.f32 %v100, %v170
  %172 = vmatmul.f32.gmra.mxu0 %v63
  %v173 = vpop.f32.mrf.mxu0
  %v174 = vadd.f32 %v100, %v173
  %175 = vmatmul.f32.gmra.mxu0 %v64
  %v176 = vpop.f32.mrf.mxu0
  %v177 = vadd.f32 %v100, %v176
  %178 = vdwg.mxu0
  %v179 = vtanh.pop %v121
  %v180 = vtanh.pop %v159
  %v181 = vtanh.pop %v124
  %v182 = vtanh.pop %v162
  %v183 = vtanh.pop %v127
  %v184 = vtanh.pop %v165
  %v185 = vtanh.pop %v130
  %v186 = vtanh.pop %v168
  %v187 = vtanh.pop %v133
  %v188 = vtanh.pop %v171
  %v189 = vtanh.pop %v136
  %v190 = vtanh.pop %v174
  %v191 = vtanh.pop %v139
  %v192 = vtanh.pop %v177
  %v193 = vld [vmem:[%s5] sm:$0xff]
  %v194 = vld [vmem:[%s5 + $0x8] sm:$0xff]
  %v195 = vld [vmem:[%s5 + $0x10] sm:$0xff]
  %v196 = vld [vmem:[%s5 + $0x18] sm:$0xff]
  %v197 = vld [vmem:[%s5 + $0x20] sm:$0xff]
  %v198 = vld [vmem:[%s5 + $0x28] sm:$0xff]
  %v199 = vld [vmem:[%s5 + $0x30] sm:$0xff]
  %v200 = vld [vmem:[%s5 + $0x38] sm:$0xff]
  %v201 = vld [vmem:[%s5 + $0x40] sm:$0xff]
  %v202 = vld [vmem:[%s5 + $0x48] sm:$0xff]
  %v203 = vld [vmem:[%s5 + $0x50] sm:$0xff]
  %v204 = vld [vmem:[%s5 + $0x58] sm:$0xff]
  %v205 = vld [vmem:[%s5 + $0x60] sm:$0xff]
  %v206 = vld [vmem:[%s5 + $0x68] sm:$0xff]
  %v207 = vld [vmem:[%s5 + $0x70] sm:$0xff]
  %v208 = vld [vmem:[%s5 + $0x78] sm:$0xff]
  %v209 = vld [vmem:[%s5 + $0x80] sm:$0xff]
  %v210 = vld [vmem:[%s5 + $0x88] sm:$0xff]
  %v211 = vld [vmem:[%s5 + $0x90] sm:$0xff]
  %v212 = vld [vmem:[%s5 + $0x98] sm:$0xff]
  %v213 = vld [vmem:[%s5 + $0xa0] sm:$0xff]
  %v214 = vld [vmem:[%s5 + $0xa8] sm:$0xff]
  %v215 = vld [vmem:[%s5 + $0xb0] sm:$0xff]
  %v216 = vld [vmem:[%s5 + $0xb8] sm:$0xff]
  %v217 = vld [vmem:[%s5 + $0xc0] sm:$0xff]
  %v218 = vld [vmem:[%s5 + $0xc8] sm:$0xff]
  %v219 = vld [vmem:[%s5 + $0xd0] sm:$0xff]
  %v220 = vld [vmem:[%s5 + $0xd8] sm:$0xff]
  %v221 = vld [vmem:[%s5 + $0xe0] sm:$0xff]
  %v222 = vld [vmem:[%s5 + $0xe8] sm:$0xff]
  %v223 = vld [vmem:[%s5 + $0xf0] sm:$0xff]
  %v224 = vld [vmem:[%s5 + $0xf8] sm:$0xff]
  %v225 = vld [vmem:[%s5 + $0x100] sm:$0xff]
  %v226 = vld [vmem:[%s5 + $0x108] sm:$0xff]
  %v227 = vld [vmem:[%s5 + $0x110] sm:$0xff]
  %v228 = vld [vmem:[%s5 + $0x118] sm:$0xff]
  %v229 = vld [vmem:[%s5 + $0x120] sm:$0xff]
  %v230 = vld [vmem:[%s5 + $0x128] sm:$0xff]
  %v231 = vld [vmem:[%s5 + $0x130] sm:$0xff]
  %v232 = vld [vmem:[%s5 + $0x138] sm:$0xff]
  %v233 = vld [vmem:[%s5 + $0x140] sm:$0xff]
  %v234 = vld [vmem:[%s5 + $0x148] sm:$0xff]
  %v235 = vld [vmem:[%s5 + $0x150] sm:$0xff]
  %v236 = vld [vmem:[%s5 + $0x158] sm:$0xff]
  %v237 = vld [vmem:[%s5 + $0x160] sm:$0xff]
  %v238 = vld [vmem:[%s5 + $0x168] sm:$0xff]
  %v239 = vld [vmem:[%s5 + $0x170] sm:$0xff]
  %v240 = vld [vmem:[%s5 + $0x178] sm:$0xff]
  %v241 = vld [vmem:[%s5 + $0x180] sm:$0xff]
  %v242 = vld [vmem:[%s5 + $0x188] sm:$0xff]
  %v243 = vld [vmem:[%s5 + $0x190] sm:$0xff]
  %v244 = vld [vmem:[%s5 + $0x198] sm:$0xff]
  %v245 = vld [vmem:[%s5 + $0x1a0] sm:$0xff]
  %v246 = vld [vmem:[%s5 + $0x1a8] sm:$0xff]
  %v247 = vld [vmem:[%s5 + $0x1b0] sm:$0xff]
  %v248 = vld [vmem:[%s5 + $0x1b8] sm:$0xff]
  %v249 = vld [vmem:[%s5 + $0x1c0] sm:$0xff]
  %v250 = vld [vmem:[%s5 + $0x1c8] sm:$0xff]
  %v251 = vld [vmem:[%s5 + $0x1d0] sm:$0xff]
  %v252 = vld [vmem:[%s5 + $0x1d8] sm:$0xff]
  %v253 = vld [vmem:[%s5 + $0x1e0] sm:$0xff]
  %v254 = vld [vmem:[%s5 + $0x1e8] sm:$0xff]
  %v255 = vld [vmem:[%s5 + $0x1f0] sm:$0xff]
  %v256 = vld [vmem:[%s5 + $0x1f8] sm:$0xff]
  %v257 = vld [vmem:[%s6] sm:$0x3]
  %v259 = vperm.slane %v257, 0
  %v260 = vperm.slane %v257, 1
  %263 = vmatpush.msra.mxu0 %v223
  %264 = vmatpush.msra.mxu0 %v221
  %265 = vmatpush.msra.mxu0 %v219
  %266 = vmatpush.msra.mxu0 %v217
  %267 = vmatpush.msra.mxu0 %v215
  %268 = vmatpush.msra.mxu0 %v213
  %269 = vmatpush.msra.mxu0 %v211
  %270 = vmatpush.msra.mxu0 %v209
  %271 = vmatpush.msra.mxu0 %v207
  %272 = vmatpush.msra.mxu0 %v205
  %273 = vmatpush.msra.mxu0 %v203
  %274 = vmatpush.msra.mxu0 %v201
  %275 = vmatpush.msra.mxu0 %v199
  %276 = vmatpush.msra.mxu0 %v197
  %277 = vmatpush.msra.mxu0 %v195
  %278 = vmatpush.msra.mxu0 %v193
  %279 = vmatmul.f32.gmra.mxu0 %v179
  %v280 = vpop.f32.mrf.mxu0
  %v281 = vadd.f32 %v259, %v280
  %282 = vmatmul.f32.gmra.mxu0 %v181
  %v283 = vpop.f32.mrf.mxu0
  %v284 = vadd.f32 %v259, %v283
  %285 = vmatmul.f32.gmra.mxu0 %v183
  %v286 = vpop.f32.mrf.mxu0
  %v287 = vadd.f32 %v259, %v286
  %288 = vmatmul.f32.gmra.mxu0 %v185
  %v289 = vpop.f32.mrf.mxu0
  %v290 = vadd.f32 %v259, %v289
  %291 = vmatmul.f32.gmra.mxu0 %v187
  %v292 = vpop.f32.mrf.mxu0
  %v293 = vadd.f32 %v259, %v292
  %294 = vmatmul.f32.gmra.mxu0 %v189
  %v295 = vpop.f32.mrf.mxu0
  %v296 = vadd.f32 %v259, %v295
  %297 = vmatmul.f32.gmra.mxu0 %v191
  %v298 = vpop.f32.mrf.mxu0
  %v299 = vadd.f32 %v259, %v298
  %300 = vdwg.mxu0
  %301 = vmatpush.msra.mxu0 %v255
  %302 = vmatpush.msra.mxu0 %v253
  %303 = vmatpush.msra.mxu0 %v251
  %304 = vmatpush.msra.mxu0 %v249
  %305 = vmatpush.msra.mxu0 %v247
  %306 = vmatpush.msra.mxu0 %v245
  %307 = vmatpush.msra.mxu0 %v243
  %308 = vmatpush.msra.mxu0 %v241
  %309 = vmatpush.msra.mxu0 %v239
  %310 = vmatpush.msra.mxu0 %v237
  %311 = vmatpush.msra.mxu0 %v235
  %312 = vmatpush.msra.mxu0 %v233
  %313 = vmatpush.msra.mxu0 %v231
  %314 = vmatpush.msra.mxu0 %v229
  %315 = vmatpush.msra.mxu0 %v227
  %316 = vmatpush.msra.mxu0 %v225
  %317 = vmatmul.f32.gmra.mxu0 %v180
  %v318 = vpop.f32.mrf.mxu0
  %v319 = vadd.f32 %v281, %v318
  %320 = vmatmul.f32.gmra.mxu0 %v182
  %v321 = vpop.f32.mrf.mxu0
  %v322 = vadd.f32 %v284, %v321
  %323 = vmatmul.f32.gmra.mxu0 %v184
  %v324 = vpop.f32.mrf.mxu0
  %v325 = vadd.f32 %v287, %v324
  %326 = vmatmul.f32.gmra.mxu0 %v186
  %v327 = vpop.f32.mrf.mxu0
  %v328 = vadd.f32 %v290, %v327
  %329 = vmatmul.f32.gmra.mxu0 %v188
  %v330 = vpop.f32.mrf.mxu0
  %v331 = vadd.f32 %v293, %v330
  %332 = vmatmul.f32.gmra.mxu0 %v190
  %v333 = vpop.f32.mrf.mxu0
  %v334 = vadd.f32 %v296, %v333
  %335 = vmatmul.f32.gmra.mxu0 %v192
  %v336 = vpop.f32.mrf.mxu0
  %v337 = vadd.f32 %v299, %v336
  %338 = vdwg.mxu0
  %339 = vmatpush.msra.mxu0 %v224
  %340 = vmatpush.msra.mxu0 %v222
  %341 = vmatpush.msra.mxu0 %v220
  %342 = vmatpush.msra.mxu0 %v218
  %343 = vmatpush.msra.mxu0 %v216
  %344 = vmatpush.msra.mxu0 %v214
  %345 = vmatpush.msra.mxu0 %v212
  %346 = vmatpush.msra.mxu0 %v210
  %347 = vmatpush.msra.mxu0 %v208
  %348 = vmatpush.msra.mxu0 %v206
  %349 = vmatpush.msra.mxu0 %v204
  %350 = vmatpush.msra.mxu0 %v202
  %351 = vmatpush.msra.mxu0 %v200
  %352 = vmatpush.msra.mxu0 %v198
  %353 = vmatpush.msra.mxu0 %v196
  %354 = vmatpush.msra.mxu0 %v194
  %355 = vmatmul.f32.gmra.mxu0 %v179
  %v356 = vpop.f32.mrf.mxu0
  %v357 = vadd.f32 %v260, %v356
  %358 = vmatmul.f32.gmra.mxu0 %v181
  %v359 = vpop.f32.mrf.mxu0
  %v360 = vadd.f32 %v260, %v359
  %361 = vmatmul.f32.gmra.mxu0 %v183
  %v362 = vpop.f32.mrf.mxu0
  %v363 = vadd.f32 %v260, %v362
  %364 = vmatmul.f32.gmra.mxu0 %v185
  %v365 = vpop.f32.mrf.mxu0
  %v366 = vadd.f32 %v260, %v365
  %367 = vmatmul.f32.gmra.mxu0 %v187
  %v368 = vpop.f32.mrf.mxu0
  %v369 = vadd.f32 %v260, %v368
  %370 = vmatmul.f32.gmra.mxu0 %v189
  %v371 = vpop.f32.mrf.mxu0
  %v372 = vadd.f32 %v260, %v371
  %373 = vmatmul.f32.gmra.mxu0 %v191
  %v374 = vpop.f32.mrf.mxu0
  %v375 = vadd.f32 %v260, %v374
  %376 = vdwg.mxu0
  %377 = vmatpush.msra.mxu0 %v256
  %378 = vmatpush.msra.mxu0 %v254
  %379 = vmatpush.msra.mxu0 %v252
  %380 = vmatpush.msra.mxu0 %v250
  %381 = vmatpush.msra.mxu0 %v248
  %382 = vmatpush.msra.mxu0 %v246
  %383 = vmatpush.msra.mxu0 %v244
  %384 = vmatpush.msra.mxu0 %v242
  %385 = vmatpush.msra.mxu0 %v240
  %386 = vmatpush.msra.mxu0 %v238
  %387 = vmatpush.msra.mxu0 %v236
  %388 = vmatpush.msra.mxu0 %v234
  %389 = vmatpush.msra.mxu0 %v232
  %390 = vmatpush.msra.mxu0 %v230
  %391 = vmatpush.msra.mxu0 %v228
  %392 = vmatpush.msra.mxu0 %v226
  %393 = vmatmul.f32.gmra.mxu0 %v180
  %v394 = vpop.f32.mrf.mxu0
  %v395 = vadd.f32 %v357, %v394
  %396 = vmatmul.f32.gmra.mxu0 %v182
  %v397 = vpop.f32.mrf.mxu0
  %v398 = vadd.f32 %v360, %v397
  %399 = vmatmul.f32.gmra.mxu0 %v184
  %v400 = vpop.f32.mrf.mxu0
  %v401 = vadd.f32 %v363, %v400
  %402 = vmatmul.f32.gmra.mxu0 %v186
  %v403 = vpop.f32.mrf.mxu0
  %v404 = vadd.f32 %v366, %v403
  %405 = vmatmul.f32.gmra.mxu0 %v188
  %v406 = vpop.f32.mrf.mxu0
  %v407 = vadd.f32 %v369, %v406
  %408 = vmatmul.f32.gmra.mxu0 %v190
  %v409 = vpop.f32.mrf.mxu0
  %v410 = vadd.f32 %v372, %v409
  %411 = vmatmul.f32.gmra.mxu0 %v192
  %v412 = vpop.f32.mrf.mxu0
  %v413 = vadd.f32 %v375, %v412
  %414 = vdwg.mxu0
  %v415 = vtanh.pop %v319
  %v416 = vtanh.pop %v395
  %v417 = vtanh.pop %v322
  %v418 = vtanh.pop %v398
  %v419 = vtanh.pop %v325
  %v420 = vtanh.pop %v401
  %v421 = vtanh.pop %v328
  %v422 = vtanh.pop %v404
  %v423 = vtanh.pop %v331
  %v424 = vtanh.pop %v407
  %v425 = vtanh.pop %v334
  %v426 = vtanh.pop %v410
  %v427 = vtanh.pop %v337
  %v428 = vtanh.pop %v413
  %v429 = vld [vmem:[%s7] sm:$0xff]
  %v430 = vld [vmem:[%s7 + $0x8] sm:$0xff]
  %v431 = vld [vmem:[%s7 + $0x10] sm:$0xff]
  %v432 = vld [vmem:[%s7 + $0x18] sm:$0xff]
  %v433 = vld [vmem:[%s7 + $0x20] sm:$0xff]
  %v434 = vld [vmem:[%s7 + $0x28] sm:$0xff]
  %v435 = vld [vmem:[%s7 + $0x30] sm:$0xff]
  %v436 = vld [vmem:[%s7 + $0x38] sm:$0xff]
  %v437 = vld [vmem:[%s7 + $0x40] sm:$0xff]
  %v438 = vld [vmem:[%s7 + $0x48] sm:$0xff]
  %v439 = vld [vmem:[%s7 + $0x50] sm:$0xff]
  %v440 = vld [vmem:[%s7 + $0x58] sm:$0xff]
  %v441 = vld [vmem:[%s7 + $0x60] sm:$0xff]
  %v442 = vld [vmem:[%s7 + $0x68] sm:$0xff]
  %v443 = vld [vmem:[%s7 + $0x70] sm:$0xff]
  %v444 = vld [vmem:[%s7 + $0x78] sm:$0xff]
  %v445 = vld [vmem:[%s7 + $0x80] sm:$0xff]
  %v446 = vld [vmem:[%s7 + $0x88] sm:$0xff]
  %v447 = vld [vmem:[%s7 + $0x90] sm:$0xff]
  %v448 = vld [vmem:[%s7 + $0x98] sm:$0xff]
  %v449 = vld [vmem:[%s7 + $0xa0] sm:$0xff]
  %v450 = vld [vmem:[%s7 + $0xa8] sm:$0xff]
  %v451 = vld [vmem:[%s7 + $0xb0] sm:$0xff]
  %v452 = vld [vmem:[%s7 + $0xb8] sm:$0xff]
  %v453 = vld [vmem:[%s7 + $0xc0] sm:$0xff]
  %v454 = vld [vmem:[%s7 + $0xc8] sm:$0xff]
  %v455 = vld [vmem:[%s7 + $0xd0] sm:$0xff]
  %v456 = vld [vmem:[%s7 + $0xd8] sm:$0xff]
  %v457 = vld [vmem:[%s7 + $0xe0] sm:$0xff]
  %v458 = vld [vmem:[%s7 + $0xe8] sm:$0xff]
  %v459 = vld [vmem:[%s7 + $0xf0] sm:$0xff]
  %v460 = vld [vmem:[%s7 + $0xf8] sm:$0xff]
  %v461 = vld [vmem:[%s7 + $0x100] sm:$0xff]
  %v462 = vld [vmem:[%s7 + $0x108] sm:$0xff]
  %v463 = vld [vmem:[%s7 + $0x110] sm:$0xff]
  %v464 = vld [vmem:[%s7 + $0x118] sm:$0xff]
  %v465 = vld [vmem:[%s7 + $0x120] sm:$0xff]
  %v466 = vld [vmem:[%s7 + $0x128] sm:$0xff]
  %v467 = vld [vmem:[%s7 + $0x130] sm:$0xff]
  %v468 = vld [vmem:[%s7 + $0x138] sm:$0xff]
  %v469 = vld [vmem:[%s7 + $0x140] sm:$0xff]
  %v470 = vld [vmem:[%s7 + $0x148] sm:$0xff]
  %v471 = vld [vmem:[%s7 + $0x150] sm:$0xff]
  %v472 = vld [vmem:[%s7 + $0x158] sm:$0xff]
  %v473 = vld [vmem:[%s7 + $0x160] sm:$0xff]
  %v474 = vld [vmem:[%s7 + $0x168] sm:$0xff]
  %v475 = vld [vmem:[%s7 + $0x170] sm:$0xff]
  %v476 = vld [vmem:[%s7 + $0x178] sm:$0xff]
  %v477 = vld [vmem:[%s7 + $0x180] sm:$0xff]
  %v478 = vld [vmem:[%s7 + $0x188] sm:$0xff]
  %v479 = vld [vmem:[%s7 + $0x190] sm:$0xff]
  %v480 = vld [vmem:[%s7 + $0x198] sm:$0xff]
  %v481 = vld [vmem:[%s7 + $0x1a0] sm:$0xff]
  %v482 = vld [vmem:[%s7 + $0x1a8] sm:$0xff]
  %v483 = vld [vmem:[%s7 + $0x1b0] sm:$0xff]
  %v484 = vld [vmem:[%s7 + $0x1b8] sm:$0xff]
  %v485 = vld [vmem:[%s7 + $0x1c0] sm:$0xff]
  %v486 = vld [vmem:[%s7 + $0x1c8] sm:$0xff]
  %v487 = vld [vmem:[%s7 + $0x1d0] sm:$0xff]
  %v488 = vld [vmem:[%s7 + $0x1d8] sm:$0xff]
  %v489 = vld [vmem:[%s7 + $0x1e0] sm:$0xff]
  %v490 = vld [vmem:[%s7 + $0x1e8] sm:$0xff]
  %v491 = vld [vmem:[%s7 + $0x1f0] sm:$0xff]
  %v492 = vld [vmem:[%s7 + $0x1f8] sm:$0xff]
  %v493 = vld [vmem:[%s7 + $0x200] sm:$0xff]
  %v494 = vld [vmem:[%s7 + $0x208] sm:$0xff]
  %v495 = vld [vmem:[%s7 + $0x210] sm:$0xff]
  %v496 = vld [vmem:[%s7 + $0x218] sm:$0xff]
  %v497 = vld [vmem:[%s7 + $0x220] sm:$0xff]
  %v498 = vld [vmem:[%s7 + $0x228] sm:$0xff]
  %v499 = vld [vmem:[%s7 + $0x230] sm:$0xff]
  %v500 = vld [vmem:[%s7 + $0x238] sm:$0xff]
  %v501 = vld [vmem:[%s7 + $0x240] sm:$0xff]
  %v502 = vld [vmem:[%s7 + $0x248] sm:$0xff]
  %v503 = vld [vmem:[%s7 + $0x250] sm:$0xff]
  %v504 = vld [vmem:[%s7 + $0x258] sm:$0xff]
  %v505 = vld [vmem:[%s7 + $0x260] sm:$0xff]
  %v506 = vld [vmem:[%s7 + $0x268] sm:$0xff]
  %v507 = vld [vmem:[%s7 + $0x270] sm:$0xff]
  %v508 = vld [vmem:[%s7 + $0x278] sm:$0xff]
  %v509 = vld [vmem:[%s7 + $0x280] sm:$0xff]
  %v510 = vld [vmem:[%s7 + $0x288] sm:$0xff]
  %v511 = vld [vmem:[%s7 + $0x290] sm:$0xff]
  %v512 = vld [vmem:[%s7 + $0x298] sm:$0xff]
  %v513 = vld [vmem:[%s7 + $0x2a0] sm:$0xff]
  %v514 = vld [vmem:[%s7 + $0x2a8] sm:$0xff]
  %v515 = vld [vmem:[%s7 + $0x2b0] sm:$0xff]
  %v516 = vld [vmem:[%s7 + $0x2b8] sm:$0xff]
  %v517 = vld [vmem:[%s7 + $0x2c0] sm:$0xff]
  %v518 = vld [vmem:[%s7 + $0x2c8] sm:$0xff]
  %v519 = vld [vmem:[%s7 + $0x2d0] sm:$0xff]
  %v520 = vld [vmem:[%s7 + $0x2d8] sm:$0xff]
  %v521 = vld [vmem:[%s7 + $0x2e0] sm:$0xff]
  %v522 = vld [vmem:[%s7 + $0x2e8] sm:$0xff]
  %v523 = vld [vmem:[%s7 + $0x2f0] sm:$0xff]
  %v524 = vld [vmem:[%s7 + $0x2f8] sm:$0xff]
  %v525 = vld [vmem:[%s7 + $0x300] sm:$0xff]
  %v526 = vld [vmem:[%s7 + $0x308] sm:$0xff]
  %v527 = vld [vmem:[%s7 + $0x310] sm:$0xff]
  %v528 = vld [vmem:[%s7 + $0x318] sm:$0xff]
  %v529 = vld [vmem:[%s7 + $0x320] sm:$0xff]
  %v530 = vld [vmem:[%s7 + $0x328] sm:$0xff]
  %v531 = vld [vmem:[%s7 + $0x330] sm:$0xff]
  %v532 = vld [vmem:[%s7 + $0x338] sm:$0xff]
  %v533 = vld [vmem:[%s7 + $0x340] sm:$0xff]
  %v534 = vld [vmem:[%s7 + $0x348] sm:$0xff]
  %v535 = vld [vmem:[%s7 + $0x350] sm:$0xff]
  %v536 = vld [vmem:[%s7 + $0x358] sm:$0xff]
  %v537 = vld [vmem:[%s7 + $0x360] sm:$0xff]
  %v538 = vld [vmem:[%s7 + $0x368] sm:$0xff]
  %v539 = vld [vmem:[%s7 + $0x370] sm:$0xff]
  %v540 = vld [vmem:[%s7 + $0x378] sm:$0xff]
  %v541 = vld [vmem:[%s7 + $0x380] sm:$0xff]
  %v542 = vld [vmem:[%s7 + $0x388] sm:$0xff]
  %v543 = vld [vmem:[%s7 + $0x390] sm:$0xff]
  %v544 = vld [vmem:[%s7 + $0x398] sm:$0xff]
  %v545 = vld [vmem:[%s7 + $0x3a0] sm:$0xff]
  %v546 = vld [vmem:[%s7 + $0x3a8] sm:$0xff]
  %v547 = vld [vmem:[%s7 + $0x3b0] sm:$0xff]
  %v548 = vld [vmem:[%s7 + $0x3b8] sm:$0xff]
  %v549 = vld [vmem:[%s7 + $0x3c0] sm:$0xff]
  %v550 = vld [vmem:[%s7 + $0x3c8] sm:$0xff]
  %v551 = vld [vmem:[%s7 + $0x3d0] sm:$0xff]
  %v552 = vld [vmem:[%s7 + $0x3d8] sm:$0xff]
  %v553 = vld [vmem:[%s7 + $0x3e0] sm:$0xff]
  %v554 = vld [vmem:[%s7 + $0x3e8] sm:$0xff]
  %v555 = vld [vmem:[%s7 + $0x3f0] sm:$0xff]
  %v556 = vld [vmem:[%s7 + $0x3f8] sm:$0xff]
  %v557 = vld [vmem:[%s7 + $0x400] sm:$0xff]
  %v558 = vld [vmem:[%s7 + $0x408] sm:$0xff]
  %v559 = vld [vmem:[%s7 + $0x410] sm:$0xff]
  %v560 = vld [vmem:[%s7 + $0x418] sm:$0xff]
  %v561 = vld [vmem:[%s7 + $0x420] sm:$0xff]
  %v562 = vld [vmem:[%s7 + $0x428] sm:$0xff]
  %v563 = vld [vmem:[%s7 + $0x430] sm:$0xff]
  %v564 = vld [vmem:[%s7 + $0x438] sm:$0xff]
  %v565 = vld [vmem:[%s7 + $0x440] sm:$0xff]
  %v566 = vld [vmem:[%s7 + $0x448] sm:$0xff]
  %v567 = vld [vmem:[%s7 + $0x450] sm:$0xff]
  %v568 = vld [vmem:[%s7 + $0x458] sm:$0xff]
  %v569 = vld [vmem:[%s7 + $0x460] sm:$0xff]
  %v570 = vld [vmem:[%s7 + $0x468] sm:$0xff]
  %v571 = vld [vmem:[%s7 + $0x470] sm:$0xff]
  %v572 = vld [vmem:[%s7 + $0x478] sm:$0xff]
  %v573 = vld [vmem:[%s7 + $0x480] sm:$0xff]
  %v574 = vld [vmem:[%s7 + $0x488] sm:$0xff]
  %v575 = vld [vmem:[%s7 + $0x490] sm:$0xff]
  %v576 = vld [vmem:[%s7 + $0x498] sm:$0xff]
  %v577 = vld [vmem:[%s7 + $0x4a0] sm:$0xff]
  %v578 = vld [vmem:[%s7 + $0x4a8] sm:$0xff]
  %v579 = vld [vmem:[%s7 + $0x4b0] sm:$0xff]
  %v580 = vld [vmem:[%s7 + $0x4b8] sm:$0xff]
  %v581 = vld [vmem:[%s7 + $0x4c0] sm:$0xff]
  %v582 = vld [vmem:[%s7 + $0x4c8] sm:$0xff]
  %v583 = vld [vmem:[%s7 + $0x4d0] sm:$0xff]
  %v584 = vld [vmem:[%s7 + $0x4d8] sm:$0xff]
  %v585 = vld [vmem:[%s7 + $0x4e0] sm:$0xff]
  %v586 = vld [vmem:[%s7 + $0x4e8] sm:$0xff]
  %v587 = vld [vmem:[%s7 + $0x4f0] sm:$0xff]
  %v588 = vld [vmem:[%s7 + $0x4f8] sm:$0xff]
  %v589 = vld [vmem:[%s7 + $0x500] sm:$0xff]
  %v590 = vld [vmem:[%s7 + $0x508] sm:$0xff]
  %v591 = vld [vmem:[%s7 + $0x510] sm:$0xff]
  %v592 = vld [vmem:[%s7 + $0x518] sm:$0xff]
  %v593 = vld [vmem:[%s7 + $0x520] sm:$0xff]
  %v594 = vld [vmem:[%s7 + $0x528] sm:$0xff]
  %v595 = vld [vmem:[%s7 + $0x530] sm:$0xff]
  %v596 = vld [vmem:[%s7 + $0x538] sm:$0xff]
  %v597 = vld [vmem:[%s7 + $0x540] sm:$0xff]
  %v598 = vld [vmem:[%s7 + $0x548] sm:$0xff]
  %v599 = vld [vmem:[%s7 + $0x550] sm:$0xff]
  %v600 = vld [vmem:[%s7 + $0x558] sm:$0xff]
  %v601 = vld [vmem:[%s7 + $0x560] sm:$0xff]
  %v602 = vld [vmem:[%s7 + $0x568] sm:$0xff]
  %v603 = vld [vmem:[%s7 + $0x570] sm:$0xff]
  %v604 = vld [vmem:[%s7 + $0x578] sm:$0xff]
  %v605 = vld [vmem:[%s7 + $0x580] sm:$0xff]
  %v606 = vld [vmem:[%s7 + $0x588] sm:$0xff]
  %v607 = vld [vmem:[%s7 + $0x590] sm:$0xff]
  %v608 = vld [vmem:[%s7 + $0x598] sm:$0xff]
  %v609 = vld [vmem:[%s7 + $0x5a0] sm:$0xff]
  %v610 = vld [vmem:[%s7 + $0x5a8] sm:$0xff]
  %v611 = vld [vmem:[%s7 + $0x5b0] sm:$0xff]
  %v612 = vld [vmem:[%s7 + $0x5b8] sm:$0xff]
  %v613 = vld [vmem:[%s7 + $0x5c0] sm:$0xff]
  %v614 = vld [vmem:[%s7 + $0x5c8] sm:$0xff]
  %v615 = vld [vmem:[%s7 + $0x5d0] sm:$0xff]
  %v616 = vld [vmem:[%s7 + $0x5d8] sm:$0xff]
  %v617 = vld [vmem:[%s7 + $0x5e0] sm:$0xff]
  %v618 = vld [vmem:[%s7 + $0x5e8] sm:$0xff]
  %v619 = vld [vmem:[%s7 + $0x5f0] sm:$0xff]
  %v620 = vld [vmem:[%s7 + $0x5f8] sm:$0xff]
  %v621 = vld [vmem:[%s8] sm:$0x3f]
  %v623 = vperm.slane %v621, 0
  %v624 = vperm.slane %v621, 1
  %v625 = vperm.slane %v621, 2
  %v626 = vperm.slane %v621, 3
  %v627 = vperm.slane %v621, 4
  %v628 = vperm.slane %v621, 5
  %635 = vmatpush.msra.mxu0 %v519
  %636 = vmatpush.msra.mxu0 %v513
  %637 = vmatpush.msra.mxu0 %v507
  %638 = vmatpush.msra.mxu0 %v501
  %639 = vmatpush.msra.mxu0 %v495
  %640 = vmatpush.msra.mxu0 %v489
  %641 = vmatpush.msra.mxu0 %v483
  %642 = vmatpush.msra.mxu0 %v477
  %643 = vmatpush.msra.mxu0 %v471
  %644 = vmatpush.msra.mxu0 %v465
  %645 = vmatpush.msra.mxu0 %v459
  %646 = vmatpush.msra.mxu0 %v453
  %647 = vmatpush.msra.mxu0 %v447
  %648 = vmatpush.msra.mxu0 %v441
  %649 = vmatpush.msra.mxu0 %v435
  %650 = vmatpush.msra.mxu0 %v429
  %651 = vmatmul.f32.gmra.mxu0 %v415
  %v652 = vpop.f32.mrf.mxu0
  %v653 = vadd.f32 %v623, %v652
  %654 = vmatmul.f32.gmra.mxu0 %v417
  %v655 = vpop.f32.mrf.mxu0
  %v656 = vadd.f32 %v623, %v655
  %657 = vmatmul.f32.gmra.mxu0 %v419
  %v658 = vpop.f32.mrf.mxu0
  %v659 = vadd.f32 %v623, %v658
  %660 = vmatmul.f32.gmra.mxu0 %v421
  %v661 = vpop.f32.mrf.mxu0
  %v662 = vadd.f32 %v623, %v661
  %663 = vmatmul.f32.gmra.mxu0 %v423
  %v664 = vpop.f32.mrf.mxu0
  %v665 = vadd.f32 %v623, %v664
  %666 = vmatmul.f32.gmra.mxu0 %v425
  %v667 = vpop.f32.mrf.mxu0
  %v668 = vadd.f32 %v623, %v667
  %669 = vmatmul.f32.gmra.mxu0 %v427
  %v670 = vpop.f32.mrf.mxu0
  %v671 = vadd.f32 %v623, %v670
  %672 = vdwg.mxu0
  %673 = vmatpush.msra.mxu0 %v615
  %674 = vmatpush.msra.mxu0 %v609
  %675 = vmatpush.msra.mxu0 %v603
  %676 = vmatpush.msra.mxu0 %v597
  %677 = vmatpush.msra.mxu0 %v591
  %678 = vmatpush.msra.mxu0 %v585
  %679 = vmatpush.msra.mxu0 %v579
  %680 = vmatpush.msra.mxu0 %v573
  %681 = vmatpush.msra.mxu0 %v567
  %682 = vmatpush.msra.mxu0 %v561
  %683 = vmatpush.msra.mxu0 %v555
  %684 = vmatpush.msra.mxu0 %v549
  %685 = vmatpush.msra.mxu0 %v543
  %686 = vmatpush.msra.mxu0 %v537
  %687 = vmatpush.msra.mxu0 %v531
  %688 = vmatpush.msra.mxu0 %v525
  %689 = vmatmul.f32.gmra.mxu0 %v416
  %v690 = vpop.f32.mrf.mxu0
  %v691 = vadd.f32 %v653, %v690
  %692 = vmatmul.f32.gmra.mxu0 %v418
  %v693 = vpop.f32.mrf.mxu0
  %v694 = vadd.f32 %v656, %v693
  %695 = vmatmul.f32.gmra.mxu0 %v420
  %v696 = vpop.f32.mrf.mxu0
  %v697 = vadd.f32 %v659, %v696
  %698 = vmatmul.f32.gmra.mxu0 %v422
  %v699 = vpop.f32.mrf.mxu0
  %v700 = vadd.f32 %v662, %v699
  %701 = vmatmul.f32.gmra.mxu0 %v424
  %v702 = vpop.f32.mrf.mxu0
  %v703 = vadd.f32 %v665, %v702
  %704 = vmatmul.f32.gmra.mxu0 %v426
  %v705 = vpop.f32.mrf.mxu0
  %v706 = vadd.f32 %v668, %v705
  %707 = vmatmul.f32.gmra.mxu0 %v428
  %v708 = vpop.f32.mrf.mxu0
  %v709 = vadd.f32 %v671, %v708
  %710 = vdwg.mxu0
  %711 = vmatpush.msra.mxu0 %v520
  %712 = vmatpush.msra.mxu0 %v514
  %713 = vmatpush.msra.mxu0 %v508
  %714 = vmatpush.msra.mxu0 %v502
  %715 = vmatpush.msra.mxu0 %v496
  %716 = vmatpush.msra.mxu0 %v490
  %717 = vmatpush.msra.mxu0 %v484
  %718 = vmatpush.msra.mxu0 %v478
  %719 = vmatpush.msra.mxu0 %v472
  %720 = vmatpush.msra.mxu0 %v466
  %721 = vmatpush.msra.mxu0 %v460
  %722 = vmatpush.msra.mxu0 %v454
  %723 = vmatpush.msra.mxu0 %v448
  %724 = vmatpush.msra.mxu0 %v442
  %725 = vmatpush.msra.mxu0 %v436
  %726 = vmatpush.msra.mxu0 %v430
  %727 = vmatmul.f32.gmra.mxu0 %v415
  %v728 = vpop.f32.mrf.mxu0
  %v729 = vadd.f32 %v624, %v728
  %730 = vmatmul.f32.gmra.mxu0 %v417
  %v731 = vpop.f32.mrf.mxu0
  %v732 = vadd.f32 %v624, %v731
  %733 = vmatmul.f32.gmra.mxu0 %v419
  %v734 = vpop.f32.mrf.mxu0
  %v735 = vadd.f32 %v624, %v734
  %736 = vmatmul.f32.gmra.mxu0 %v421
  %v737 = vpop.f32.mrf.mxu0
  %v738 = vadd.f32 %v624, %v737
  %739 = vmatmul.f32.gmra.mxu0 %v423
  %v740 = vpop.f32.mrf.mxu0
  %v741 = vadd.f32 %v624, %v740
  %742 = vmatmul.f32.gmra.mxu0 %v425
  %v743 = vpop.f32.mrf.mxu0
  %v744 = vadd.f32 %v624, %v743
  %745 = vmatmul.f32.gmra.mxu0 %v427
  %v746 = vpop.f32.mrf.mxu0
  %v747 = vadd.f32 %v624, %v746
  %748 = vdwg.mxu0
  %749 = vmatpush.msra.mxu0 %v616
  %750 = vmatpush.msra.mxu0 %v610
  %751 = vmatpush.msra.mxu0 %v604
  %752 = vmatpush.msra.mxu0 %v598
  %753 = vmatpush.msra.mxu0 %v592
  %754 = vmatpush.msra.mxu0 %v586
  %755 = vmatpush.msra.mxu0 %v580
  %756 = vmatpush.msra.mxu0 %v574
  %757 = vmatpush.msra.mxu0 %v568
  %758 = vmatpush.msra.mxu0 %v562
  %759 = vmatpush.msra.mxu0 %v556
  %760 = vmatpush.msra.mxu0 %v550
  %761 = vmatpush.msra.mxu0 %v544
  %762 = vmatpush.msra.mxu0 %v538
  %763 = vmatpush.msra.mxu0 %v532
  %764 = vmatpush.msra.mxu0 %v526
  %765 = vmatmul.f32.gmra.mxu0 %v416
  %v766 = vpop.f32.mrf.mxu0
  %v767 = vadd.f32 %v729, %v766
  %768 = vmatmul.f32.gmra.mxu0 %v418
  %v769 = vpop.f32.mrf.mxu0
  %v770 = vadd.f32 %v732, %v769
  %771 = vmatmul.f32.gmra.mxu0 %v420
  %v772 = vpop.f32.mrf.mxu0
  %v773 = vadd.f32 %v735, %v772
  %774 = vmatmul.f32.gmra.mxu0 %v422
  %v775 = vpop.f32.mrf.mxu0
  %v776 = vadd.f32 %v738, %v775
  %777 = vmatmul.f32.gmra.mxu0 %v424
  %v778 = vpop.f32.mrf.mxu0
  %v779 = vadd.f32 %v741, %v778
  %780 = vmatmul.f32.gmra.mxu0 %v426
  %v781 = vpop.f32.mrf.mxu0
  %v782 = vadd.f32 %v744, %v781
  %783 = vmatmul.f32.gmra.mxu0 %v428
  %v784 = vpop.f32.mrf.mxu0
  %v785 = vadd.f32 %v747, %v784
  %786 = vdwg.mxu0
  %787 = vmatpush.msra.mxu0 %v521
  %788 = vmatpush.msra.mxu0 %v515
  %789 = vmatpush.msra.mxu0 %v509
  %790 = vmatpush.msra.mxu0 %v503
  %791 = vmatpush.msra.mxu0 %v497
  %792 = vmatpush.msra.mxu0 %v491
  %793 = vmatpush.msra.mxu0 %v485
  %794 = vmatpush.msra.mxu0 %v479
  %795 = vmatpush.msra.mxu0 %v473
  %796 = vmatpush.msra.mxu0 %v467
  %797 = vmatpush.msra.mxu0 %v461
  %798 = vmatpush.msra.mxu0 %v455
  %799 = vmatpush.msra.mxu0 %v449
  %800 = vmatpush.msra.mxu0 %v443
  %801 = vmatpush.msra.mxu0 %v437
  %802 = vmatpush.msra.mxu0 %v431
  %803 = vmatmul.f32.gmra.mxu0 %v415
  %v804 = vpop.f32.mrf.mxu0
  %v805 = vadd.f32 %v625, %v804
  %806 = vmatmul.f32.gmra.mxu0 %v417
  %v807 = vpop.f32.mrf.mxu0
  %v808 = vadd.f32 %v625, %v807
  %809 = vmatmul.f32.gmra.mxu0 %v419
  %v810 = vpop.f32.mrf.mxu0
  %v811 = vadd.f32 %v625, %v810
  %812 = vmatmul.f32.gmra.mxu0 %v421
  %v813 = vpop.f32.mrf.mxu0
  %v814 = vadd.f32 %v625, %v813
  %815 = vmatmul.f32.gmra.mxu0 %v423
  %v816 = vpop.f32.mrf.mxu0
  %v817 = vadd.f32 %v625, %v816
  %818 = vmatmul.f32.gmra.mxu0 %v425
  %v819 = vpop.f32.mrf.mxu0
  %v820 = vadd.f32 %v625, %v819
  %821 = vmatmul.f32.gmra.mxu0 %v427
  %v822 = vpop.f32.mrf.mxu0
  %v823 = vadd.f32 %v625, %v822
  %824 = vdwg.mxu0
  %825 = vmatpush.msra.mxu0 %v617
  %826 = vmatpush.msra.mxu0 %v611
  %827 = vmatpush.msra.mxu0 %v605
  %828 = vmatpush.msra.mxu0 %v599
  %829 = vmatpush.msra.mxu0 %v593
  %830 = vmatpush.msra.mxu0 %v587
  %831 = vmatpush.msra.mxu0 %v581
  %832 = vmatpush.msra.mxu0 %v575
  %833 = vmatpush.msra.mxu0 %v569
  %834 = vmatpush.msra.mxu0 %v563
  %835 = vmatpush.msra.mxu0 %v557
  %836 = vmatpush.msra.mxu0 %v551
  %837 = vmatpush.msra.mxu0 %v545
  %838 = vmatpush.msra.mxu0 %v539
  %839 = vmatpush.msra.mxu0 %v533
  %840 = vmatpush.msra.mxu0 %v527
  %841 = vmatmul.f32.gmra.mxu0 %v416
  %v842 = vpop.f32.mrf.mxu0
  %v843 = vadd.f32 %v805, %v842
  %844 = vmatmul.f32.gmra.mxu0 %v418
  %v845 = vpop.f32.mrf.mxu0
  %v846 = vadd.f32 %v808, %v845
  %847 = vmatmul.f32.gmra.mxu0 %v420
  %v848 = vpop.f32.mrf.mxu0
  %v849 = vadd.f32 %v811, %v848
  %850 = vmatmul.f32.gmra.mxu0 %v422
  %v851 = vpop.f32.mrf.mxu0
  %v852 = vadd.f32 %v814, %v851
  %853 = vmatmul.f32.gmra.mxu0 %v424
  %v854 = vpop.f32.mrf.mxu0
  %v855 = vadd.f32 %v817, %v854
  %856 = vmatmul.f32.gmra.mxu0 %v426
  %v857 = vpop.f32.mrf.mxu0
  %v858 = vadd.f32 %v820, %v857
  %859 = vmatmul.f32.gmra.mxu0 %v428
  %v860 = vpop.f32.mrf.mxu0
  %v861 = vadd.f32 %v823, %v860
  %862 = vdwg.mxu0
  %863 = vmatpush.msra.mxu0 %v522
  %864 = vmatpush.msra.mxu0 %v516
  %865 = vmatpush.msra.mxu0 %v510
  %866 = vmatpush.msra.mxu0 %v504
  %867 = vmatpush.msra.mxu0 %v498
  %868 = vmatpush.msra.mxu0 %v492
  %869 = vmatpush.msra.mxu0 %v486
  %870 = vmatpush.msra.mxu0 %v480
  %871 = vmatpush.msra.mxu0 %v474
  %872 = vmatpush.msra.mxu0 %v468
  %873 = vmatpush.msra.mxu0 %v462
  %874 = vmatpush.msra.mxu0 %v456
  %875 = vmatpush.msra.mxu0 %v450
  %876 = vmatpush.msra.mxu0 %v444
  %877 = vmatpush.msra.mxu0 %v438
  %878 = vmatpush.msra.mxu0 %v432
  %879 = vmatmul.f32.gmra.mxu0 %v415
  %v880 = vpop.f32.mrf.mxu0
  %v881 = vadd.f32 %v626, %v880
  %882 = vmatmul.f32.gmra.mxu0 %v417
  %v883 = vpop.f32.mrf.mxu0
  %v884 = vadd.f32 %v626, %v883
  %885 = vmatmul.f32.gmra.mxu0 %v419
  %v886 = vpop.f32.mrf.mxu0
  %v887 = vadd.f32 %v626, %v886
  %888 = vmatmul.f32.gmra.mxu0 %v421
  %v889 = vpop.f32.mrf.mxu0
  %v890 = vadd.f32 %v626, %v889
  %891 = vmatmul.f32.gmra.mxu0 %v423
  %v892 = vpop.f32.mrf.mxu0
  %v893 = vadd.f32 %v626, %v892
  %894 = vmatmul.f32.gmra.mxu0 %v425
  %v895 = vpop.f32.mrf.mxu0
  %v896 = vadd.f32 %v626, %v895
  %897 = vmatmul.f32.gmra.mxu0 %v427
  %v898 = vpop.f32.mrf.mxu0
  %v899 = vadd.f32 %v626, %v898
  %900 = vdwg.mxu0
  %901 = vmatpush.msra.mxu0 %v618
  %902 = vmatpush.msra.mxu0 %v612
  %903 = vmatpush.msra.mxu0 %v606
  %904 = vmatpush.msra.mxu0 %v600
  %905 = vmatpush.msra.mxu0 %v594
  %906 = vmatpush.msra.mxu0 %v588
  %907 = vmatpush.msra.mxu0 %v582
  %908 = vmatpush.msra.mxu0 %v576
  %909 = vmatpush.msra.mxu0 %v570
  %910 = vmatpush.msra.mxu0 %v564
  %911 = vmatpush.msra.mxu0 %v558
  %912 = vmatpush.msra.mxu0 %v552
  %913 = vmatpush.msra.mxu0 %v546
  %914 = vmatpush.msra.mxu0 %v540
  %915 = vmatpush.msra.mxu0 %v534
  %916 = vmatpush.msra.mxu0 %v528
  %917 = vmatmul.f32.gmra.mxu0 %v416
  %v918 = vpop.f32.mrf.mxu0
  %v919 = vadd.f32 %v881, %v918
  %920 = vmatmul.f32.gmra.mxu0 %v418
  %v921 = vpop.f32.mrf.mxu0
  %v922 = vadd.f32 %v884, %v921
  %923 = vmatmul.f32.gmra.mxu0 %v420
  %v924 = vpop.f32.mrf.mxu0
  %v925 = vadd.f32 %v887, %v924
  %926 = vmatmul.f32.gmra.mxu0 %v422
  %v927 = vpop.f32.mrf.mxu0
  %v928 = vadd.f32 %v890, %v927
  %929 = vmatmul.f32.gmra.mxu0 %v424
  %v930 = vpop.f32.mrf.mxu0
  %v931 = vadd.f32 %v893, %v930
  %932 = vmatmul.f32.gmra.mxu0 %v426
  %v933 = vpop.f32.mrf.mxu0
  %v934 = vadd.f32 %v896, %v933
  %935 = vmatmul.f32.gmra.mxu0 %v428
  %v936 = vpop.f32.mrf.mxu0
  %v937 = vadd.f32 %v899, %v936
  %938 = vdwg.mxu0
  %939 = vmatpush.msra.mxu0 %v523
  %940 = vmatpush.msra.mxu0 %v517
  %941 = vmatpush.msra.mxu0 %v511
  %942 = vmatpush.msra.mxu0 %v505
  %943 = vmatpush.msra.mxu0 %v499
  %944 = vmatpush.msra.mxu0 %v493
  %945 = vmatpush.msra.mxu0 %v487
  %946 = vmatpush.msra.mxu0 %v481
  %947 = vmatpush.msra.mxu0 %v475
  %948 = vmatpush.msra.mxu0 %v469
  %949 = vmatpush.msra.mxu0 %v463
  %950 = vmatpush.msra.mxu0 %v457
  %951 = vmatpush.msra.mxu0 %v451
  %952 = vmatpush.msra.mxu0 %v445
  %953 = vmatpush.msra.mxu0 %v439
  %954 = vmatpush.msra.mxu0 %v433
  %955 = vmatmul.f32.gmra.mxu0 %v415
  %v956 = vpop.f32.mrf.mxu0
  %v957 = vadd.f32 %v627, %v956
  %958 = vmatmul.f32.gmra.mxu0 %v417
  %v959 = vpop.f32.mrf.mxu0
  %v960 = vadd.f32 %v627, %v959
  %961 = vmatmul.f32.gmra.mxu0 %v419
  %v962 = vpop.f32.mrf.mxu0
  %v963 = vadd.f32 %v627, %v962
  %964 = vmatmul.f32.gmra.mxu0 %v421
  %v965 = vpop.f32.mrf.mxu0
  %v966 = vadd.f32 %v627, %v965
  %967 = vmatmul.f32.gmra.mxu0 %v423
  %v968 = vpop.f32.mrf.mxu0
  %v969 = vadd.f32 %v627, %v968
  %970 = vmatmul.f32.gmra.mxu0 %v425
  %v971 = vpop.f32.mrf.mxu0
  %v972 = vadd.f32 %v627, %v971
  %973 = vmatmul.f32.gmra.mxu0 %v427
  %v974 = vpop.f32.mrf.mxu0
  %v975 = vadd.f32 %v627, %v974
  %976 = vdwg.mxu0
  %977 = vmatpush.msra.mxu0 %v619
  %978 = vmatpush.msra.mxu0 %v613
  %979 = vmatpush.msra.mxu0 %v607
  %980 = vmatpush.msra.mxu0 %v601
  %981 = vmatpush.msra.mxu0 %v595
  %982 = vmatpush.msra.mxu0 %v589
  %983 = vmatpush.msra.mxu0 %v583
  %984 = vmatpush.msra.mxu0 %v577
  %985 = vmatpush.msra.mxu0 %v571
  %986 = vmatpush.msra.mxu0 %v565
  %987 = vmatpush.msra.mxu0 %v559
  %988 = vmatpush.msra.mxu0 %v553
  %989 = vmatpush.msra.mxu0 %v547
  %990 = vmatpush.msra.mxu0 %v541
  %991 = vmatpush.msra.mxu0 %v535
  %992 = vmatpush.msra.mxu0 %v529
  %993 = vmatmul.f32.gmra.mxu0 %v416
  %v994 = vpop.f32.mrf.mxu0
  %v995 = vadd.f32 %v957, %v994
  %996 = vmatmul.f32.gmra.mxu0 %v418
  %v997 = vpop.f32.mrf.mxu0
  %v998 = vadd.f32 %v960, %v997
  %999 = vmatmul.f32.gmra.mxu0 %v420
  %v1000 = vpop.f32.mrf.mxu0
  %v1001 = vadd.f32 %v963, %v1000
  %1002 = vmatmul.f32.gmra.mxu0 %v422
  %v1003 = vpop.f32.mrf.mxu0
  %v1004 = vadd.f32 %v966, %v1003
  %1005 = vmatmul.f32.gmra.mxu0 %v424
  %v1006 = vpop.f32.mrf.mxu0
  %v1007 = vadd.f32 %v969, %v1006
  %1008 = vmatmul.f32.gmra.mxu0 %v426
  %v1009 = vpop.f32.mrf.mxu0
  %v1010 = vadd.f32 %v972, %v1009
  %1011 = vmatmul.f32.gmra.mxu0 %v428
  %v1012 = vpop.f32.mrf.mxu0
  %v1013 = vadd.f32 %v975, %v1012
  %1014 = vdwg.mxu0
  %1015 = vmatpush.msra.mxu0 %v524
  %1016 = vmatpush.msra.mxu0 %v518
  %1017 = vmatpush.msra.mxu0 %v512
  %1018 = vmatpush.msra.mxu0 %v506
  %1019 = vmatpush.msra.mxu0 %v500
  %1020 = vmatpush.msra.mxu0 %v494
  %1021 = vmatpush.msra.mxu0 %v488
  %1022 = vmatpush.msra.mxu0 %v482
  %1023 = vmatpush.msra.mxu0 %v476
  %1024 = vmatpush.msra.mxu0 %v470
  %1025 = vmatpush.msra.mxu0 %v464
  %1026 = vmatpush.msra.mxu0 %v458
  %1027 = vmatpush.msra.mxu0 %v452
  %1028 = vmatpush.msra.mxu0 %v446
  %1029 = vmatpush.msra.mxu0 %v440
  %1030 = vmatpush.msra.mxu0 %v434
  %1031 = vmatmul.f32.gmra.mxu0 %v415
  %v1032 = vpop.f32.mrf.mxu0
  %v1033 = vadd.f32 %v628, %v1032
  %1034 = vmatmul.f32.gmra.mxu0 %v417
  %v1035 = vpop.f32.mrf.mxu0
  %v1036 = vadd.f32 %v628, %v1035
  %1037 = vmatmul.f32.gmra.mxu0 %v419
  %v1038 = vpop.f32.mrf.mxu0
  %v1039 = vadd.f32 %v628, %v1038
  %1040 = vmatmul.f32.gmra.mxu0 %v421
  %v1041 = vpop.f32.mrf.mxu0
  %v1042 = vadd.f32 %v628, %v1041
  %1043 = vmatmul.f32.gmra.mxu0 %v423
  %v1044 = vpop.f32.mrf.mxu0
  %v1045 = vadd.f32 %v628, %v1044
  %1046 = vmatmul.f32.gmra.mxu0 %v425
  %v1047 = vpop.f32.mrf.mxu0
  %v1048 = vadd.f32 %v628, %v1047
  %1049 = vmatmul.f32.gmra.mxu0 %v427
  %v1050 = vpop.f32.mrf.mxu0
  %v1051 = vadd.f32 %v628, %v1050
  %1052 = vdwg.mxu0
  %1053 = vmatpush.msra.mxu0 %v620
  %1054 = vmatpush.msra.mxu0 %v614
  %1055 = vmatpush.msra.mxu0 %v608
  %1056 = vmatpush.msra.mxu0 %v602
  %1057 = vmatpush.msra.mxu0 %v596
  %1058 = vmatpush.msra.mxu0 %v590
  %1059 = vmatpush.msra.mxu0 %v584
  %1060 = vmatpush.msra.mxu0 %v578
  %1061 = vmatpush.msra.mxu0 %v572
  %1062 = vmatpush.msra.mxu0 %v566
  %1063 = vmatpush.msra.mxu0 %v560
  %1064 = vmatpush.msra.mxu0 %v554
  %1065 = vmatpush.msra.mxu0 %v548
  %1066 = vmatpush.msra.mxu0 %v542
  %1067 = vmatpush.msra.mxu0 %v536
  %1068 = vmatpush.msra.mxu0 %v530
  %1069 = vmatmul.f32.gmra.mxu0 %v416
  %v1070 = vpop.f32.mrf.mxu0
  %v1071 = vadd.f32 %v1033, %v1070
  %1072 = vmatmul.f32.gmra.mxu0 %v418
  %v1073 = vpop.f32.mrf.mxu0
  %v1074 = vadd.f32 %v1036, %v1073
  %1075 = vmatmul.f32.gmra.mxu0 %v420
  %v1076 = vpop.f32.mrf.mxu0
  %v1077 = vadd.f32 %v1039, %v1076
  %1078 = vmatmul.f32.gmra.mxu0 %v422
  %v1079 = vpop.f32.mrf.mxu0
  %v1080 = vadd.f32 %v1042, %v1079
  %1081 = vmatmul.f32.gmra.mxu0 %v424
  %v1082 = vpop.f32.mrf.mxu0
  %v1083 = vadd.f32 %v1045, %v1082
  %1084 = vmatmul.f32.gmra.mxu0 %v426
  %v1085 = vpop.f32.mrf.mxu0
  %v1086 = vadd.f32 %v1048, %v1085
  %1087 = vmatmul.f32.gmra.mxu0 %v428
  %v1088 = vpop.f32.mrf.mxu0
  %v1089 = vadd.f32 %v1051, %v1088
  %1090 = vdwg.mxu0
  %v1091 = vld [vmem:[%s2] sm:$0xff]
  %v1092 = vld [vmem:[%s9] sm:$0xff]
  %v1093 = vld [vmem:[%s9 + $0x8] sm:$0xff]
  %v1094 = vld [vmem:[%s9 + $0x10] sm:$0xff]
  %v1095 = vld [vmem:[%s9 + $0x18] sm:$0xff]
  %v1096 = vld [vmem:[%s9 + $0x20] sm:$0xff]
  %v1097 = vld [vmem:[%s9 + $0x28] sm:$0xff]
  %v1098 = vld [vmem:[%s9 + $0x30] sm:$0xff]
  %v1099 = vld [vmem:[%s9 + $0x38] sm:$0xff]
  %v1100 = vld [vmem:[%s9 + $0x40] sm:$0xff]
  %v1101 = vld [vmem:[%s9 + $0x48] sm:$0xff]
  %v1102 = vld [vmem:[%s9 + $0x50] sm:$0xff]
  %v1103 = vld [vmem:[%s9 + $0x58] sm:$0xff]
  %v1104 = vld [vmem:[%s9 + $0x60] sm:$0xff]
  %v1105 = vld [vmem:[%s9 + $0x68] sm:$0xff]
  %v1106 = vld [vmem:[%s9 + $0x70] sm:$0xff]
  %v1107 = vld [vmem:[%s9 + $0x78] sm:$0xff]
  %v1108 = vld [vmem:[%s9 + $0x80] sm:$0xff]
  %v1109 = vld [vmem:[%s9 + $0x88] sm:$0xff]
  %v1110 = vld [vmem:[%s9 + $0x90] sm:$0xff]
  %v1111 = vld [vmem:[%s9 + $0x98] sm:$0xff]
  %v1112 = vld [vmem:[%s9 + $0xa0] sm:$0xff]
  %v1113 = vld [vmem:[%s9 + $0xa8] sm:$0xff]
  %v1114 = vld [vmem:[%s9 + $0xb0] sm:$0xff]
  %v1115 = vld [vmem:[%s9 + $0xb8] sm:$0xff]
  %v1116 = vld [vmem:[%s9 + $0xc0] sm:$0xff]
  %v1117 = vld [vmem:[%s9 + $0xc8] sm:$0xff]
  %v1118 = vld [vmem:[%s9 + $0xd0] sm:$0xff]
  %v1119 = vld [vmem:[%s9 + $0xd8] sm:$0xff]
  %v1120 = vld [vmem:[%s9 + $0xe0] sm:$0xff]
  %v1121 = vld [vmem:[%s9 + $0xe8] sm:$0xff]
  %v1122 = vld [vmem:[%s9 + $0xf0] sm:$0xff]
  %v1123 = vld [vmem:[%s9 + $0xf8] sm:$0xff]
  %v1124 = vld [vmem:[%s9 + $0x100] sm:$0xff]
  %v1125 = vld [vmem:[%s9 + $0x108] sm:$0xff]
  %v1126 = vld [vmem:[%s9 + $0x110] sm:$0xff]
  %v1127 = vld [vmem:[%s9 + $0x118] sm:$0xff]
  %v1128 = vld [vmem:[%s9 + $0x120] sm:$0xff]
  %v1129 = vld [vmem:[%s9 + $0x128] sm:$0xff]
  %v1130 = vld [vmem:[%s9 + $0x130] sm:$0xff]
  %v1131 = vld [vmem:[%s9 + $0x138] sm:$0xff]
  %v1132 = vld [vmem:[%s9 + $0x140] sm:$0xff]
  %v1133 = vld [vmem:[%s9 + $0x148] sm:$0xff]
  %v1134 = vld [vmem:[%s9 + $0x150] sm:$0xff]
  %v1135 = vld [vmem:[%s9 + $0x158] sm:$0xff]
  %v1136 = vld [vmem:[%s9 + $0x160] sm:$0xff]
  %v1137 = vld [vmem:[%s9 + $0x168] sm:$0xff]
  %v1138 = vld [vmem:[%s9 + $0x170] sm:$0xff]
  %v1139 = vld [vmem:[%s9 + $0x178] sm:$0xff]
  %v1140 = vld [vmem:[%s10] sm:$0x7]
  %v1142 = vperm.slane %v1140, 0
  %v1143 = vperm.slane %v1140, 1
  %v1144 = vperm.slane %v1140, 2
  %1148 = vmatpush.msra.mxu0 %v1137
  %1149 = vmatpush.msra.mxu0 %v1134
  %1150 = vmatpush.msra.mxu0 %v1131
  %1151 = vmatpush.msra.mxu0 %v1128
  %1152 = vmatpush.msra.mxu0 %v1125
  %1153 = vmatpush.msra.mxu0 %v1122
  %1154 = vmatpush.msra.mxu0 %v1119
  %1155 = vmatpush.msra.mxu0 %v1116
  %1156 = vmatpush.msra.mxu0 %v1113
  %1157 = vmatpush.msra.mxu0 %v1110
  %1158 = vmatpush.msra.mxu0 %v1107
  %1159 = vmatpush.msra.mxu0 %v1104
  %1160 = vmatpush.msra.mxu0 %v1101
  %1161 = vmatpush.msra.mxu0 %v1098
  %1162 = vmatpush.msra.mxu0 %v1095
  %1163 = vmatpush.msra.mxu0 %v1092
  %1164 = vmatmul.f32.gmra.mxu0 %v1091
  %v1165 = vpop.f32.mrf.mxu0
  %v1166 = vadd.f32 %v1142, %v1165
  %1167 = vdwg.mxu0
  %1168 = vmatpush.msra.mxu0 %v1138
  %1169 = vmatpush.msra.mxu0 %v1135
  %1170 = vmatpush.msra.mxu0 %v1132
  %1171 = vmatpush.msra.mxu0 %v1129
  %1172 = vmatpush.msra.mxu0 %v1126
  %1173 = vmatpush.msra.mxu0 %v1123
  %1174 = vmatpush.msra.mxu0 %v1120
  %1175 = vmatpush.msra.mxu0 %v1117
  %1176 = vmatpush.msra.mxu0 %v1114
  %1177 = vmatpush.msra.mxu0 %v1111
  %1178 = vmatpush.msra.mxu0 %v1108
  %1179 = vmatpush.msra.mxu0 %v1105
  %1180 = vmatpush.msra.mxu0 %v1102
  %1181 = vmatpush.msra.mxu0 %v1099
  %1182 = vmatpush.msra.mxu0 %v1096
  %1183 = vmatpush.msra.mxu0 %v1093
  %1184 = vmatmul.f32.gmra.mxu0 %v1091
  %v1185 = vpop.f32.mrf.mxu0
  %v1186 = vadd.f32 %v1143, %v1185
  %1187 = vdwg.mxu0
  %1188 = vmatpush.msra.mxu0 %v1139
  %1189 = vmatpush.msra.mxu0 %v1136
  %1190 = vmatpush.msra.mxu0 %v1133
  %1191 = vmatpush.msra.mxu0 %v1130
  %1192 = vmatpush.msra.mxu0 %v1127
  %1193 = vmatpush.msra.mxu0 %v1124
  %1194 = vmatpush.msra.mxu0 %v1121
  %1195 = vmatpush.msra.mxu0 %v1118
  %1196 = vmatpush.msra.mxu0 %v1115
  %1197 = vmatpush.msra.mxu0 %v1112
  %1198 = vmatpush.msra.mxu0 %v1109
  %1199 = vmatpush.msra.mxu0 %v1106
  %1200 = vmatpush.msra.mxu0 %v1103
  %1201 = vmatpush.msra.mxu0 %v1100
  %1202 = vmatpush.msra.mxu0 %v1097
  %1203 = vmatpush.msra.mxu0 %v1094
  %1204 = vmatmul.f32.gmra.mxu0 %v1091
  %v1205 = vpop.f32.mrf.mxu0
  %v1206 = vadd.f32 %v1144, %v1205
  %1207 = vdwg.mxu0
  %v1208 = vadd.f32 %v691, %v1166
  %v1209 = vmul.f32 %v1208, 0.5
  %v1210 = vtanh.pop %v1209
  %v1211 = vadd.f32 %v1210, 1.0
  %v1212 = vmul.f32 %v1211, 0.5
  %v1213 = vadd.f32 %v767, %v1186
  %v1214 = vmul.f32 %v1213, 0.5
  %v1215 = vtanh.pop %v1214
  %v1216 = vadd.f32 %v1215, 1.0
  %v1217 = vmul.f32 %v1216, 0.5
  %v1218 = vmul.f32 %v1212, %v1206
  %v1219 = vadd.f32 %v843, %v1218
  %v1220 = vtanh.pop %v1219
  %v1221 = vsub.f32 %v1091, %v1220
  %v1222 = vmul.f32 %v1217, %v1221
  %v1223 = vadd.f32 %v1220, %v1222
  %1224 = vmatpush.msra.mxu0 %v1137
  %1225 = vmatpush.msra.mxu0 %v1134
  %1226 = vmatpush.msra.mxu0 %v1131
  %1227 = vmatpush.msra.mxu0 %v1128
  %1228 = vmatpush.msra.mxu0 %v1125
  %1229 = vmatpush.msra.mxu0 %v1122
  %1230 = vmatpush.msra.mxu0 %v1119
  %1231 = vmatpush.msra.mxu0 %v1116
  %1232 = vmatpush.msra.mxu0 %v1113
  %1233 = vmatpush.msra.mxu0 %v1110
  %1234 = vmatpush.msra.mxu0 %v1107
  %1235 = vmatpush.msra.mxu0 %v1104
  %1236 = vmatpush.msra.mxu0 %v1101
  %1237 = vmatpush.msra.mxu0 %v1098
  %1238 = vmatpush.msra.mxu0 %v1095
  %1239 = vmatpush.msra.mxu0 %v1092
  %1240 = vmatmul.f32.gmra.mxu0 %v1223
  %v1241 = vpop.f32.mrf.mxu0
  %v1242 = vadd.f32 %v1142, %v1241
  %1243 = vdwg.mxu0
  %1244 = vmatpush.msra.mxu0 %v1138
  %1245 = vmatpush.msra.mxu0 %v1135
  %1246 = vmatpush.msra.mxu0 %v1132
  %1247 = vmatpush.msra.mxu0 %v1129
  %1248 = vmatpush.msra.mxu0 %v1126
  %1249 = vmatpush.msra.mxu0 %v1123
  %1250 = vmatpush.msra.mxu0 %v1120
  %1251 = vmatpush.msra.mxu0 %v1117
  %1252 = vmatpush.msra.mxu0 %v1114
  %1253 = vmatpush.msra.mxu0 %v1111
  %1254 = vmatpush.msra.mxu0 %v1108
  %1255 = vmatpush.msra.mxu0 %v1105
  %1256 = vmatpush.msra.mxu0 %v1102
  %1257 = vmatpush.msra.mxu0 %v1099
  %1258 = vmatpush.msra.mxu0 %v1096
  %1259 = vmatpush.msra.mxu0 %v1093
  %1260 = vmatmul.f32.gmra.mxu0 %v1223
  %v1261 = vpop.f32.mrf.mxu0
  %v1262 = vadd.f32 %v1143, %v1261
  %1263 = vdwg.mxu0
  %1264 = vmatpush.msra.mxu0 %v1139
  %1265 = vmatpush.msra.mxu0 %v1136
  %1266 = vmatpush.msra.mxu0 %v1133
  %1267 = vmatpush.msra.mxu0 %v1130
  %1268 = vmatpush.msra.mxu0 %v1127
  %1269 = vmatpush.msra.mxu0 %v1124
  %1270 = vmatpush.msra.mxu0 %v1121
  %1271 = vmatpush.msra.mxu0 %v1118
  %1272 = vmatpush.msra.mxu0 %v1115
  %1273 = vmatpush.msra.mxu0 %v1112
  %1274 = vmatpush.msra.mxu0 %v1109
  %1275 = vmatpush.msra.mxu0 %v1106
  %1276 = vmatpush.msra.mxu0 %v1103
  %1277 = vmatpush.msra.mxu0 %v1100
  %1278 = vmatpush.msra.mxu0 %v1097
  %1279 = vmatpush.msra.mxu0 %v1094
  %1280 = vmatmul.f32.gmra.mxu0 %v1223
  %v1281 = vpop.f32.mrf.mxu0
  %v1282 = vadd.f32 %v1144, %v1281
  %1283 = vdwg.mxu0
  %v1284 = vadd.f32 %v694, %v1242
  %v1285 = vmul.f32 %v1284, 0.5
  %v1286 = vtanh.pop %v1285
  %v1287 = vadd.f32 %v1286, 1.0
  %v1288 = vmul.f32 %v1287, 0.5
  %v1289 = vadd.f32 %v770, %v1262
  %v1290 = vmul.f32 %v1289, 0.5
  %v1291 = vtanh.pop %v1290
  %v1292 = vadd.f32 %v1291, 1.0
  %v1293 = vmul.f32 %v1292, 0.5
  %v1294 = vmul.f32 %v1288, %v1282
  %v1295 = vadd.f32 %v846, %v1294
  %v1296 = vtanh.pop %v1295
  %v1297 = vsub.f32 %v1223, %v1296
  %v1298 = vmul.f32 %v1293, %v1297
  %v1299 = vadd.f32 %v1296, %v1298
  %1300 = vmatpush.msra.mxu0 %v1137
  %1301 = vmatpush.msra.mxu0 %v1134
  %1302 = vmatpush.msra.mxu0 %v1131
  %1303 = vmatpush.msra.mxu0 %v1128
  %1304 = vmatpush.msra.mxu0 %v1125
  %1305 = vmatpush.msra.mxu0 %v1122
  %1306 = vmatpush.msra.mxu0 %v1119
  %1307 = vmatpush.msra.mxu0 %v1116
  %1308 = vmatpush.msra.mxu0 %v1113
  %1309 = vmatpush.msra.mxu0 %v1110
  %1310 = vmatpush.msra.mxu0 %v1107
  %1311 = vmatpush.msra.mxu0 %v1104
  %1312 = vmatpush.msra.mxu0 %v1101
  %1313 = vmatpush.msra.mxu0 %v1098
  %1314 = vmatpush.msra.mxu0 %v1095
  %1315 = vmatpush.msra.mxu0 %v1092
  %1316 = vmatmul.f32.gmra.mxu0 %v1299
  %v1317 = vpop.f32.mrf.mxu0
  %v1318 = vadd.f32 %v1142, %v1317
  %1319 = vdwg.mxu0
  %1320 = vmatpush.msra.mxu0 %v1138
  %1321 = vmatpush.msra.mxu0 %v1135
  %1322 = vmatpush.msra.mxu0 %v1132
  %1323 = vmatpush.msra.mxu0 %v1129
  %1324 = vmatpush.msra.mxu0 %v1126
  %1325 = vmatpush.msra.mxu0 %v1123
  %1326 = vmatpush.msra.mxu0 %v1120
  %1327 = vmatpush.msra.mxu0 %v1117
  %1328 = vmatpush.msra.mxu0 %v1114
  %1329 = vmatpush.msra.mxu0 %v1111
  %1330 = vmatpush.msra.mxu0 %v1108
  %1331 = vmatpush.msra.mxu0 %v1105
  %1332 = vmatpush.msra.mxu0 %v1102
  %1333 = vmatpush.msra.mxu0 %v1099
  %1334 = vmatpush.msra.mxu0 %v1096
  %1335 = vmatpush.msra.mxu0 %v1093
  %1336 = vmatmul.f32.gmra.mxu0 %v1299
  %v1337 = vpop.f32.mrf.mxu0
  %v1338 = vadd.f32 %v1143, %v1337
  %1339 = vdwg.mxu0
  %1340 = vmatpush.msra.mxu0 %v1139
  %1341 = vmatpush.msra.mxu0 %v1136
  %1342 = vmatpush.msra.mxu0 %v1133
  %1343 = vmatpush.msra.mxu0 %v1130
  %1344 = vmatpush.msra.mxu0 %v1127
  %1345 = vmatpush.msra.mxu0 %v1124
  %1346 = vmatpush.msra.mxu0 %v1121
  %1347 = vmatpush.msra.mxu0 %v1118
  %1348 = vmatpush.msra.mxu0 %v1115
  %1349 = vmatpush.msra.mxu0 %v1112
  %1350 = vmatpush.msra.mxu0 %v1109
  %1351 = vmatpush.msra.mxu0 %v1106
  %1352 = vmatpush.msra.mxu0 %v1103
  %1353 = vmatpush.msra.mxu0 %v1100
  %1354 = vmatpush.msra.mxu0 %v1097
  %1355 = vmatpush.msra.mxu0 %v1094
  %1356 = vmatmul.f32.gmra.mxu0 %v1299
  %v1357 = vpop.f32.mrf.mxu0
  %v1358 = vadd.f32 %v1144, %v1357
  %1359 = vdwg.mxu0
  %v1360 = vadd.f32 %v697, %v1318
  %v1361 = vmul.f32 %v1360, 0.5
  %v1362 = vtanh.pop %v1361
  %v1363 = vadd.f32 %v1362, 1.0
  %v1364 = vmul.f32 %v1363, 0.5
  %v1365 = vadd.f32 %v773, %v1338
  %v1366 = vmul.f32 %v1365, 0.5
  %v1367 = vtanh.pop %v1366
  %v1368 = vadd.f32 %v1367, 1.0
  %v1369 = vmul.f32 %v1368, 0.5
  %v1370 = vmul.f32 %v1364, %v1358
  %v1371 = vadd.f32 %v849, %v1370
  %v1372 = vtanh.pop %v1371
  %v1373 = vsub.f32 %v1299, %v1372
  %v1374 = vmul.f32 %v1369, %v1373
  %v1375 = vadd.f32 %v1372, %v1374
  %1376 = vmatpush.msra.mxu0 %v1137
  %1377 = vmatpush.msra.mxu0 %v1134
  %1378 = vmatpush.msra.mxu0 %v1131
  %1379 = vmatpush.msra.mxu0 %v1128
  %1380 = vmatpush.msra.mxu0 %v1125
  %1381 = vmatpush.msra.mxu0 %v1122
  %1382 = vmatpush.msra.mxu0 %v1119
  %1383 = vmatpush.msra.mxu0 %v1116
  %1384 = vmatpush.msra.mxu0 %v1113
  %1385 = vmatpush.msra.mxu0 %v1110
  %1386 = vmatpush.msra.mxu0 %v1107
  %1387 = vmatpush.msra.mxu0 %v1104
  %1388 = vmatpush.msra.mxu0 %v1101
  %1389 = vmatpush.msra.mxu0 %v1098
  %1390 = vmatpush.msra.mxu0 %v1095
  %1391 = vmatpush.msra.mxu0 %v1092
  %1392 = vmatmul.f32.gmra.mxu0 %v1375
  %v1393 = vpop.f32.mrf.mxu0
  %v1394 = vadd.f32 %v1142, %v1393
  %1395 = vdwg.mxu0
  %1396 = vmatpush.msra.mxu0 %v1138
  %1397 = vmatpush.msra.mxu0 %v1135
  %1398 = vmatpush.msra.mxu0 %v1132
  %1399 = vmatpush.msra.mxu0 %v1129
  %1400 = vmatpush.msra.mxu0 %v1126
  %1401 = vmatpush.msra.mxu0 %v1123
  %1402 = vmatpush.msra.mxu0 %v1120
  %1403 = vmatpush.msra.mxu0 %v1117
  %1404 = vmatpush.msra.mxu0 %v1114
  %1405 = vmatpush.msra.mxu0 %v1111
  %1406 = vmatpush.msra.mxu0 %v1108
  %1407 = vmatpush.msra.mxu0 %v1105
  %1408 = vmatpush.msra.mxu0 %v1102
  %1409 = vmatpush.msra.mxu0 %v1099
  %1410 = vmatpush.msra.mxu0 %v1096
  %1411 = vmatpush.msra.mxu0 %v1093
  %1412 = vmatmul.f32.gmra.mxu0 %v1375
  %v1413 = vpop.f32.mrf.mxu0
  %v1414 = vadd.f32 %v1143, %v1413
  %1415 = vdwg.mxu0
  %1416 = vmatpush.msra.mxu0 %v1139
  %1417 = vmatpush.msra.mxu0 %v1136
  %1418 = vmatpush.msra.mxu0 %v1133
  %1419 = vmatpush.msra.mxu0 %v1130
  %1420 = vmatpush.msra.mxu0 %v1127
  %1421 = vmatpush.msra.mxu0 %v1124
  %1422 = vmatpush.msra.mxu0 %v1121
  %1423 = vmatpush.msra.mxu0 %v1118
  %1424 = vmatpush.msra.mxu0 %v1115
  %1425 = vmatpush.msra.mxu0 %v1112
  %1426 = vmatpush.msra.mxu0 %v1109
  %1427 = vmatpush.msra.mxu0 %v1106
  %1428 = vmatpush.msra.mxu0 %v1103
  %1429 = vmatpush.msra.mxu0 %v1100
  %1430 = vmatpush.msra.mxu0 %v1097
  %1431 = vmatpush.msra.mxu0 %v1094
  %1432 = vmatmul.f32.gmra.mxu0 %v1375
  %v1433 = vpop.f32.mrf.mxu0
  %v1434 = vadd.f32 %v1144, %v1433
  %1435 = vdwg.mxu0
  %v1436 = vadd.f32 %v700, %v1394
  %v1437 = vmul.f32 %v1436, 0.5
  %v1438 = vtanh.pop %v1437
  %v1439 = vadd.f32 %v1438, 1.0
  %v1440 = vmul.f32 %v1439, 0.5
  %v1441 = vadd.f32 %v776, %v1414
  %v1442 = vmul.f32 %v1441, 0.5
  %v1443 = vtanh.pop %v1442
  %v1444 = vadd.f32 %v1443, 1.0
  %v1445 = vmul.f32 %v1444, 0.5
  %v1446 = vmul.f32 %v1440, %v1434
  %v1447 = vadd.f32 %v852, %v1446
  %v1448 = vtanh.pop %v1447
  %v1449 = vsub.f32 %v1375, %v1448
  %v1450 = vmul.f32 %v1445, %v1449
  %v1451 = vadd.f32 %v1448, %v1450
  %1452 = vmatpush.msra.mxu0 %v1137
  %1453 = vmatpush.msra.mxu0 %v1134
  %1454 = vmatpush.msra.mxu0 %v1131
  %1455 = vmatpush.msra.mxu0 %v1128
  %1456 = vmatpush.msra.mxu0 %v1125
  %1457 = vmatpush.msra.mxu0 %v1122
  %1458 = vmatpush.msra.mxu0 %v1119
  %1459 = vmatpush.msra.mxu0 %v1116
  %1460 = vmatpush.msra.mxu0 %v1113
  %1461 = vmatpush.msra.mxu0 %v1110
  %1462 = vmatpush.msra.mxu0 %v1107
  %1463 = vmatpush.msra.mxu0 %v1104
  %1464 = vmatpush.msra.mxu0 %v1101
  %1465 = vmatpush.msra.mxu0 %v1098
  %1466 = vmatpush.msra.mxu0 %v1095
  %1467 = vmatpush.msra.mxu0 %v1092
  %1468 = vmatmul.f32.gmra.mxu0 %v1451
  %v1469 = vpop.f32.mrf.mxu0
  %v1470 = vadd.f32 %v1142, %v1469
  %1471 = vdwg.mxu0
  %1472 = vmatpush.msra.mxu0 %v1138
  %1473 = vmatpush.msra.mxu0 %v1135
  %1474 = vmatpush.msra.mxu0 %v1132
  %1475 = vmatpush.msra.mxu0 %v1129
  %1476 = vmatpush.msra.mxu0 %v1126
  %1477 = vmatpush.msra.mxu0 %v1123
  %1478 = vmatpush.msra.mxu0 %v1120
  %1479 = vmatpush.msra.mxu0 %v1117
  %1480 = vmatpush.msra.mxu0 %v1114
  %1481 = vmatpush.msra.mxu0 %v1111
  %1482 = vmatpush.msra.mxu0 %v1108
  %1483 = vmatpush.msra.mxu0 %v1105
  %1484 = vmatpush.msra.mxu0 %v1102
  %1485 = vmatpush.msra.mxu0 %v1099
  %1486 = vmatpush.msra.mxu0 %v1096
  %1487 = vmatpush.msra.mxu0 %v1093
  %1488 = vmatmul.f32.gmra.mxu0 %v1451
  %v1489 = vpop.f32.mrf.mxu0
  %v1490 = vadd.f32 %v1143, %v1489
  %1491 = vdwg.mxu0
  %1492 = vmatpush.msra.mxu0 %v1139
  %1493 = vmatpush.msra.mxu0 %v1136
  %1494 = vmatpush.msra.mxu0 %v1133
  %1495 = vmatpush.msra.mxu0 %v1130
  %1496 = vmatpush.msra.mxu0 %v1127
  %1497 = vmatpush.msra.mxu0 %v1124
  %1498 = vmatpush.msra.mxu0 %v1121
  %1499 = vmatpush.msra.mxu0 %v1118
  %1500 = vmatpush.msra.mxu0 %v1115
  %1501 = vmatpush.msra.mxu0 %v1112
  %1502 = vmatpush.msra.mxu0 %v1109
  %1503 = vmatpush.msra.mxu0 %v1106
  %1504 = vmatpush.msra.mxu0 %v1103
  %1505 = vmatpush.msra.mxu0 %v1100
  %1506 = vmatpush.msra.mxu0 %v1097
  %1507 = vmatpush.msra.mxu0 %v1094
  %1508 = vmatmul.f32.gmra.mxu0 %v1451
  %v1509 = vpop.f32.mrf.mxu0
  %v1510 = vadd.f32 %v1144, %v1509
  %1511 = vdwg.mxu0
  %v1512 = vadd.f32 %v703, %v1470
  %v1513 = vmul.f32 %v1512, 0.5
  %v1514 = vtanh.pop %v1513
  %v1515 = vadd.f32 %v1514, 1.0
  %v1516 = vmul.f32 %v1515, 0.5
  %v1517 = vadd.f32 %v779, %v1490
  %v1518 = vmul.f32 %v1517, 0.5
  %v1519 = vtanh.pop %v1518
  %v1520 = vadd.f32 %v1519, 1.0
  %v1521 = vmul.f32 %v1520, 0.5
  %v1522 = vmul.f32 %v1516, %v1510
  %v1523 = vadd.f32 %v855, %v1522
  %v1524 = vtanh.pop %v1523
  %v1525 = vsub.f32 %v1451, %v1524
  %v1526 = vmul.f32 %v1521, %v1525
  %v1527 = vadd.f32 %v1524, %v1526
  %1528 = vmatpush.msra.mxu0 %v1137
  %1529 = vmatpush.msra.mxu0 %v1134
  %1530 = vmatpush.msra.mxu0 %v1131
  %1531 = vmatpush.msra.mxu0 %v1128
  %1532 = vmatpush.msra.mxu0 %v1125
  %1533 = vmatpush.msra.mxu0 %v1122
  %1534 = vmatpush.msra.mxu0 %v1119
  %1535 = vmatpush.msra.mxu0 %v1116
  %1536 = vmatpush.msra.mxu0 %v1113
  %1537 = vmatpush.msra.mxu0 %v1110
  %1538 = vmatpush.msra.mxu0 %v1107
  %1539 = vmatpush.msra.mxu0 %v1104
  %1540 = vmatpush.msra.mxu0 %v1101
  %1541 = vmatpush.msra.mxu0 %v1098
  %1542 = vmatpush.msra.mxu0 %v1095
  %1543 = vmatpush.msra.mxu0 %v1092
  %1544 = vmatmul.f32.gmra.mxu0 %v1527
  %v1545 = vpop.f32.mrf.mxu0
  %v1546 = vadd.f32 %v1142, %v1545
  %1547 = vdwg.mxu0
  %1548 = vmatpush.msra.mxu0 %v1138
  %1549 = vmatpush.msra.mxu0 %v1135
  %1550 = vmatpush.msra.mxu0 %v1132
  %1551 = vmatpush.msra.mxu0 %v1129
  %1552 = vmatpush.msra.mxu0 %v1126
  %1553 = vmatpush.msra.mxu0 %v1123
  %1554 = vmatpush.msra.mxu0 %v1120
  %1555 = vmatpush.msra.mxu0 %v1117
  %1556 = vmatpush.msra.mxu0 %v1114
  %1557 = vmatpush.msra.mxu0 %v1111
  %1558 = vmatpush.msra.mxu0 %v1108
  %1559 = vmatpush.msra.mxu0 %v1105
  %1560 = vmatpush.msra.mxu0 %v1102
  %1561 = vmatpush.msra.mxu0 %v1099
  %1562 = vmatpush.msra.mxu0 %v1096
  %1563 = vmatpush.msra.mxu0 %v1093
  %1564 = vmatmul.f32.gmra.mxu0 %v1527
  %v1565 = vpop.f32.mrf.mxu0
  %v1566 = vadd.f32 %v1143, %v1565
  %1567 = vdwg.mxu0
  %1568 = vmatpush.msra.mxu0 %v1139
  %1569 = vmatpush.msra.mxu0 %v1136
  %1570 = vmatpush.msra.mxu0 %v1133
  %1571 = vmatpush.msra.mxu0 %v1130
  %1572 = vmatpush.msra.mxu0 %v1127
  %1573 = vmatpush.msra.mxu0 %v1124
  %1574 = vmatpush.msra.mxu0 %v1121
  %1575 = vmatpush.msra.mxu0 %v1118
  %1576 = vmatpush.msra.mxu0 %v1115
  %1577 = vmatpush.msra.mxu0 %v1112
  %1578 = vmatpush.msra.mxu0 %v1109
  %1579 = vmatpush.msra.mxu0 %v1106
  %1580 = vmatpush.msra.mxu0 %v1103
  %1581 = vmatpush.msra.mxu0 %v1100
  %1582 = vmatpush.msra.mxu0 %v1097
  %1583 = vmatpush.msra.mxu0 %v1094
  %1584 = vmatmul.f32.gmra.mxu0 %v1527
  %v1585 = vpop.f32.mrf.mxu0
  %v1586 = vadd.f32 %v1144, %v1585
  %1587 = vdwg.mxu0
  %v1588 = vadd.f32 %v706, %v1546
  %v1589 = vmul.f32 %v1588, 0.5
  %v1590 = vtanh.pop %v1589
  %v1591 = vadd.f32 %v1590, 1.0
  %v1592 = vmul.f32 %v1591, 0.5
  %v1593 = vadd.f32 %v782, %v1566
  %v1594 = vmul.f32 %v1593, 0.5
  %v1595 = vtanh.pop %v1594
  %v1596 = vadd.f32 %v1595, 1.0
  %v1597 = vmul.f32 %v1596, 0.5
  %v1598 = vmul.f32 %v1592, %v1586
  %v1599 = vadd.f32 %v858, %v1598
  %v1600 = vtanh.pop %v1599
  %v1601 = vsub.f32 %v1527, %v1600
  %v1602 = vmul.f32 %v1597, %v1601
  %v1603 = vadd.f32 %v1600, %v1602
  %1604 = vmatpush.msra.mxu0 %v1137
  %1605 = vmatpush.msra.mxu0 %v1134
  %1606 = vmatpush.msra.mxu0 %v1131
  %1607 = vmatpush.msra.mxu0 %v1128
  %1608 = vmatpush.msra.mxu0 %v1125
  %1609 = vmatpush.msra.mxu0 %v1122
  %1610 = vmatpush.msra.mxu0 %v1119
  %1611 = vmatpush.msra.mxu0 %v1116
  %1612 = vmatpush.msra.mxu0 %v1113
  %1613 = vmatpush.msra.mxu0 %v1110
  %1614 = vmatpush.msra.mxu0 %v1107
  %1615 = vmatpush.msra.mxu0 %v1104
  %1616 = vmatpush.msra.mxu0 %v1101
  %1617 = vmatpush.msra.mxu0 %v1098
  %1618 = vmatpush.msra.mxu0 %v1095
  %1619 = vmatpush.msra.mxu0 %v1092
  %1620 = vmatmul.f32.gmra.mxu0 %v1603
  %v1621 = vpop.f32.mrf.mxu0
  %v1622 = vadd.f32 %v1142, %v1621
  %1623 = vdwg.mxu0
  %1624 = vmatpush.msra.mxu0 %v1138
  %1625 = vmatpush.msra.mxu0 %v1135
  %1626 = vmatpush.msra.mxu0 %v1132
  %1627 = vmatpush.msra.mxu0 %v1129
  %1628 = vmatpush.msra.mxu0 %v1126
  %1629 = vmatpush.msra.mxu0 %v1123
  %1630 = vmatpush.msra.mxu0 %v1120
  %1631 = vmatpush.msra.mxu0 %v1117
  %1632 = vmatpush.msra.mxu0 %v1114
  %1633 = vmatpush.msra.mxu0 %v1111
  %1634 = vmatpush.msra.mxu0 %v1108
  %1635 = vmatpush.msra.mxu0 %v1105
  %1636 = vmatpush.msra.mxu0 %v1102
  %1637 = vmatpush.msra.mxu0 %v1099
  %1638 = vmatpush.msra.mxu0 %v1096
  %1639 = vmatpush.msra.mxu0 %v1093
  %1640 = vmatmul.f32.gmra.mxu0 %v1603
  %v1641 = vpop.f32.mrf.mxu0
  %v1642 = vadd.f32 %v1143, %v1641
  %1643 = vdwg.mxu0
  %1644 = vmatpush.msra.mxu0 %v1139
  %1645 = vmatpush.msra.mxu0 %v1136
  %1646 = vmatpush.msra.mxu0 %v1133
  %1647 = vmatpush.msra.mxu0 %v1130
  %1648 = vmatpush.msra.mxu0 %v1127
  %1649 = vmatpush.msra.mxu0 %v1124
  %1650 = vmatpush.msra.mxu0 %v1121
  %1651 = vmatpush.msra.mxu0 %v1118
  %1652 = vmatpush.msra.mxu0 %v1115
  %1653 = vmatpush.msra.mxu0 %v1112
  %1654 = vmatpush.msra.mxu0 %v1109
  %1655 = vmatpush.msra.mxu0 %v1106
  %1656 = vmatpush.msra.mxu0 %v1103
  %1657 = vmatpush.msra.mxu0 %v1100
  %1658 = vmatpush.msra.mxu0 %v1097
  %1659 = vmatpush.msra.mxu0 %v1094
  %1660 = vmatmul.f32.gmra.mxu0 %v1603
  %v1661 = vpop.f32.mrf.mxu0
  %v1662 = vadd.f32 %v1144, %v1661
  %1663 = vdwg.mxu0
  %v1664 = vadd.f32 %v709, %v1622
  %v1665 = vmul.f32 %v1664, 0.5
  %v1666 = vtanh.pop %v1665
  %v1667 = vadd.f32 %v1666, 1.0
  %v1668 = vmul.f32 %v1667, 0.5
  %v1669 = vadd.f32 %v785, %v1642
  %v1670 = vmul.f32 %v1669, 0.5
  %v1671 = vtanh.pop %v1670
  %v1672 = vadd.f32 %v1671, 1.0
  %v1673 = vmul.f32 %v1672, 0.5
  %v1674 = vmul.f32 %v1668, %v1662
  %v1675 = vadd.f32 %v861, %v1674
  %v1676 = vtanh.pop %v1675
  %v1677 = vsub.f32 %v1603, %v1676
  %v1678 = vmul.f32 %v1673, %v1677
  %v1679 = vadd.f32 %v1676, %v1678
  %v1680 = vld [vmem:[%s13] sm:$0xff]
  %v1681 = vld [vmem:[%s13 + $0x8] sm:$0xff]
  %v1682 = vld [vmem:[%s13 + $0x10] sm:$0xff]
  %v1683 = vld [vmem:[%s13 + $0x18] sm:$0xff]
  %v1684 = vld [vmem:[%s13 + $0x20] sm:$0xff]
  %v1685 = vld [vmem:[%s13 + $0x28] sm:$0xff]
  %v1686 = vld [vmem:[%s13 + $0x30] sm:$0xff]
  %v1687 = vld [vmem:[%s13 + $0x38] sm:$0xff]
  %v1688 = vld [vmem:[%s13 + $0x40] sm:$0xff]
  %v1689 = vld [vmem:[%s13 + $0x48] sm:$0xff]
  %v1690 = vld [vmem:[%s13 + $0x50] sm:$0xff]
  %v1691 = vld [vmem:[%s13 + $0x58] sm:$0xff]
  %v1692 = vld [vmem:[%s13 + $0x60] sm:$0xff]
  %v1693 = vld [vmem:[%s13 + $0x68] sm:$0xff]
  %v1694 = vld [vmem:[%s13 + $0x70] sm:$0xff]
  %v1695 = vld [vmem:[%s13 + $0x78] sm:$0xff]
  %v1696 = vld [vmem:[%s14] sm:$0x1]
  %v1698 = vperm.slane %v1696, 0
  %1700 = vmatpush.msra.mxu0 %v1695
  %1701 = vmatpush.msra.mxu0 %v1694
  %1702 = vmatpush.msra.mxu0 %v1693
  %1703 = vmatpush.msra.mxu0 %v1692
  %1704 = vmatpush.msra.mxu0 %v1691
  %1705 = vmatpush.msra.mxu0 %v1690
  %1706 = vmatpush.msra.mxu0 %v1689
  %1707 = vmatpush.msra.mxu0 %v1688
  %1708 = vmatpush.msra.mxu0 %v1687
  %1709 = vmatpush.msra.mxu0 %v1686
  %1710 = vmatpush.msra.mxu0 %v1685
  %1711 = vmatpush.msra.mxu0 %v1684
  %1712 = vmatpush.msra.mxu0 %v1683
  %1713 = vmatpush.msra.mxu0 %v1682
  %1714 = vmatpush.msra.mxu0 %v1681
  %1715 = vmatpush.msra.mxu0 %v1680
  %1716 = vmatmul.f32.gmra.mxu0 %v1223
  %v1717 = vpop.f32.mrf.mxu0
  %v1718 = vadd.f32 %v1698, %v1717
  %1719 = vmatmul.f32.gmra.mxu0 %v1299
  %v1720 = vpop.f32.mrf.mxu0
  %v1721 = vadd.f32 %v1698, %v1720
  %1722 = vmatmul.f32.gmra.mxu0 %v1375
  %v1723 = vpop.f32.mrf.mxu0
  %v1724 = vadd.f32 %v1698, %v1723
  %1725 = vmatmul.f32.gmra.mxu0 %v1451
  %v1726 = vpop.f32.mrf.mxu0
  %v1727 = vadd.f32 %v1698, %v1726
  %1728 = vmatmul.f32.gmra.mxu0 %v1527
  %v1729 = vpop.f32.mrf.mxu0
  %v1730 = vadd.f32 %v1698, %v1729
  %1731 = vmatmul.f32.gmra.mxu0 %v1603
  %v1732 = vpop.f32.mrf.mxu0
  %v1733 = vadd.f32 %v1698, %v1732
  %1734 = vmatmul.f32.gmra.mxu0 %v1679
  %v1735 = vpop.f32.mrf.mxu0
  %v1736 = vadd.f32 %v1698, %v1735
  %1737 = vdwg.mxu0
  %v1738 = vtanh.pop %v1718
  %v1739 = vtanh.pop %v1721
  %v1740 = vtanh.pop %v1724
  %v1741 = vtanh.pop %v1727
  %v1742 = vtanh.pop %v1730
  %v1743 = vtanh.pop %v1733
  %v1744 = vtanh.pop %v1736
  %vm1745 = vcmask 130048
  %v1746 = vsel %vm1745, %v1738, -inf
  %1747 = vmax.xlane.f32.xlu0 %v1746
  %v1748 = vpop.xlane.xlu0 %1747
  %v1749 = vsel %vm1745, %v1739, -inf
  %1750 = vmax.xlane.f32.xlu0 %v1749
  %v1751 = vpop.xlane.xlu0 %1750
  %v1752 = vsel %vm1745, %v1740, -inf
  %1753 = vmax.xlane.f32.xlu0 %v1752
  %v1754 = vpop.xlane.xlu0 %1753
  %v1755 = vsel %vm1745, %v1741, -inf
  %1756 = vmax.xlane.f32.xlu0 %v1755
  %v1757 = vpop.xlane.xlu0 %1756
  %v1758 = vsel %vm1745, %v1742, -inf
  %1759 = vmax.xlane.f32.xlu0 %v1758
  %v1760 = vpop.xlane.xlu0 %1759
  %v1761 = vsel %vm1745, %v1743, -inf
  %1762 = vmax.xlane.f32.xlu0 %v1761
  %v1763 = vpop.xlane.xlu0 %1762
  %v1764 = vsel %vm1745, %v1744, -inf
  %1765 = vmax.xlane.f32.xlu0 %v1764
  %v1766 = vpop.xlane.xlu0 %1765
  %v1767 = vsub.f32 %v1738, %v1748
  %v1768 = vsub.f32 %v1739, %v1751
  %v1769 = vsub.f32 %v1740, %v1754
  %v1770 = vsub.f32 %v1741, %v1757
  %v1771 = vsub.f32 %v1742, %v1760
  %v1772 = vsub.f32 %v1743, %v1763
  %v1773 = vsub.f32 %v1744, %v1766
  %v1774 = vmul.f32 %v1767, 1.442695
  %v1775 = vpow.pop %v1774
  %v1776 = vmul.f32 %v1768, 1.442695
  %v1777 = vpow.pop %v1776
  %v1778 = vmul.f32 %v1769, 1.442695
  %v1779 = vpow.pop %v1778
  %v1780 = vmul.f32 %v1770, 1.442695
  %v1781 = vpow.pop %v1780
  %v1782 = vmul.f32 %v1771, 1.442695
  %v1783 = vpow.pop %v1782
  %v1784 = vmul.f32 %v1772, 1.442695
  %v1785 = vpow.pop %v1784
  %v1786 = vmul.f32 %v1773, 1.442695
  %v1787 = vpow.pop %v1786
  %v1788 = vsel %vm1745, %v1775, 0.0
  %1789 = vadd.xlane.f32.xlu0 %v1788
  %v1790 = vpop.xlane.xlu0 %1789
  %v1791 = vsel %vm1745, %v1777, 0.0
  %1792 = vadd.xlane.f32.xlu0 %v1791
  %v1793 = vpop.xlane.xlu0 %1792
  %v1794 = vsel %vm1745, %v1779, 0.0
  %1795 = vadd.xlane.f32.xlu0 %v1794
  %v1796 = vpop.xlane.xlu0 %1795
  %v1797 = vsel %vm1745, %v1781, 0.0
  %1798 = vadd.xlane.f32.xlu0 %v1797
  %v1799 = vpop.xlane.xlu0 %1798
  %v1800 = vsel %vm1745, %v1783, 0.0
  %1801 = vadd.xlane.f32.xlu0 %v1800
  %v1802 = vpop.xlane.xlu0 %1801
  %v1803 = vsel %vm1745, %v1785, 0.0
  %1804 = vadd.xlane.f32.xlu0 %v1803
  %v1805 = vpop.xlane.xlu0 %1804
  %v1806 = vsel %vm1745, %v1787, 0.0
  %1807 = vadd.xlane.f32.xlu0 %v1806
  %v1808 = vpop.xlane.xlu0 %1807
  %v1809 = vlog2.pop %v1790
  %v1810 = vmul.f32 %v1809, 0.6931472
  %v1811 = vlog2.pop %v1793
  %v1812 = vmul.f32 %v1811, 0.6931472
  %v1813 = vlog2.pop %v1796
  %v1814 = vmul.f32 %v1813, 0.6931472
  %v1815 = vlog2.pop %v1799
  %v1816 = vmul.f32 %v1815, 0.6931472
  %v1817 = vlog2.pop %v1802
  %v1818 = vmul.f32 %v1817, 0.6931472
  %v1819 = vlog2.pop %v1805
  %v1820 = vmul.f32 %v1819, 0.6931472
  %v1821 = vlog2.pop %v1808
  %v1822 = vmul.f32 %v1821, 0.6931472
  %v1823 = vsub.f32 %v1767, %v1810
  %v1824 = vsub.f32 %v1768, %v1812
  %v1825 = vsub.f32 %v1769, %v1814
  %v1826 = vsub.f32 %v1770, %v1816
  %v1827 = vsub.f32 %v1771, %v1818
  %v1828 = vsub.f32 %v1772, %v1820
  %v1829 = vsub.f32 %v1773, %v1822
  %v1830 = vrcp.pop %v1790
  %v1831 = vmul.f32 %v1790, %v1830
  %v1832 = vsub.f32 1.0, %v1831
  %v1833 = vmul.f32 %v1830, %v1832
  %v1834 = vadd.f32 %v1830, %v1833
  %vm1835 = vweird.f32 %v1790
  %vm1836 = vweird.f32 %v1830
  %vm1837 = vmor %vm1835, %vm1836
  %v1838 = vsel %vm1837, %v1830, %v1834
  %v1839 = vand.u32 2147483647, %v1790
  %vm1840 = vcmp.eq.f32.partialorder %v1839, 8.507059e+37
  %v1841 = vand.u32 %v1790, 2147483648
  %v1842 = vor.u32 1.1754944e-38, %v1841
  %v1843 = vsel %vm1840, %v1842, %v1838
  %v1844 = vmul.f32 %v1775, %v1843
  %v1845 = vrcp.pop %v1793
  %v1846 = vmul.f32 %v1793, %v1845
  %v1847 = vsub.f32 1.0, %v1846
  %v1848 = vmul.f32 %v1845, %v1847
  %v1849 = vadd.f32 %v1845, %v1848
  %vm1850 = vweird.f32 %v1793
  %vm1851 = vweird.f32 %v1845
  %vm1852 = vmor %vm1850, %vm1851
  %v1853 = vsel %vm1852, %v1845, %v1849
  %v1854 = vand.u32 2147483647, %v1793
  %vm1855 = vcmp.eq.f32.partialorder %v1854, 8.507059e+37
  %v1856 = vand.u32 %v1793, 2147483648
  %v1857 = vor.u32 1.1754944e-38, %v1856
  %v1858 = vsel %vm1855, %v1857, %v1853
  %v1859 = vmul.f32 %v1777, %v1858
  %v1860 = vrcp.pop %v1796
  %v1861 = vmul.f32 %v1796, %v1860
  %v1862 = vsub.f32 1.0, %v1861
  %v1863 = vmul.f32 %v1860, %v1862
  %v1864 = vadd.f32 %v1860, %v1863
  %vm1865 = vweird.f32 %v1796
  %vm1866 = vweird.f32 %v1860
  %vm1867 = vmor %vm1865, %vm1866
  %v1868 = vsel %vm1867, %v1860, %v1864
  %v1869 = vand.u32 2147483647, %v1796
  %vm1870 = vcmp.eq.f32.partialorder %v1869, 8.507059e+37
  %v1871 = vand.u32 %v1796, 2147483648
  %v1872 = vor.u32 1.1754944e-38, %v1871
  %v1873 = vsel %vm1870, %v1872, %v1868
  %v1874 = vmul.f32 %v1779, %v1873
  %v1875 = vrcp.pop %v1799
  %v1876 = vmul.f32 %v1799, %v1875
  %v1877 = vsub.f32 1.0, %v1876
  %v1878 = vmul.f32 %v1875, %v1877
  %v1879 = vadd.f32 %v1875, %v1878
  %vm1880 = vweird.f32 %v1799
  %vm1881 = vweird.f32 %v1875
  %vm1882 = vmor %vm1880, %vm1881
  %v1883 = vsel %vm1882, %v1875, %v1879
  %v1884 = vand.u32 2147483647, %v1799
  %vm1885 = vcmp.eq.f32.partialorder %v1884, 8.507059e+37
  %v1886 = vand.u32 %v1799, 2147483648
  %v1887 = vor.u32 1.1754944e-38, %v1886
  %v1888 = vsel %vm1885, %v1887, %v1883
  %v1889 = vmul.f32 %v1781, %v1888
  %v1890 = vrcp.pop %v1802
  %v1891 = vmul.f32 %v1802, %v1890
  %v1892 = vsub.f32 1.0, %v1891
  %v1893 = vmul.f32 %v1890, %v1892
  %v1894 = vadd.f32 %v1890, %v1893
  %vm1895 = vweird.f32 %v1802
  %vm1896 = vweird.f32 %v1890
  %vm1897 = vmor %vm1895, %vm1896
  %v1898 = vsel %vm1897, %v1890, %v1894
  %v1899 = vand.u32 2147483647, %v1802
  %vm1900 = vcmp.eq.f32.partialorder %v1899, 8.507059e+37
  %v1901 = vand.u32 %v1802, 2147483648
  %v1902 = vor.u32 1.1754944e-38, %v1901
  %v1903 = vsel %vm1900, %v1902, %v1898
  %v1904 = vmul.f32 %v1783, %v1903
  %v1905 = vrcp.pop %v1805
  %v1906 = vmul.f32 %v1805, %v1905
  %v1907 = vsub.f32 1.0, %v1906
  %v1908 = vmul.f32 %v1905, %v1907
  %v1909 = vadd.f32 %v1905, %v1908
  %vm1910 = vweird.f32 %v1805
  %vm1911 = vweird.f32 %v1905
  %vm1912 = vmor %vm1910, %vm1911
  %v1913 = vsel %vm1912, %v1905, %v1909
  %v1914 = vand.u32 2147483647, %v1805
  %vm1915 = vcmp.eq.f32.partialorder %v1914, 8.507059e+37
  %v1916 = vand.u32 %v1805, 2147483648
  %v1917 = vor.u32 1.1754944e-38, %v1916
  %v1918 = vsel %vm1915, %v1917, %v1913
  %v1919 = vmul.f32 %v1785, %v1918
  %v1920 = vrcp.pop %v1808
  %v1921 = vmul.f32 %v1808, %v1920
  %v1922 = vsub.f32 1.0, %v1921
  %v1923 = vmul.f32 %v1920, %v1922
  %v1924 = vadd.f32 %v1920, %v1923
  %vm1925 = vweird.f32 %v1808
  %vm1926 = vweird.f32 %v1920
  %vm1927 = vmor %vm1925, %vm1926
  %v1928 = vsel %vm1927, %v1920, %v1924
  %v1929 = vand.u32 2147483647, %v1808
  %vm1930 = vcmp.eq.f32.partialorder %v1929, 8.507059e+37
  %v1931 = vand.u32 %v1808, 2147483648
  %v1932 = vor.u32 1.1754944e-38, %v1931
  %v1933 = vsel %vm1930, %v1932, %v1928
  %v1934 = vmul.f32 %v1787, %v1933
  %v1935 = vlaneseq
  %v1936 = vand.u32 %v1935, 127
  %v1937 = vld [vmem:[%s1] sm:$0xff]
  %v1938 = vld [vmem:[%s1 + $0x8] sm:$0xff]
  %v1939 = vld [vmem:[%s1 + $0x10] sm:$0xff]
  %v1940 = vld [vmem:[%s1 + $0x18] sm:$0xff]
  %v1941 = vld [vmem:[%s1 + $0x20] sm:$0xff]
  %v1942 = vld [vmem:[%s1 + $0x28] sm:$0xff]
  %v1943 = vld [vmem:[%s1 + $0x30] sm:$0xff]
  %1944 = vset.pattern.permute.xlu0 0
  %1945 = vperm.xlu0 %1944, %v1937
  %v1946 = vpop.permute.xlu0 %1945
  %1947 = vset.pattern.permute.xlu0 0
  %1948 = vperm.xlu0 %1947, %v1938
  %v1949 = vpop.permute.xlu0 %1948
  %1950 = vset.pattern.permute.xlu0 0
  %1951 = vperm.xlu0 %1950, %v1939
  %v1952 = vpop.permute.xlu0 %1951
  %1953 = vset.pattern.permute.xlu0 0
  %1954 = vperm.xlu0 %1953, %v1940
  %v1955 = vpop.permute.xlu0 %1954
  %1956 = vset.pattern.permute.xlu0 0
  %1957 = vperm.xlu0 %1956, %v1941
  %v1958 = vpop.permute.xlu0 %1957
  %1959 = vset.pattern.permute.xlu0 0
  %1960 = vperm.xlu0 %1959, %v1942
  %v1961 = vpop.permute.xlu0 %1960
  %1962 = vset.pattern.permute.xlu0 0
  %1963 = vperm.xlu0 %1962, %v1943
  %v1964 = vpop.permute.xlu0 %1963
  %vm1965 = vcmp.eq.s32.totalorder %v1936, %v1946
  %vm1966 = vcmp.eq.s32.totalorder %v1936, %v1949
  %vm1967 = vcmp.eq.s32.totalorder %v1936, %v1952
  %vm1968 = vcmp.eq.s32.totalorder %v1936, %v1955
  %vm1969 = vcmp.eq.s32.totalorder %v1936, %v1958
  %vm1970 = vcmp.eq.s32.totalorder %v1936, %v1961
  %vm1971 = vcmp.eq.s32.totalorder %v1936, %v1964
  %v1972 = vsel %vm1965, 1, 0
  %v1973 = vsel %vm1966, 1, 0
  %v1974 = vsel %vm1967, 1, 0
  %v1975 = vsel %vm1968, 1, 0
  %v1976 = vsel %vm1969, 1, 0
  %v1977 = vsel %vm1970, 1, 0
  %v1978 = vsel %vm1971, 1, 0
  %v1979 = vcvt.s32.f32 %v1972
  %v1980 = vcvt.s32.f32 %v1973
  %v1981 = vcvt.s32.f32 %v1974
  %v1982 = vcvt.s32.f32 %v1975
  %v1983 = vcvt.s32.f32 %v1976
  %v1984 = vcvt.s32.f32 %v1977
  %v1985 = vcvt.s32.f32 %v1978
  %v1986 = vmul.f32 %v1979, %v1823
  %v1987 = vmul.f32 %v1980, %v1824
  %v1988 = vmul.f32 %v1981, %v1825
  %v1989 = vmul.f32 %v1982, %v1826
  %v1990 = vmul.f32 %v1983, %v1827
  %v1991 = vmul.f32 %v1984, %v1828
  %v1992 = vmul.f32 %v1985, %v1829
  %v1993 = vsel %vm1745, %v1986, 0.0
  %1994 = vadd.xlane.f32.xlu0 %v1993
  %v1995 = vpop.xlane.xlu0 %1994
  %v1996 = vsel %vm1745, %v1987, 0.0
  %1997 = vadd.xlane.f32.xlu0 %v1996
  %v1998 = vpop.xlane.xlu0 %1997
  %v1999 = vsel %vm1745, %v1988, 0.0
  %2000 = vadd.xlane.f32.xlu0 %v1999
  %v2001 = vpop.xlane.xlu0 %2000
  %v2002 = vsel %vm1745, %v1989, 0.0
  %2003 = vadd.xlane.f32.xlu0 %v2002
  %v2004 = vpop.xlane.xlu0 %2003
  %v2005 = vsel %vm1745, %v1990, 0.0
  %2006 = vadd.xlane.f32.xlu0 %v2005
  %v2007 = vpop.xlane.xlu0 %2006
  %v2008 = vsel %vm1745, %v1991, 0.0
  %2009 = vadd.xlane.f32.xlu0 %v2008
  %v2010 = vpop.xlane.xlu0 %2009
  %v2011 = vsel %vm1745, %v1992, 0.0
  %2012 = vadd.xlane.f32.xlu0 %v2011
  %v2013 = vpop.xlane.xlu0 %2012
  %v2014 = vmul.f32 %v1844, %v1823
  %v2015 = vmul.f32 %v1859, %v1824
  %v2016 = vmul.f32 %v1874, %v1825
  %v2017 = vmul.f32 %v1889, %v1826
  %v2018 = vmul.f32 %v1904, %v1827
  %v2019 = vmul.f32 %v1919, %v1828
  %v2020 = vmul.f32 %v1934, %v1829
  %v2021 = vsel %vm1745, %v2014, 0.0
  %2022 = vadd.xlane.f32.xlu0 %v2021
  %v2023 = vpop.xlane.xlu0 %2022
  %v2024 = vsel %vm1745, %v2015, 0.0
  %2025 = vadd.xlane.f32.xlu0 %v2024
  %v2026 = vpop.xlane.xlu0 %2025
  %v2027 = vsel %vm1745, %v2016, 0.0
  %2028 = vadd.xlane.f32.xlu0 %v2027
  %v2029 = vpop.xlane.xlu0 %2028
  %v2030 = vsel %vm1745, %v2017, 0.0
  %2031 = vadd.xlane.f32.xlu0 %v2030
  %v2032 = vpop.xlane.xlu0 %2031
  %v2033 = vsel %vm1745, %v2018, 0.0
  %2034 = vadd.xlane.f32.xlu0 %v2033
  %v2035 = vpop.xlane.xlu0 %2034
  %v2036 = vsel %vm1745, %v2019, 0.0
  %2037 = vadd.xlane.f32.xlu0 %v2036
  %v2038 = vpop.xlane.xlu0 %2037
  %v2039 = vsel %vm1745, %v2020, 0.0
  %2040 = vadd.xlane.f32.xlu0 %v2039
  %v2041 = vpop.xlane.xlu0 %2040
  %v2042 = vsub.f32 0.0, %v2023
  %v2043 = vsub.f32 0.0, %v2026
  %v2044 = vsub.f32 0.0, %v2029
  %v2045 = vsub.f32 0.0, %v2032
  %v2046 = vsub.f32 0.0, %v2035
  %v2047 = vsub.f32 0.0, %v2038
  %v2048 = vsub.f32 0.0, %v2041
  %v2049 = vld [vmem:[%s11] sm:$0xff]
  %v2050 = vld [vmem:[%s11 + $0x8] sm:$0xff]
  %v2051 = vld [vmem:[%s11 + $0x10] sm:$0xff]
  %v2052 = vld [vmem:[%s11 + $0x18] sm:$0xff]
  %v2053 = vld [vmem:[%s11 + $0x20] sm:$0xff]
  %v2054 = vld [vmem:[%s11 + $0x28] sm:$0xff]
  %v2055 = vld [vmem:[%s11 + $0x30] sm:$0xff]
  %v2056 = vld [vmem:[%s11 + $0x38] sm:$0xff]
  %v2057 = vld [vmem:[%s11 + $0x40] sm:$0xff]
  %v2058 = vld [vmem:[%s11 + $0x48] sm:$0xff]
  %v2059 = vld [vmem:[%s11 + $0x50] sm:$0xff]
  %v2060 = vld [vmem:[%s11 + $0x58] sm:$0xff]
  %v2061 = vld [vmem:[%s11 + $0x60] sm:$0xff]
  %v2062 = vld [vmem:[%s11 + $0x68] sm:$0xff]
  %v2063 = vld [vmem:[%s11 + $0x70] sm:$0xff]
  %v2064 = vld [vmem:[%s11 + $0x78] sm:$0xff]
  %v2065 = vld [vmem:[%s11 + $0x80] sm:$0xff]
  %v2066 = vld [vmem:[%s11 + $0x88] sm:$0xff]
  %v2067 = vld [vmem:[%s11 + $0x90] sm:$0xff]
  %v2068 = vld [vmem:[%s11 + $0x98] sm:$0xff]
  %v2069 = vld [vmem:[%s11 + $0xa0] sm:$0xff]
  %v2070 = vld [vmem:[%s11 + $0xa8] sm:$0xff]
  %v2071 = vld [vmem:[%s11 + $0xb0] sm:$0xff]
  %v2072 = vld [vmem:[%s11 + $0xb8] sm:$0xff]
  %v2073 = vld [vmem:[%s11 + $0xc0] sm:$0xff]
  %v2074 = vld [vmem:[%s11 + $0xc8] sm:$0xff]
  %v2075 = vld [vmem:[%s11 + $0xd0] sm:$0xff]
  %v2076 = vld [vmem:[%s11 + $0xd8] sm:$0xff]
  %v2077 = vld [vmem:[%s11 + $0xe0] sm:$0xff]
  %v2078 = vld [vmem:[%s11 + $0xe8] sm:$0xff]
  %v2079 = vld [vmem:[%s11 + $0xf0] sm:$0xff]
  %v2080 = vld [vmem:[%s11 + $0xf8] sm:$0xff]
  %v2081 = vld [vmem:[%s11 + $0x100] sm:$0xff]
  %v2082 = vld [vmem:[%s11 + $0x108] sm:$0xff]
  %v2083 = vld [vmem:[%s11 + $0x110] sm:$0xff]
  %v2084 = vld [vmem:[%s11 + $0x118] sm:$0xff]
  %v2085 = vld [vmem:[%s11 + $0x120] sm:$0xff]
  %v2086 = vld [vmem:[%s11 + $0x128] sm:$0xff]
  %v2087 = vld [vmem:[%s11 + $0x130] sm:$0xff]
  %v2088 = vld [vmem:[%s11 + $0x138] sm:$0xff]
  %v2089 = vld [vmem:[%s11 + $0x140] sm:$0xff]
  %v2090 = vld [vmem:[%s11 + $0x148] sm:$0xff]
  %v2091 = vld [vmem:[%s11 + $0x150] sm:$0xff]
  %v2092 = vld [vmem:[%s11 + $0x158] sm:$0xff]
  %v2093 = vld [vmem:[%s11 + $0x160] sm:$0xff]
  %v2094 = vld [vmem:[%s11 + $0x168] sm:$0xff]
  %v2095 = vld [vmem:[%s11 + $0x170] sm:$0xff]
  %v2096 = vld [vmem:[%s11 + $0x178] sm:$0xff]
  %v2097 = vld [vmem:[%s12] sm:$0x7]
  %v2099 = vperm.slane %v2097, 0
  %v2100 = vperm.slane %v2097, 1
  %v2101 = vperm.slane %v2097, 2
  %2105 = vmatpush.msra.mxu0 %v2094
  %2106 = vmatpush.msra.mxu0 %v2091
  %2107 = vmatpush.msra.mxu0 %v2088
  %2108 = vmatpush.msra.mxu0 %v2085
  %2109 = vmatpush.msra.mxu0 %v2082
  %2110 = vmatpush.msra.mxu0 %v2079
  %2111 = vmatpush.msra.mxu0 %v2076
  %2112 = vmatpush.msra.mxu0 %v2073
  %2113 = vmatpush.msra.mxu0 %v2070
  %2114 = vmatpush.msra.mxu0 %v2067
  %2115 = vmatpush.msra.mxu0 %v2064
  %2116 = vmatpush.msra.mxu0 %v2061
  %2117 = vmatpush.msra.mxu0 %v2058
  %2118 = vmatpush.msra.mxu0 %v2055
  %2119 = vmatpush.msra.mxu0 %v2052
  %2120 = vmatpush.msra.mxu0 %v2049
  %2121 = vmatmul.f32.gmra.mxu0 %v1679
  %v2122 = vpop.f32.mrf.mxu0
  %v2123 = vadd.f32 %v2099, %v2122
  %2124 = vdwg.mxu0
  %2125 = vmatpush.msra.mxu0 %v2095
  %2126 = vmatpush.msra.mxu0 %v2092
  %2127 = vmatpush.msra.mxu0 %v2089
  %2128 = vmatpush.msra.mxu0 %v2086
  %2129 = vmatpush.msra.mxu0 %v2083
  %2130 = vmatpush.msra.mxu0 %v2080
  %2131 = vmatpush.msra.mxu0 %v2077
  %2132 = vmatpush.msra.mxu0 %v2074
  %2133 = vmatpush.msra.mxu0 %v2071
  %2134 = vmatpush.msra.mxu0 %v2068
  %2135 = vmatpush.msra.mxu0 %v2065
  %2136 = vmatpush.msra.mxu0 %v2062
  %2137 = vmatpush.msra.mxu0 %v2059
  %2138 = vmatpush.msra.mxu0 %v2056
  %2139 = vmatpush.msra.mxu0 %v2053
  %2140 = vmatpush.msra.mxu0 %v2050
  %2141 = vmatmul.f32.gmra.mxu0 %v1679
  %v2142 = vpop.f32.mrf.mxu0
  %v2143 = vadd.f32 %v2100, %v2142
  %2144 = vdwg.mxu0
  %2145 = vmatpush.msra.mxu0 %v2096
  %2146 = vmatpush.msra.mxu0 %v2093
  %2147 = vmatpush.msra.mxu0 %v2090
  %2148 = vmatpush.msra.mxu0 %v2087
  %2149 = vmatpush.msra.mxu0 %v2084
  %2150 = vmatpush.msra.mxu0 %v2081
  %2151 = vmatpush.msra.mxu0 %v2078
  %2152 = vmatpush.msra.mxu0 %v2075
  %2153 = vmatpush.msra.mxu0 %v2072
  %2154 = vmatpush.msra.mxu0 %v2069
  %2155 = vmatpush.msra.mxu0 %v2066
  %2156 = vmatpush.msra.mxu0 %v2063
  %2157 = vmatpush.msra.mxu0 %v2060
  %2158 = vmatpush.msra.mxu0 %v2057
  %2159 = vmatpush.msra.mxu0 %v2054
  %2160 = vmatpush.msra.mxu0 %v2051
  %2161 = vmatmul.f32.gmra.mxu0 %v1679
  %v2162 = vpop.f32.mrf.mxu0
  %v2163 = vadd.f32 %v2101, %v2162
  %2164 = vdwg.mxu0
  %v2165 = vadd.f32 %v919, %v2123
  %v2166 = vmul.f32 %v2165, 0.5
  %v2167 = vtanh.pop %v2166
  %v2168 = vadd.f32 %v2167, 1.0
  %v2169 = vmul.f32 %v2168, 0.5
  %v2170 = vadd.f32 %v995, %v2143
  %v2171 = vmul.f32 %v2170, 0.5
  %v2172 = vtanh.pop %v2171
  %v2173 = vadd.f32 %v2172, 1.0
  %v2174 = vmul.f32 %v2173, 0.5
  %v2175 = vmul.f32 %v2169, %v2163
  %v2176 = vadd.f32 %v1071, %v2175
  %v2177 = vtanh.pop %v2176
  %v2178 = vsub.f32 %v1679, %v2177
  %v2179 = vmul.f32 %v2174, %v2178
  %v2180 = vadd.f32 %v2177, %v2179
  %2181 = vmatpush.msra.mxu0 %v2094
  %2182 = vmatpush.msra.mxu0 %v2091
  %2183 = vmatpush.msra.mxu0 %v2088
  %2184 = vmatpush.msra.mxu0 %v2085
  %2185 = vmatpush.msra.mxu0 %v2082
  %2186 = vmatpush.msra.mxu0 %v2079
  %2187 = vmatpush.msra.mxu0 %v2076
  %2188 = vmatpush.msra.mxu0 %v2073
  %2189 = vmatpush.msra.mxu0 %v2070
  %2190 = vmatpush.msra.mxu0 %v2067
  %2191 = vmatpush.msra.mxu0 %v2064
  %2192 = vmatpush.msra.mxu0 %v2061
  %2193 = vmatpush.msra.mxu0 %v2058
  %2194 = vmatpush.msra.mxu0 %v2055
  %2195 = vmatpush.msra.mxu0 %v2052
  %2196 = vmatpush.msra.mxu0 %v2049
  %2197 = vmatmul.f32.gmra.mxu0 %v2180
  %v2198 = vpop.f32.mrf.mxu0
  %v2199 = vadd.f32 %v2099, %v2198
  %2200 = vdwg.mxu0
  %2201 = vmatpush.msra.mxu0 %v2095
  %2202 = vmatpush.msra.mxu0 %v2092
  %2203 = vmatpush.msra.mxu0 %v2089
  %2204 = vmatpush.msra.mxu0 %v2086
  %2205 = vmatpush.msra.mxu0 %v2083
  %2206 = vmatpush.msra.mxu0 %v2080
  %2207 = vmatpush.msra.mxu0 %v2077
  %2208 = vmatpush.msra.mxu0 %v2074
  %2209 = vmatpush.msra.mxu0 %v2071
  %2210 = vmatpush.msra.mxu0 %v2068
  %2211 = vmatpush.msra.mxu0 %v2065
  %2212 = vmatpush.msra.mxu0 %v2062
  %2213 = vmatpush.msra.mxu0 %v2059
  %2214 = vmatpush.msra.mxu0 %v2056
  %2215 = vmatpush.msra.mxu0 %v2053
  %2216 = vmatpush.msra.mxu0 %v2050
  %2217 = vmatmul.f32.gmra.mxu0 %v2180
  %v2218 = vpop.f32.mrf.mxu0
  %v2219 = vadd.f32 %v2100, %v2218
  %2220 = vdwg.mxu0
  %2221 = vmatpush.msra.mxu0 %v2096
  %2222 = vmatpush.msra.mxu0 %v2093
  %2223 = vmatpush.msra.mxu0 %v2090
  %2224 = vmatpush.msra.mxu0 %v2087
  %2225 = vmatpush.msra.mxu0 %v2084
  %2226 = vmatpush.msra.mxu0 %v2081
  %2227 = vmatpush.msra.mxu0 %v2078
  %2228 = vmatpush.msra.mxu0 %v2075
  %2229 = vmatpush.msra.mxu0 %v2072
  %2230 = vmatpush.msra.mxu0 %v2069
  %2231 = vmatpush.msra.mxu0 %v2066
  %2232 = vmatpush.msra.mxu0 %v2063
  %2233 = vmatpush.msra.mxu0 %v2060
  %2234 = vmatpush.msra.mxu0 %v2057
  %2235 = vmatpush.msra.mxu0 %v2054
  %2236 = vmatpush.msra.mxu0 %v2051
  %2237 = vmatmul.f32.gmra.mxu0 %v2180
  %v2238 = vpop.f32.mrf.mxu0
  %v2239 = vadd.f32 %v2101, %v2238
  %2240 = vdwg.mxu0
  %v2241 = vadd.f32 %v922, %v2199
  %v2242 = vmul.f32 %v2241, 0.5
  %v2243 = vtanh.pop %v2242
  %v2244 = vadd.f32 %v2243, 1.0
  %v2245 = vmul.f32 %v2244, 0.5
  %v2246 = vadd.f32 %v998, %v2219
  %v2247 = vmul.f32 %v2246, 0.5
  %v2248 = vtanh.pop %v2247
  %v2249 = vadd.f32 %v2248, 1.0
  %v2250 = vmul.f32 %v2249, 0.5
  %v2251 = vmul.f32 %v2245, %v2239
  %v2252 = vadd.f32 %v1074, %v2251
  %v2253 = vtanh.pop %v2252
  %v2254 = vsub.f32 %v2180, %v2253
  %v2255 = vmul.f32 %v2250, %v2254
  %v2256 = vadd.f32 %v2253, %v2255
  %2257 = vmatpush.msra.mxu0 %v2094
  %2258 = vmatpush.msra.mxu0 %v2091
  %2259 = vmatpush.msra.mxu0 %v2088
  %2260 = vmatpush.msra.mxu0 %v2085
  %2261 = vmatpush.msra.mxu0 %v2082
  %2262 = vmatpush.msra.mxu0 %v2079
  %2263 = vmatpush.msra.mxu0 %v2076
  %2264 = vmatpush.msra.mxu0 %v2073
  %2265 = vmatpush.msra.mxu0 %v2070
  %2266 = vmatpush.msra.mxu0 %v2067
  %2267 = vmatpush.msra.mxu0 %v2064
  %2268 = vmatpush.msra.mxu0 %v2061
  %2269 = vmatpush.msra.mxu0 %v2058
  %2270 = vmatpush.msra.mxu0 %v2055
  %2271 = vmatpush.msra.mxu0 %v2052
  %2272 = vmatpush.msra.mxu0 %v2049
  %2273 = vmatmul.f32.gmra.mxu0 %v2256
  %v2274 = vpop.f32.mrf.mxu0
  %v2275 = vadd.f32 %v2099, %v2274
  %2276 = vdwg.mxu0
  %2277 = vmatpush.msra.mxu0 %v2095
  %2278 = vmatpush.msra.mxu0 %v2092
  %2279 = vmatpush.msra.mxu0 %v2089
  %2280 = vmatpush.msra.mxu0 %v2086
  %2281 = vmatpush.msra.mxu0 %v2083
  %2282 = vmatpush.msra.mxu0 %v2080
  %2283 = vmatpush.msra.mxu0 %v2077
  %2284 = vmatpush.msra.mxu0 %v2074
  %2285 = vmatpush.msra.mxu0 %v2071
  %2286 = vmatpush.msra.mxu0 %v2068
  %2287 = vmatpush.msra.mxu0 %v2065
  %2288 = vmatpush.msra.mxu0 %v2062
  %2289 = vmatpush.msra.mxu0 %v2059
  %2290 = vmatpush.msra.mxu0 %v2056
  %2291 = vmatpush.msra.mxu0 %v2053
  %2292 = vmatpush.msra.mxu0 %v2050
  %2293 = vmatmul.f32.gmra.mxu0 %v2256
  %v2294 = vpop.f32.mrf.mxu0
  %v2295 = vadd.f32 %v2100, %v2294
  %2296 = vdwg.mxu0
  %2297 = vmatpush.msra.mxu0 %v2096
  %2298 = vmatpush.msra.mxu0 %v2093
  %2299 = vmatpush.msra.mxu0 %v2090
  %2300 = vmatpush.msra.mxu0 %v2087
  %2301 = vmatpush.msra.mxu0 %v2084
  %2302 = vmatpush.msra.mxu0 %v2081
  %2303 = vmatpush.msra.mxu0 %v2078
  %2304 = vmatpush.msra.mxu0 %v2075
  %2305 = vmatpush.msra.mxu0 %v2072
  %2306 = vmatpush.msra.mxu0 %v2069
  %2307 = vmatpush.msra.mxu0 %v2066
  %2308 = vmatpush.msra.mxu0 %v2063
  %2309 = vmatpush.msra.mxu0 %v2060
  %2310 = vmatpush.msra.mxu0 %v2057
  %2311 = vmatpush.msra.mxu0 %v2054
  %2312 = vmatpush.msra.mxu0 %v2051
  %2313 = vmatmul.f32.gmra.mxu0 %v2256
  %v2314 = vpop.f32.mrf.mxu0
  %v2315 = vadd.f32 %v2101, %v2314
  %2316 = vdwg.mxu0
  %v2317 = vadd.f32 %v925, %v2275
  %v2318 = vmul.f32 %v2317, 0.5
  %v2319 = vtanh.pop %v2318
  %v2320 = vadd.f32 %v2319, 1.0
  %v2321 = vmul.f32 %v2320, 0.5
  %v2322 = vadd.f32 %v1001, %v2295
  %v2323 = vmul.f32 %v2322, 0.5
  %v2324 = vtanh.pop %v2323
  %v2325 = vadd.f32 %v2324, 1.0
  %v2326 = vmul.f32 %v2325, 0.5
  %v2327 = vmul.f32 %v2321, %v2315
  %v2328 = vadd.f32 %v1077, %v2327
  %v2329 = vtanh.pop %v2328
  %v2330 = vsub.f32 %v2256, %v2329
  %v2331 = vmul.f32 %v2326, %v2330
  %v2332 = vadd.f32 %v2329, %v2331
  %2333 = vmatpush.msra.mxu0 %v2094
  %2334 = vmatpush.msra.mxu0 %v2091
  %2335 = vmatpush.msra.mxu0 %v2088
  %2336 = vmatpush.msra.mxu0 %v2085
  %2337 = vmatpush.msra.mxu0 %v2082
  %2338 = vmatpush.msra.mxu0 %v2079
  %2339 = vmatpush.msra.mxu0 %v2076
  %2340 = vmatpush.msra.mxu0 %v2073
  %2341 = vmatpush.msra.mxu0 %v2070
  %2342 = vmatpush.msra.mxu0 %v2067
  %2343 = vmatpush.msra.mxu0 %v2064
  %2344 = vmatpush.msra.mxu0 %v2061
  %2345 = vmatpush.msra.mxu0 %v2058
  %2346 = vmatpush.msra.mxu0 %v2055
  %2347 = vmatpush.msra.mxu0 %v2052
  %2348 = vmatpush.msra.mxu0 %v2049
  %2349 = vmatmul.f32.gmra.mxu0 %v2332
  %v2350 = vpop.f32.mrf.mxu0
  %v2351 = vadd.f32 %v2099, %v2350
  %2352 = vdwg.mxu0
  %2353 = vmatpush.msra.mxu0 %v2095
  %2354 = vmatpush.msra.mxu0 %v2092
  %2355 = vmatpush.msra.mxu0 %v2089
  %2356 = vmatpush.msra.mxu0 %v2086
  %2357 = vmatpush.msra.mxu0 %v2083
  %2358 = vmatpush.msra.mxu0 %v2080
  %2359 = vmatpush.msra.mxu0 %v2077
  %2360 = vmatpush.msra.mxu0 %v2074
  %2361 = vmatpush.msra.mxu0 %v2071
  %2362 = vmatpush.msra.mxu0 %v2068
  %2363 = vmatpush.msra.mxu0 %v2065
  %2364 = vmatpush.msra.mxu0 %v2062
  %2365 = vmatpush.msra.mxu0 %v2059
  %2366 = vmatpush.msra.mxu0 %v2056
  %2367 = vmatpush.msra.mxu0 %v2053
  %2368 = vmatpush.msra.mxu0 %v2050
  %2369 = vmatmul.f32.gmra.mxu0 %v2332
  %v2370 = vpop.f32.mrf.mxu0
  %v2371 = vadd.f32 %v2100, %v2370
  %2372 = vdwg.mxu0
  %2373 = vmatpush.msra.mxu0 %v2096
  %2374 = vmatpush.msra.mxu0 %v2093
  %2375 = vmatpush.msra.mxu0 %v2090
  %2376 = vmatpush.msra.mxu0 %v2087
  %2377 = vmatpush.msra.mxu0 %v2084
  %2378 = vmatpush.msra.mxu0 %v2081
  %2379 = vmatpush.msra.mxu0 %v2078
  %2380 = vmatpush.msra.mxu0 %v2075
  %2381 = vmatpush.msra.mxu0 %v2072
  %2382 = vmatpush.msra.mxu0 %v2069
  %2383 = vmatpush.msra.mxu0 %v2066
  %2384 = vmatpush.msra.mxu0 %v2063
  %2385 = vmatpush.msra.mxu0 %v2060
  %2386 = vmatpush.msra.mxu0 %v2057
  %2387 = vmatpush.msra.mxu0 %v2054
  %2388 = vmatpush.msra.mxu0 %v2051
  %2389 = vmatmul.f32.gmra.mxu0 %v2332
  %v2390 = vpop.f32.mrf.mxu0
  %v2391 = vadd.f32 %v2101, %v2390
  %2392 = vdwg.mxu0
  %v2393 = vadd.f32 %v928, %v2351
  %v2394 = vmul.f32 %v2393, 0.5
  %v2395 = vtanh.pop %v2394
  %v2396 = vadd.f32 %v2395, 1.0
  %v2397 = vmul.f32 %v2396, 0.5
  %v2398 = vadd.f32 %v1004, %v2371
  %v2399 = vmul.f32 %v2398, 0.5
  %v2400 = vtanh.pop %v2399
  %v2401 = vadd.f32 %v2400, 1.0
  %v2402 = vmul.f32 %v2401, 0.5
  %v2403 = vmul.f32 %v2397, %v2391
  %v2404 = vadd.f32 %v1080, %v2403
  %v2405 = vtanh.pop %v2404
  %v2406 = vsub.f32 %v2332, %v2405
  %v2407 = vmul.f32 %v2402, %v2406
  %v2408 = vadd.f32 %v2405, %v2407
  %2409 = vmatpush.msra.mxu0 %v2094
  %2410 = vmatpush.msra.mxu0 %v2091
  %2411 = vmatpush.msra.mxu0 %v2088
  %2412 = vmatpush.msra.mxu0 %v2085
  %2413 = vmatpush.msra.mxu0 %v2082
  %2414 = vmatpush.msra.mxu0 %v2079
  %2415 = vmatpush.msra.mxu0 %v2076
  %2416 = vmatpush.msra.mxu0 %v2073
  %2417 = vmatpush.msra.mxu0 %v2070
  %2418 = vmatpush.msra.mxu0 %v2067
  %2419 = vmatpush.msra.mxu0 %v2064
  %2420 = vmatpush.msra.mxu0 %v2061
  %2421 = vmatpush.msra.mxu0 %v2058
  %2422 = vmatpush.msra.mxu0 %v2055
  %2423 = vmatpush.msra.mxu0 %v2052
  %2424 = vmatpush.msra.mxu0 %v2049
  %2425 = vmatmul.f32.gmra.mxu0 %v2408
  %v2426 = vpop.f32.mrf.mxu0
  %v2427 = vadd.f32 %v2099, %v2426
  %2428 = vdwg.mxu0
  %2429 = vmatpush.msra.mxu0 %v2095
  %2430 = vmatpush.msra.mxu0 %v2092
  %2431 = vmatpush.msra.mxu0 %v2089
  %2432 = vmatpush.msra.mxu0 %v2086
  %2433 = vmatpush.msra.mxu0 %v2083
  %2434 = vmatpush.msra.mxu0 %v2080
  %2435 = vmatpush.msra.mxu0 %v2077
  %2436 = vmatpush.msra.mxu0 %v2074
  %2437 = vmatpush.msra.mxu0 %v2071
  %2438 = vmatpush.msra.mxu0 %v2068
  %2439 = vmatpush.msra.mxu0 %v2065
  %2440 = vmatpush.msra.mxu0 %v2062
  %2441 = vmatpush.msra.mxu0 %v2059
  %2442 = vmatpush.msra.mxu0 %v2056
  %2443 = vmatpush.msra.mxu0 %v2053
  %2444 = vmatpush.msra.mxu0 %v2050
  %2445 = vmatmul.f32.gmra.mxu0 %v2408
  %v2446 = vpop.f32.mrf.mxu0
  %v2447 = vadd.f32 %v2100, %v2446
  %2448 = vdwg.mxu0
  %2449 = vmatpush.msra.mxu0 %v2096
  %2450 = vmatpush.msra.mxu0 %v2093
  %2451 = vmatpush.msra.mxu0 %v2090
  %2452 = vmatpush.msra.mxu0 %v2087
  %2453 = vmatpush.msra.mxu0 %v2084
  %2454 = vmatpush.msra.mxu0 %v2081
  %2455 = vmatpush.msra.mxu0 %v2078
  %2456 = vmatpush.msra.mxu0 %v2075
  %2457 = vmatpush.msra.mxu0 %v2072
  %2458 = vmatpush.msra.mxu0 %v2069
  %2459 = vmatpush.msra.mxu0 %v2066
  %2460 = vmatpush.msra.mxu0 %v2063
  %2461 = vmatpush.msra.mxu0 %v2060
  %2462 = vmatpush.msra.mxu0 %v2057
  %2463 = vmatpush.msra.mxu0 %v2054
  %2464 = vmatpush.msra.mxu0 %v2051
  %2465 = vmatmul.f32.gmra.mxu0 %v2408
  %v2466 = vpop.f32.mrf.mxu0
  %v2467 = vadd.f32 %v2101, %v2466
  %2468 = vdwg.mxu0
  %v2469 = vadd.f32 %v931, %v2427
  %v2470 = vmul.f32 %v2469, 0.5
  %v2471 = vtanh.pop %v2470
  %v2472 = vadd.f32 %v2471, 1.0
  %v2473 = vmul.f32 %v2472, 0.5
  %v2474 = vadd.f32 %v1007, %v2447
  %v2475 = vmul.f32 %v2474, 0.5
  %v2476 = vtanh.pop %v2475
  %v2477 = vadd.f32 %v2476, 1.0
  %v2478 = vmul.f32 %v2477, 0.5
  %v2479 = vmul.f32 %v2473, %v2467
  %v2480 = vadd.f32 %v1083, %v2479
  %v2481 = vtanh.pop %v2480
  %v2482 = vsub.f32 %v2408, %v2481
  %v2483 = vmul.f32 %v2478, %v2482
  %v2484 = vadd.f32 %v2481, %v2483
  %2485 = vmatpush.msra.mxu0 %v2094
  %2486 = vmatpush.msra.mxu0 %v2091
  %2487 = vmatpush.msra.mxu0 %v2088
  %2488 = vmatpush.msra.mxu0 %v2085
  %2489 = vmatpush.msra.mxu0 %v2082
  %2490 = vmatpush.msra.mxu0 %v2079
  %2491 = vmatpush.msra.mxu0 %v2076
  %2492 = vmatpush.msra.mxu0 %v2073
  %2493 = vmatpush.msra.mxu0 %v2070
  %2494 = vmatpush.msra.mxu0 %v2067
  %2495 = vmatpush.msra.mxu0 %v2064
  %2496 = vmatpush.msra.mxu0 %v2061
  %2497 = vmatpush.msra.mxu0 %v2058
  %2498 = vmatpush.msra.mxu0 %v2055
  %2499 = vmatpush.msra.mxu0 %v2052
  %2500 = vmatpush.msra.mxu0 %v2049
  %2501 = vmatmul.f32.gmra.mxu0 %v2484
  %v2502 = vpop.f32.mrf.mxu0
  %v2503 = vadd.f32 %v2099, %v2502
  %2504 = vdwg.mxu0
  %2505 = vmatpush.msra.mxu0 %v2095
  %2506 = vmatpush.msra.mxu0 %v2092
  %2507 = vmatpush.msra.mxu0 %v2089
  %2508 = vmatpush.msra.mxu0 %v2086
  %2509 = vmatpush.msra.mxu0 %v2083
  %2510 = vmatpush.msra.mxu0 %v2080
  %2511 = vmatpush.msra.mxu0 %v2077
  %2512 = vmatpush.msra.mxu0 %v2074
  %2513 = vmatpush.msra.mxu0 %v2071
  %2514 = vmatpush.msra.mxu0 %v2068
  %2515 = vmatpush.msra.mxu0 %v2065
  %2516 = vmatpush.msra.mxu0 %v2062
  %2517 = vmatpush.msra.mxu0 %v2059
  %2518 = vmatpush.msra.mxu0 %v2056
  %2519 = vmatpush.msra.mxu0 %v2053
  %2520 = vmatpush.msra.mxu0 %v2050
  %2521 = vmatmul.f32.gmra.mxu0 %v2484
  %v2522 = vpop.f32.mrf.mxu0
  %v2523 = vadd.f32 %v2100, %v2522
  %2524 = vdwg.mxu0
  %2525 = vmatpush.msra.mxu0 %v2096
  %2526 = vmatpush.msra.mxu0 %v2093
  %2527 = vmatpush.msra.mxu0 %v2090
  %2528 = vmatpush.msra.mxu0 %v2087
  %2529 = vmatpush.msra.mxu0 %v2084
  %2530 = vmatpush.msra.mxu0 %v2081
  %2531 = vmatpush.msra.mxu0 %v2078
  %2532 = vmatpush.msra.mxu0 %v2075
  %2533 = vmatpush.msra.mxu0 %v2072
  %2534 = vmatpush.msra.mxu0 %v2069
  %2535 = vmatpush.msra.mxu0 %v2066
  %2536 = vmatpush.msra.mxu0 %v2063
  %2537 = vmatpush.msra.mxu0 %v2060
  %2538 = vmatpush.msra.mxu0 %v2057
  %2539 = vmatpush.msra.mxu0 %v2054
  %2540 = vmatpush.msra.mxu0 %v2051
  %2541 = vmatmul.f32.gmra.mxu0 %v2484
  %v2542 = vpop.f32.mrf.mxu0
  %v2543 = vadd.f32 %v2101, %v2542
  %2544 = vdwg.mxu0
  %v2545 = vadd.f32 %v934, %v2503
  %v2546 = vmul.f32 %v2545, 0.5
  %v2547 = vtanh.pop %v2546
  %v2548 = vadd.f32 %v2547, 1.0
  %v2549 = vmul.f32 %v2548, 0.5
  %v2550 = vadd.f32 %v1010, %v2523
  %v2551 = vmul.f32 %v2550, 0.5
  %v2552 = vtanh.pop %v2551
  %v2553 = vadd.f32 %v2552, 1.0
  %v2554 = vmul.f32 %v2553, 0.5
  %v2555 = vmul.f32 %v2549, %v2543
  %v2556 = vadd.f32 %v1086, %v2555
  %v2557 = vtanh.pop %v2556
  %v2558 = vsub.f32 %v2484, %v2557
  %v2559 = vmul.f32 %v2554, %v2558
  %v2560 = vadd.f32 %v2557, %v2559
  %2561 = vmatpush.msra.mxu0 %v2094
  %2562 = vmatpush.msra.mxu0 %v2091
  %2563 = vmatpush.msra.mxu0 %v2088
  %2564 = vmatpush.msra.mxu0 %v2085
  %2565 = vmatpush.msra.mxu0 %v2082
  %2566 = vmatpush.msra.mxu0 %v2079
  %2567 = vmatpush.msra.mxu0 %v2076
  %2568 = vmatpush.msra.mxu0 %v2073
  %2569 = vmatpush.msra.mxu0 %v2070
  %2570 = vmatpush.msra.mxu0 %v2067
  %2571 = vmatpush.msra.mxu0 %v2064
  %2572 = vmatpush.msra.mxu0 %v2061
  %2573 = vmatpush.msra.mxu0 %v2058
  %2574 = vmatpush.msra.mxu0 %v2055
  %2575 = vmatpush.msra.mxu0 %v2052
  %2576 = vmatpush.msra.mxu0 %v2049
  %2577 = vmatmul.f32.gmra.mxu0 %v2560
  %v2578 = vpop.f32.mrf.mxu0
  %v2579 = vadd.f32 %v2099, %v2578
  %2580 = vdwg.mxu0
  %2581 = vmatpush.msra.mxu0 %v2095
  %2582 = vmatpush.msra.mxu0 %v2092
  %2583 = vmatpush.msra.mxu0 %v2089
  %2584 = vmatpush.msra.mxu0 %v2086
  %2585 = vmatpush.msra.mxu0 %v2083
  %2586 = vmatpush.msra.mxu0 %v2080
  %2587 = vmatpush.msra.mxu0 %v2077
  %2588 = vmatpush.msra.mxu0 %v2074
  %2589 = vmatpush.msra.mxu0 %v2071
  %2590 = vmatpush.msra.mxu0 %v2068
  %2591 = vmatpush.msra.mxu0 %v2065
  %2592 = vmatpush.msra.mxu0 %v2062
  %2593 = vmatpush.msra.mxu0 %v2059
  %2594 = vmatpush.msra.mxu0 %v2056
  %2595 = vmatpush.msra.mxu0 %v2053
  %2596 = vmatpush.msra.mxu0 %v2050
  %2597 = vmatmul.f32.gmra.mxu0 %v2560
  %v2598 = vpop.f32.mrf.mxu0
  %v2599 = vadd.f32 %v2100, %v2598
  %2600 = vdwg.mxu0
  %2601 = vmatpush.msra.mxu0 %v2096
  %2602 = vmatpush.msra.mxu0 %v2093
  %2603 = vmatpush.msra.mxu0 %v2090
  %2604 = vmatpush.msra.mxu0 %v2087
  %2605 = vmatpush.msra.mxu0 %v2084
  %2606 = vmatpush.msra.mxu0 %v2081
  %2607 = vmatpush.msra.mxu0 %v2078
  %2608 = vmatpush.msra.mxu0 %v2075
  %2609 = vmatpush.msra.mxu0 %v2072
  %2610 = vmatpush.msra.mxu0 %v2069
  %2611 = vmatpush.msra.mxu0 %v2066
  %2612 = vmatpush.msra.mxu0 %v2063
  %2613 = vmatpush.msra.mxu0 %v2060
  %2614 = vmatpush.msra.mxu0 %v2057
  %2615 = vmatpush.msra.mxu0 %v2054
  %2616 = vmatpush.msra.mxu0 %v2051
  %2617 = vmatmul.f32.gmra.mxu0 %v2560
  %v2618 = vpop.f32.mrf.mxu0
  %v2619 = vadd.f32 %v2101, %v2618
  %2620 = vdwg.mxu0
  %v2621 = vadd.f32 %v937, %v2579
  %v2622 = vmul.f32 %v2621, 0.5
  %v2623 = vtanh.pop %v2622
  %v2624 = vadd.f32 %v2623, 1.0
  %v2625 = vmul.f32 %v2624, 0.5
  %v2626 = vadd.f32 %v1013, %v2599
  %v2627 = vmul.f32 %v2626, 0.5
  %v2628 = vtanh.pop %v2627
  %v2629 = vadd.f32 %v2628, 1.0
  %v2630 = vmul.f32 %v2629, 0.5
  %v2631 = vmul.f32 %v2625, %v2619
  %v2632 = vadd.f32 %v1089, %v2631
  %v2633 = vtanh.pop %v2632
  %v2634 = vsub.f32 %v2560, %v2633
  %v2635 = vmul.f32 %v2630, %v2634
  %v2636 = vadd.f32 %v2633, %v2635
  %v2637 = vld [vmem:[%s15] sm:$0x1]
  %v2639 = vperm.slane %v2637, 0
  %v2641 = vmul.f32 %v2180, %v2639
  %v2642 = vmul.f32 %v2256, %v2639
  %v2643 = vmul.f32 %v2332, %v2639
  %v2644 = vmul.f32 %v2408, %v2639
  %v2645 = vmul.f32 %v2484, %v2639
  %v2646 = vmul.f32 %v2560, %v2639
  %v2647 = vmul.f32 %v2636, %v2639
  %2648 = vadd.xlane.f32.xlu0 %v2641
  %v2649 = vpop.xlane.xlu0 %2648
  %2650 = vadd.xlane.f32.xlu0 %v2642
  %v2651 = vpop.xlane.xlu0 %2650
  %2652 = vadd.xlane.f32.xlu0 %v2643
  %v2653 = vpop.xlane.xlu0 %2652
  %2654 = vadd.xlane.f32.xlu0 %v2644
  %v2655 = vpop.xlane.xlu0 %2654
  %2656 = vadd.xlane.f32.xlu0 %v2645
  %v2657 = vpop.xlane.xlu0 %2656
  %2658 = vadd.xlane.f32.xlu0 %v2646
  %v2659 = vpop.xlane.xlu0 %2658
  %2660 = vadd.xlane.f32.xlu0 %v2647
  %v2661 = vpop.xlane.xlu0 %2660
  %v2662 = vld [vmem:[#allocation2] sm:$0x1]
  %v2664 = vperm.slane %v2662, 0
  %v2666 = vadd.f32 %v2649, %v2664
  %v2667 = vadd.f32 %v2651, %v2664
  %v2668 = vadd.f32 %v2653, %v2664
  %v2669 = vadd.f32 %v2655, %v2664
  %v2670 = vadd.f32 %v2657, %v2664
  %v2671 = vadd.f32 %v2659, %v2664
  %v2672 = vadd.f32 %v2661, %v2664
  %vm2673 = vcmp.eq.s32.totalorder %v1936, 0
  %v2674 = vsel %vm2673, 1, 0
  %v2675 = vcvt.s32.f32 %v2674
  %vm2676 = vcmp.eq.s32.totalorder %v1936, 1
  %v2677 = vsel %vm2676, 1, 0
  %v2678 = vcvt.s32.f32 %v2677
  %vm2679 = vcmp.eq.s32.totalorder %v1936, 2
  %v2680 = vsel %vm2679, 1, 0
  %v2681 = vcvt.s32.f32 %v2680
  %v2682 = vmul.f32 %v1995, %v2675
  %v2683 = vmul.f32 %v1998, %v2675
  %v2684 = vmul.f32 %v2001, %v2675
  %v2685 = vmul.f32 %v2004, %v2675
  %v2686 = vmul.f32 %v2007, %v2675
  %v2687 = vmul.f32 %v2010, %v2675
  %v2688 = vmul.f32 %v2013, %v2675
  %v2689 = vmul.f32 %v2042, %v2678
  %v2690 = vmul.f32 %v2043, %v2678
  %v2691 = vmul.f32 %v2044, %v2678
  %v2692 = vmul.f32 %v2045, %v2678
  %v2693 = vmul.f32 %v2046, %v2678
  %v2694 = vmul.f32 %v2047, %v2678
  %v2695 = vmul.f32 %v2048, %v2678
  %v2696 = vadd.f32 %v2682, %v2689
  %v2697 = vadd.f32 %v2683, %v2690
  %v2698 = vadd.f32 %v2684, %v2691
  %v2699 = vadd.f32 %v2685, %v2692
  %v2700 = vadd.f32 %v2686, %v2693
  %v2701 = vadd.f32 %v2687, %v2694
  %v2702 = vadd.f32 %v2688, %v2695
  %2704 = vset.pattern.permute.xlu0 0
  %2705 = vperm.xlu0 %2704, %v2666
  %v2706 = vpop.permute.xlu0 %2705
  %2709 = vset.pattern.permute.xlu0 0
  %2710 = vperm.xlu0 %2709, %v2667
  %v2711 = vpop.permute.xlu0 %2710
  %2714 = vset.pattern.permute.xlu0 0
  %2715 = vperm.xlu0 %2714, %v2668
  %v2716 = vpop.permute.xlu0 %2715
  %2719 = vset.pattern.permute.xlu0 0
  %2720 = vperm.xlu0 %2719, %v2669
  %v2721 = vpop.permute.xlu0 %2720
  %2724 = vset.pattern.permute.xlu0 0
  %2725 = vperm.xlu0 %2724, %v2670
  %v2726 = vpop.permute.xlu0 %2725
  %2729 = vset.pattern.permute.xlu0 0
  %2730 = vperm.xlu0 %2729, %v2671
  %v2731 = vpop.permute.xlu0 %2730
  %2734 = vset.pattern.permute.xlu0 0
  %2735 = vperm.xlu0 %2734, %v2672
  %v2736 = vpop.permute.xlu0 %2735
  %v2738 = vmul.f32 %v2706, %v2681
  %v2739 = vmul.f32 %v2711, %v2681
  %v2740 = vmul.f32 %v2716, %v2681
  %v2741 = vmul.f32 %v2721, %v2681
  %v2742 = vmul.f32 %v2726, %v2681
  %v2743 = vmul.f32 %v2731, %v2681
  %v2744 = vmul.f32 %v2736, %v2681
  %v2745 = vadd.f32 %v2696, %v2738
  %v2746 = vadd.f32 %v2697, %v2739
  %v2747 = vadd.f32 %v2698, %v2740
  %v2748 = vadd.f32 %v2699, %v2741
  %v2749 = vadd.f32 %v2700, %v2742
  %v2750 = vadd.f32 %v2701, %v2743
  %v2751 = vadd.f32 %v2702, %v2744
  %2752 = vst [vmem:[%s17] sm:$0xff] %v2745
  %2753 = vst [vmem:[%s17 + $0x8] sm:$0xff] %v2746
  %2754 = vst [vmem:[%s17 + $0x10] sm:$0xff] %v2747
  %2755 = vst [vmem:[%s17 + $0x18] sm:$0xff] %v2748
  %2756 = vst [vmem:[%s17 + $0x20] sm:$0xff] %v2749
  %2757 = vst [vmem:[%s17 + $0x28] sm:$0xff] %v2750
  %2758 = vst [vmem:[%s17 + $0x30] sm:$0xff] %v2751
  // Predicated region
  $region70: #{actor_critic_evaluate.1} parent=0 // pred_check
    _
  $region71: #{actor_critic_evaluate.1} parent=0 // pred_check_branch
    %2760 = sbr.rel (0) target = $region73
  $region72: #{actor_critic_evaluate.1} parent=0 // pred_region
    _
  $region73: #{actor_critic_evaluate.1} parent=0 // pred_fallthru
    _
  // Predicated region
  $region74: #{actor_critic_evaluate.1} parent=0 // pred_check
    _
  $region75: #{actor_critic_evaluate.1} parent=0 // pred_check_branch
    %2762 = sbr.rel (0) target = $region77
  $region76: #{actor_critic_evaluate.1} parent=0 // pred_region
    _
  $region77: #{actor_critic_evaluate.1} parent=0 // pred_fallthru
    _

</llo_original>
